<compile_context>
chip_gen: v6e
topology: v6e:2x2x1
jax: 0.10.0
libtpu: 0.0.40
codegen_flags: <defaults>
</compile_context>

<pallas_src>
import functools

import jax
import jax.numpy as jnp
from jax import lax
from jax.experimental import pallas as pl
from jax.experimental.pallas import tpu as pltpu


# ---------------------------------------------------------------- kernel ----

def bottleneck_kernel(x_ref, w1_ref, w2_ref, w3_ref,
                      b1_ref, b2_ref, b3_ref,
                      o_ref, pad_ref, patch_ref, *, H, W):
    """Fused Bottleneck forward for one image (one grid step).

    x_ref:     (1, H*W, Cin)     f32   input (also the residual)
    w1_ref:    (Cin, width)      bf16  conv1 weight, BN1 scale folded in
    w2_ref:    (9*width, width)  bf16  conv2 weight (im2col-flat HWIO), BN2 folded
    w3_ref:    (width, Cout)     bf16  conv3 weight, BN3 scale folded in
    b*_ref:    (1, C)            f32   folded BN biases
    o_ref:     (1, H*W, Cout)    f32
    pad_ref:   (H+2, W+2, width) f32   VMEM scratch (zero-padded halo)
    patch_ref: (H*W, 9*width)    bf16  VMEM scratch (im2col patches)
    """
    HW = H * W
    width = w1_ref.shape[1]

    x = x_ref[0]                                    # (HW, Cin) f32 residual

    # ---- stage 1: 1x1 conv (BN scale pre-folded) + bias + ReLU -------------
    y1 = jnp.dot(x.astype(jnp.bfloat16), w1_ref[...],
                 preferred_element_type=jnp.float32)
    y1 = jnp.maximum(y1 + b1_ref[...], 0.0)         # (HW, width) f32

    # ---- stage 2: 3x3 conv (stride=1, pad=1) as ONE K = 9*width matmul ------
    # Zero-padded halo built in VMEM scratch (no HBM round trip, no host pad).
    pad_ref[...] = jnp.zeros(pad_ref.shape, pad_ref.dtype)
    pad_ref[1:H + 1, 1:W + 1, :] = y1.reshape(H, W, width)
    # im2col: the 9 shifted taps become columns of a (HW, 9*width) bf16 matrix.
    for dy in range(3):
        for dx in range(3):
            tap = pad_ref[dy:dy + H, dx:dx + W, :].reshape(HW, width)
            c0 = (dy * 3 + dx) * width
            patch_ref[:, c0:c0 + width] = tap.astype(patch_ref.dtype)
    y2 = jnp.dot(patch_ref[...], w2_ref[...],
                 preferred_element_type=jnp.float32)
    y2 = jnp.maximum(y2 + b2_ref[...], 0.0)         # (HW, width) f32

    # ---- stage 3: 1x1 conv + bias + residual add + ReLU ---------------------
    y3 = jnp.dot(y2.astype(jnp.bfloat16), w3_ref[...],
                 preferred_element_type=jnp.float32)
    o_ref[0] = jnp.maximum(y3 + b3_ref[...] + x, 0.0).astype(o_ref.dtype)


# ---------------------------------------------------------------- wrapper ---

def fold_bn(gamma, beta, mean, var, eps=1e-5):
    """Eval-mode BN -> per-channel (scale, bias)."""
    scale = gamma / jnp.sqrt(var + eps)
    bias = beta - mean * scale
    return scale.astype(jnp.float32), bias.reshape(1, -1).astype(jnp.float32)


def bottleneck_forward(x_nchw, params, eps=1e-5):
    """Bottleneck forward (stride=1, groups=1, dilation=1, downsample=None).

    BatchNorm uses eval-mode semantics (folded running stats)."""
    # TODO(synk): stride>1 / groups>1 / dilation>1 / downsample branch are not
    # exercised by the default constructor args and are not implemented.
    N, Cin, H, W = x_nchw.shape
    width = params["w1"].shape[1]
    cout = params["w3"].shape[1]
    assert Cin == cout, (
        "identity path requires inplanes == planes * expansion "
        f"(got {Cin} vs {cout})")
    HW = H * W

    # NHWC, flattened spatial; residual path stays f32.
    x = jnp.transpose(x_nchw, (0, 2, 3, 1)).astype(jnp.float32)
    x = x.reshape(N, HW, Cin)

    # Fold BN scales into the conv weights (per output channel), keep biases.
    s1, b1 = fold_bn(params["bn1_g"], params["bn1_b"],
                     params["bn1_m"], params["bn1_v"], eps)
    s2, b2 = fold_bn(params["bn2_g"], params["bn2_b"],
                     params["bn2_m"], params["bn2_v"], eps)
    s3, b3 = fold_bn(params["bn3_g"], params["bn3_b"],
                     params["bn3_m"], params["bn3_v"], eps)

    w1 = (params["w1"] * s1[None, :]).astype(jnp.bfloat16)            # (Cin, width)
    w2 = (params["w2"] * s2[None, None, None, :]).reshape(
        9 * width, width).astype(jnp.bfloat16)                        # (9*width, width)
    w3 = (params["w3"] * s3[None, :]).astype(jnp.bfloat16)            # (width, cout)

    kernel = functools.partial(bottleneck_kernel, H=H, W=W)

    flops = 2 * N * HW * (Cin * width + 9 * width * width + width * cout)
    bytes_accessed = (
        (x.size + N * HW * cout) * 4                   # input + output (f32)
        + (w1.size + w2.size + w3.size) * 2            # bf16 folded weights
        + (b1.size + b2.size + b3.size) * 4)           # f32 biases

    grid_spec = pltpu.PrefetchScalarGridSpec(
        num_scalar_prefetch=0,
        grid=(N,),
        in_specs=[
            pl.BlockSpec((1, HW, Cin), lambda n: (n, 0, 0)),      # x (+residual)
            pl.BlockSpec((Cin, width), lambda n: (0, 0)),         # w1 (folded)
            pl.BlockSpec((9 * width, width), lambda n: (0, 0)),   # w2 (im2col)
            pl.BlockSpec((width, cout), lambda n: (0, 0)),        # w3 (folded)
            pl.BlockSpec((1, width), lambda n: (0, 0)),           # b1
            pl.BlockSpec((1, width), lambda n: (0, 0)),           # b2
            pl.BlockSpec((1, cout), lambda n: (0, 0)),            # b3
        ],
        out_specs=pl.BlockSpec((1, HW, cout), lambda n: (n, 0, 0)),
        scratch_shapes=[
            pltpu.VMEM((H + 2, W + 2, width), jnp.float32),       # halo buffer
            pltpu.VMEM((HW, 9 * width), jnp.bfloat16),            # im2col patches
        ],
    )

    out_flat = pl.pallas_call(
        kernel,
        out_shape=jax.ShapeDtypeStruct((N, HW, cout), jnp.float32),
        grid_spec=grid_spec,
        compiler_params=pltpu.CompilerParams(
            dimension_semantics=("parallel",),       # batch axis -> megacore
            vmem_limit_bytes=48 * 1024 * 1024,       # fits v7x's 64 MiB VMEM too
        ),
        cost_estimate=pl.CostEstimate(
            flops=flops, transcendentals=0, bytes_accessed=bytes_accessed),
    )(x, w1, w2, w3, b1, b2, b3)

    out = out_flat.reshape(N, H, W, cout)
    return jnp.transpose(out, (0, 3, 1, 2))          # back to NCHW


# --------------------------------------------------------------- reference --

def bottleneck_reference(x_nchw, params, eps=1e-5):
    x = jnp.transpose(x_nchw, (0, 2, 3, 1)).astype(jnp.float32)  # NHWC

    def bn(y, g, b, m, v):
        return (y - m) / jnp.sqrt(v + eps) * g + b

    dn = ("NHWC", "HWIO", "NHWC")
    w1 = params["w1"].reshape(1, 1, *params["w1"].shape)
    w3 = params["w3"].reshape(1, 1, *params["w3"].shape)

    y = lax.conv_general_dilated(x, w1, (1, 1), "VALID", dimension_numbers=dn)
    y = jax.nn.relu(bn(y, params["bn1_g"], params["bn1_b"],
                       params["bn1_m"], params["bn1_v"]))
    y = lax.conv_general_dilated(y, params["w2"], (1, 1), "SAME",
                                 dimension_numbers=dn)
    y = jax.nn.relu(bn(y, params["bn2_g"], params["bn2_b"],
                       params["bn2_m"], params["bn2_v"]))
    y = lax.conv_general_dilated(y, w3, (1, 1), "VALID", dimension_numbers=dn)
    y = bn(y, params["bn3_g"], params["bn3_b"], params["bn3_m"], params["bn3_v"])
    y = jax.nn.relu(y + x)
    return jnp.transpose(y, (0, 3, 1, 2))


# ------------------------------------------------------------------- main ---

def make_params(key, inplanes, planes, base_width=64, groups=1):
    width = int(planes * (base_width / 64.0)) * groups
    cout = planes * 4  # Bottleneck.expansion
    ks = jax.random.split(key, 15)
    return {
        "w1": 0.1 * jax.random.normal(ks[0], (inplanes, width), jnp.float32),
        "w2": 0.1 * jax.random.normal(ks[1], (3, 3, width, width), jnp.float32),
        "w3": 0.1 * jax.random.normal(ks[2], (width, cout), jnp.float32),
        "bn1_g": 1.0 + 0.1 * jax.random.normal(ks[3], (width,), jnp.float32),
        "bn1_b": 0.1 * jax.random.normal(ks[4], (width,), jnp.float32),
        "bn1_m": 0.1 * jax.random.normal(ks[5], (width,), jnp.float32),
        "bn1_v": 0.5 + jnp.abs(jax.random.normal(ks[6], (width,), jnp.float32)),
        "bn2_g": 1.0 + 0.1 * jax.random.normal(ks[7], (width,), jnp.float32),
        "bn2_b": 0.1 * jax.random.normal(ks[8], (width,), jnp.float32),
        "bn2_m": 0.1 * jax.random.normal(ks[9], (width,), jnp.float32),
        "bn2_v": 0.5 + jnp.abs(jax.random.normal(ks[10], (width,), jnp.float32)),
        "bn3_g": 1.0 + 0.1 * jax.random.normal(ks[11], (cout,), jnp.float32),
        "bn3_b": 0.1 * jax.random.normal(ks[12], (cout,), jnp.float32),
        "bn3_m": 0.1 * jax.random.normal(ks[13], (cout,), jnp.float32),
        "bn3_v": 0.5 + jnp.abs(jax.random.normal(ks[14], (cout,), jnp.float32)),
    }


if __name__ == "__main__":
    # Bottleneck(inplanes=16, planes=4): width=4, out channels = 4*4 = 16, so
    # the identity path (downsample=None) is shape-compatible.
    N, inplanes, planes, H, W = 2, 16, 4, 16, 16

    key = jax.random.PRNGKey(0)
    kx, kp = jax.random.split(key)
    x = jax.random.normal(kx, (N, inplanes, H, W), jnp.float32)  # NCHW input
    params = make_params(kp, inplanes, planes)

    out = bottleneck_forward(x, params)
    out = jax.block_until_ready(out)

    ref = bottleneck_reference(x, params)
    ref = jax.block_until_ready(ref)

    assert out.shape == (N, planes * 4, H, W), out.shape
    max_err = float(jnp.max(jnp.abs(out - ref)))
    # bf16 matmul operands (f32 accumulate, BN scales folded into bf16 weights)
    # => relaxed tolerance vs f32 reference.
    assert jnp.allclose(out, ref, rtol=2e-2, atol=2e-2), max_err

    print("KERNEL_OK")
</pallas_src>

<mosaic_0001>
module attributes {stable_mosaic.version = 11 : i64} {
  func.func @bottleneck_kernel(%arg0: i32, %arg1: memref<1x256x16xf32, #tpu.memory_space<vmem>>, %arg2: memref<16x4xbf16, #tpu.memory_space<vmem>>, %arg3: memref<36x4xbf16, #tpu.memory_space<vmem>>, %arg4: memref<4x16xbf16, #tpu.memory_space<vmem>>, %arg5: memref<1x4xf32, #tpu.memory_space<vmem>>, %arg6: memref<1x4xf32, #tpu.memory_space<vmem>>, %arg7: memref<1x16xf32, #tpu.memory_space<vmem>>, %arg8: memref<1x256x16xf32, #tpu.memory_space<vmem>>, %arg9: memref<18x18x4xf32, #tpu.memory_space<vmem>>, %arg10: memref<256x36xbf16, #tpu.memory_space<vmem>>) attributes {dimension_semantics = [#tpu.dimension_semantics<parallel>], iteration_bounds = array<i64: 2>, scalar_prefetch = 0 : i64, scratch_operands = 2 : i64, tpu.core_type = #tpu.core_type<tc>, window_params = [{transform_indices = @transform_0, window_bounds = array<i64: 1, 256, 16>}, {pipeline_mode = #tpu.pipeline_mode<synchronous>, transform_indices = @transform_1, window_bounds = array<i64: 16, 4>}, {pipeline_mode = #tpu.pipeline_mode<synchronous>, transform_indices = @transform_2, window_bounds = array<i64: 36, 4>}, {pipeline_mode = #tpu.pipeline_mode<synchronous>, transform_indices = @transform_3, window_bounds = array<i64: 4, 16>}, {pipeline_mode = #tpu.pipeline_mode<synchronous>, transform_indices = @transform_4, window_bounds = array<i64: 1, 4>}, {pipeline_mode = #tpu.pipeline_mode<synchronous>, transform_indices = @transform_5, window_bounds = array<i64: 1, 4>}, {pipeline_mode = #tpu.pipeline_mode<synchronous>, transform_indices = @transform_6, window_bounds = array<i64: 1, 16>}, {transform_indices = @transform_7, window_bounds = array<i64: 1, 256, 16>}]} {
    %c0 = arith.constant 0 : index
    %c0_0 = arith.constant 0 : index
    %c0_1 = arith.constant 0 : index
    %0 = vector.load %arg1[%c0, %c0_0, %c0_1] : memref<1x256x16xf32, #tpu.memory_space<vmem>>, vector<1x256x16xf32>
    %1 = vector.shape_cast %0 : vector<1x256x16xf32> to vector<256x16xf32>
    %2 = arith.truncf %1 : vector<256x16xf32> to vector<256x16xbf16>
    %c0_2 = arith.constant 0 : index
    %c0_3 = arith.constant 0 : index
    %3 = vector.load %arg2[%c0_2, %c0_3] : memref<16x4xbf16, #tpu.memory_space<vmem>>, vector<16x4xbf16>
    %cst = arith.constant dense<0.000000e+00> : vector<256x4xf32>
    %4 = tpu.matmul %2, %3, %cst {dimension_numbers = #tpu.dot_dimension_numbers<[1], [0], [0], [1], [0, 0, 1, 1], [], []>} : vector<256x16xbf16>, vector<16x4xbf16>, vector<256x4xf32> -> vector<256x4xf32>
    %c0_4 = arith.constant 0 : index
    %c0_5 = arith.constant 0 : index
    %5 = vector.load %arg5[%c0_4, %c0_5] : memref<1x4xf32, #tpu.memory_space<vmem>>, vector<1x4xf32>
    %6 = vector.broadcast %5 : vector<1x4xf32> to vector<256x4xf32>
    %7 = arith.addf %4, %6 : vector<256x4xf32>
    %cst_6 = arith.constant 0.000000e+00 : f32
    %8 = vector.broadcast %cst_6 : f32 to vector<256x4xf32>
    %9 = arith.maximumf %7, %8 : vector<256x4xf32>
    %cst_7 = arith.constant 0.000000e+00 : f32
    %10 = vector.broadcast %cst_7 : f32 to vector<18x18x4xf32>
    %c0_8 = arith.constant 0 : index
    %c0_9 = arith.constant 0 : index
    %c0_10 = arith.constant 0 : index
    %11 = vector.load %arg9[%c0_8, %c0_9, %c0_10] : memref<18x18x4xf32, #tpu.memory_space<vmem>>, vector<18x18x4xf32>
    tpu.vector_store %arg9[%c0_8, %c0_9, %c0_10], %10 {strides = array<i32>} : memref<18x18x4xf32, #tpu.memory_space<vmem>>, vector<18x18x4xf32>,
    %12 = vector.shape_cast %9 : vector<256x4xf32> to vector<16x16x4xf32>
    %c1 = arith.constant 1 : index
    %c1_11 = arith.constant 1 : index
    %c0_12 = arith.constant 0 : index
    %13 = vector.load %arg9[%c1, %c1_11, %c0_12] : memref<18x18x4xf32, #tpu.memory_space<vmem>>, vector<16x16x4xf32>
    tpu.vector_store %arg9[%c1, %c1_11, %c0_12], %12 {strides = array<i32>} : memref<18x18x4xf32, #tpu.memory_space<vmem>>, vector<16x16x4xf32>,
    %c0_13 = arith.constant 0 : index
    %c0_14 = arith.constant 0 : index
    %c0_15 = arith.constant 0 : index
    %14 = vector.load %arg9[%c0_13, %c0_14, %c0_15] : memref<18x18x4xf32, #tpu.memory_space<vmem>>, vector<16x16x4xf32>
    %15 = vector.shape_cast %14 : vector<16x16x4xf32> to vector<256x4xf32>
    %16 = arith.truncf %15 : vector<256x4xf32> to vector<256x4xbf16>
    %c0_16 = arith.constant 0 : index
    %c0_17 = arith.constant 0 : index
    %17 = vector.load %arg10[%c0_16, %c0_17] : memref<256x36xbf16, #tpu.memory_space<vmem>>, vector<256x4xbf16>
    tpu.vector_store %arg10[%c0_16, %c0_17], %16 {strides = array<i32>} : memref<256x36xbf16, #tpu.memory_space<vmem>>, vector<256x4xbf16>,
    %c0_18 = arith.constant 0 : index
    %c1_19 = arith.constant 1 : index
    %c0_20 = arith.constant 0 : index
    %18 = vector.load %arg9[%c0_18, %c1_19, %c0_20] : memref<18x18x4xf32, #tpu.memory_space<vmem>>, vector<16x16x4xf32>
    %19 = vector.shape_cast %18 : vector<16x16x4xf32> to vector<256x4xf32>
    %20 = arith.truncf %19 : vector<256x4xf32> to vector<256x4xbf16>
    %c0_21 = arith.constant 0 : index
    %c4 = arith.constant 4 : index
    %21 = vector.load %arg10[%c0_21, %c4] : memref<256x36xbf16, #tpu.memory_space<vmem>>, vector<256x4xbf16>
    tpu.vector_store %arg10[%c0_21, %c4], %20 {strides = array<i32>} : memref<256x36xbf16, #tpu.memory_space<vmem>>, vector<256x4xbf16>,
    %c0_22 = arith.constant 0 : index
    %c2 = arith.constant 2 : index
    %c0_23 = arith.constant 0 : index
    %22 = vector.load %arg9[%c0_22, %c2, %c0_23] : memref<18x18x4xf32, #tpu.memory_space<vmem>>, vector<16x16x4xf32>
    %23 = vector.shape_cast %22 : vector<16x16x4xf32> to vector<256x4xf32>
    %24 = arith.truncf %23 : vector<256x4xf32> to vector<256x4xbf16>
    %c0_24 = arith.constant 0 : index
    %c8 = arith.constant 8 : index
    %25 = vector.load %arg10[%c0_24, %c8] : memref<256x36xbf16, #tpu.memory_space<vmem>>, vector<256x4xbf16>
    tpu.vector_store %arg10[%c0_24, %c8], %24 {strides = array<i32>} : memref<256x36xbf16, #tpu.memory_space<vmem>>, vector<256x4xbf16>,
    %c1_25 = arith.constant 1 : index
    %c0_26 = arith.constant 0 : index
    %c0_27 = arith.constant 0 : index
    %26 = vector.load %arg9[%c1_25, %c0_26, %c0_27] : memref<18x18x4xf32, #tpu.memory_space<vmem>>, vector<16x16x4xf32>
    %27 = vector.shape_cast %26 : vector<16x16x4xf32> to vector<256x4xf32>
    %28 = arith.truncf %27 : vector<256x4xf32> to vector<256x4xbf16>
    %c0_28 = arith.constant 0 : index
    %c12 = arith.constant 12 : index
    %29 = vector.load %arg10[%c0_28, %c12] : memref<256x36xbf16, #tpu.memory_space<vmem>>, vector<256x4xbf16>
    tpu.vector_store %arg10[%c0_28, %c12], %28 {strides = array<i32>} : memref<256x36xbf16, #tpu.memory_space<vmem>>, vector<256x4xbf16>,
    %c1_29 = arith.constant 1 : index
    %c1_30 = arith.constant 1 : index
    %c0_31 = arith.constant 0 : index
    %30 = vector.load %arg9[%c1_29, %c1_30, %c0_31] : memref<18x18x4xf32, #tpu.memory_space<vmem>>, vector<16x16x4xf32>
    %31 = vector.shape_cast %30 : vector<16x16x4xf32> to vector<256x4xf32>
    %32 = arith.truncf %31 : vector<256x4xf32> to vector<256x4xbf16>
    %c0_32 = arith.constant 0 : index
    %c16 = arith.constant 16 : index
    %33 = vector.load %arg10[%c0_32, %c16] : memref<256x36xbf16, #tpu.memory_space<vmem>>, vector<256x4xbf16>
    tpu.vector_store %arg10[%c0_32, %c16], %32 {strides = array<i32>} : memref<256x36xbf16, #tpu.memory_space<vmem>>, vector<256x4xbf16>,
    %c1_33 = arith.constant 1 : index
    %c2_34 = arith.constant 2 : index
    %c0_35 = arith.constant 0 : index
    %34 = vector.load %arg9[%c1_33, %c2_34, %c0_35] : memref<18x18x4xf32, #tpu.memory_space<vmem>>, vector<16x16x4xf32>
    %35 = vector.shape_cast %34 : vector<16x16x4xf32> to vector<256x4xf32>
    %36 = arith.truncf %35 : vector<256x4xf32> to vector<256x4xbf16>
    %c0_36 = arith.constant 0 : index
    %c20 = arith.constant 20 : index
    %37 = vector.load %arg10[%c0_36, %c20] : memref<256x36xbf16, #tpu.memory_space<vmem>>, vector<256x4xbf16>
    tpu.vector_store %arg10[%c0_36, %c20], %36 {strides = array<i32>} : memref<256x36xbf16, #tpu.memory_space<vmem>>, vector<256x4xbf16>,
    %c2_37 = arith.constant 2 : index
    %c0_38 = arith.constant 0 : index
    %c0_39 = arith.constant 0 : index
    %38 = vector.load %arg9[%c2_37, %c0_38, %c0_39] : memref<18x18x4xf32, #tpu.memory_space<vmem>>, vector<16x16x4xf32>
    %39 = vector.shape_cast %38 : vector<16x16x4xf32> to vector<256x4xf32>
    %40 = arith.truncf %39 : vector<256x4xf32> to vector<256x4xbf16>
    %c0_40 = arith.constant 0 : index
    %c24 = arith.constant 24 : index
    %41 = vector.load %arg10[%c0_40, %c24] : memref<256x36xbf16, #tpu.memory_space<vmem>>, vector<256x4xbf16>
    tpu.vector_store %arg10[%c0_40, %c24], %40 {strides = array<i32>} : memref<256x36xbf16, #tpu.memory_space<vmem>>, vector<256x4xbf16>,
    %c2_41 = arith.constant 2 : index
    %c1_42 = arith.constant 1 : index
    %c0_43 = arith.constant 0 : index
    %42 = vector.load %arg9[%c2_41, %c1_42, %c0_43] : memref<18x18x4xf32, #tpu.memory_space<vmem>>, vector<16x16x4xf32>
    %43 = vector.shape_cast %42 : vector<16x16x4xf32> to vector<256x4xf32>
    %44 = arith.truncf %43 : vector<256x4xf32> to vector<256x4xbf16>
    %c0_44 = arith.constant 0 : index
    %c28 = arith.constant 28 : index
    %45 = vector.load %arg10[%c0_44, %c28] : memref<256x36xbf16, #tpu.memory_space<vmem>>, vector<256x4xbf16>
    tpu.vector_store %arg10[%c0_44, %c28], %44 {strides = array<i32>} : memref<256x36xbf16, #tpu.memory_space<vmem>>, vector<256x4xbf16>,
    %c2_45 = arith.constant 2 : index
    %c2_46 = arith.constant 2 : index
    %c0_47 = arith.constant 0 : index
    %46 = vector.load %arg9[%c2_45, %c2_46, %c0_47] : memref<18x18x4xf32, #tpu.memory_space<vmem>>, vector<16x16x4xf32>
    %47 = vector.shape_cast %46 : vector<16x16x4xf32> to vector<256x4xf32>
    %48 = arith.truncf %47 : vector<256x4xf32> to vector<256x4xbf16>
    %c0_48 = arith.constant 0 : index
    %c32 = arith.constant 32 : index
    %49 = vector.load %arg10[%c0_48, %c32] : memref<256x36xbf16, #tpu.memory_space<vmem>>, vector<256x4xbf16>
    tpu.vector_store %arg10[%c0_48, %c32], %48 {strides = array<i32>} : memref<256x36xbf16, #tpu.memory_space<vmem>>, vector<256x4xbf16>,
    %c0_49 = arith.constant 0 : index
    %c0_50 = arith.constant 0 : index
    %50 = vector.load %arg10[%c0_49, %c0_50] : memref<256x36xbf16, #tpu.memory_space<vmem>>, vector<256x36xbf16>
    %c0_51 = arith.constant 0 : index
    %c0_52 = arith.constant 0 : index
    %51 = vector.load %arg3[%c0_51, %c0_52] : memref<36x4xbf16, #tpu.memory_space<vmem>>, vector<36x4xbf16>
    %cst_53 = arith.constant dense<0.000000e+00> : vector<256x4xf32>
    %52 = tpu.matmul %50, %51, %cst_53 {dimension_numbers = #tpu.dot_dimension_numbers<[1], [0], [0], [1], [0, 0, 1, 1], [], []>} : vector<256x36xbf16>, vector<36x4xbf16>, vector<256x4xf32> -> vector<256x4xf32>
    %c0_54 = arith.constant 0 : index
    %c0_55 = arith.constant 0 : index
    %53 = vector.load %arg6[%c0_54, %c0_55] : memref<1x4xf32, #tpu.memory_space<vmem>>, vector<1x4xf32>
    %54 = vector.broadcast %53 : vector<1x4xf32> to vector<256x4xf32>
    %55 = arith.addf %52, %54 : vector<256x4xf32>
    %cst_56 = arith.constant 0.000000e+00 : f32
    %56 = vector.broadcast %cst_56 : f32 to vector<256x4xf32>
    %57 = arith.maximumf %55, %56 : vector<256x4xf32>
    %58 = arith.truncf %57 : vector<256x4xf32> to vector<256x4xbf16>
    %c0_57 = arith.constant 0 : index
    %c0_58 = arith.constant 0 : index
    %59 = vector.load %arg4[%c0_57, %c0_58] : memref<4x16xbf16, #tpu.memory_space<vmem>>, vector<4x16xbf16>
    %cst_59 = arith.constant dense<0.000000e+00> : vector<256x16xf32>
    %60 = tpu.matmul %58, %59, %cst_59 {dimension_numbers = #tpu.dot_dimension_numbers<[1], [0], [0], [1], [0, 0, 1, 1], [], []>} : vector<256x4xbf16>, vector<4x16xbf16>, vector<256x16xf32> -> vector<256x16xf32>
    %c0_60 = arith.constant 0 : index
    %c0_61 = arith.constant 0 : index
    %61 = vector.load %arg7[%c0_60, %c0_61] : memref<1x16xf32, #tpu.memory_space<vmem>>, vector<1x16xf32>
    %62 = vector.broadcast %61 : vector<1x16xf32> to vector<256x16xf32>
    %63 = arith.addf %60, %62 : vector<256x16xf32>
    %64 = arith.addf %63, %1 : vector<256x16xf32>
    %cst_62 = arith.constant 0.000000e+00 : f32
    %65 = vector.broadcast %cst_62 : f32 to vector<256x16xf32>
    %66 = arith.maximumf %64, %65 : vector<256x16xf32>
    %c0_63 = arith.constant 0 : index
    %c0_64 = arith.constant 0 : index
    %c0_65 = arith.constant 0 : index
    %67 = vector.load %arg8[%c0_63, %c0_64, %c0_65] : memref<1x256x16xf32, #tpu.memory_space<vmem>>, vector<1x256x16xf32>
    %68 = vector.shape_cast %67 : vector<1x256x16xf32> to vector<256x16xf32>
    %69 = vector.shape_cast %66 : vector<256x16xf32> to vector<1x256x16xf32>
    tpu.vector_store %arg8[%c0_63, %c0_64, %c0_65], %69 {strides = array<i32>} : memref<1x256x16xf32, #tpu.memory_space<vmem>>, vector<1x256x16xf32>,
    return
  }
  func.func @transform_0(%arg0: i32) -> (i32, i32, i32) {
    %c0_i32 = arith.constant 0 : i32
    %c0_i32_0 = arith.constant 0 : i32
    %c0_i32_1 = arith.constant 0 : i32
    return %arg0, %c0_i32, %c0_i32_0 : i32, i32, i32
  }
  func.func @transform_1(%arg0: i32) -> (i32, i32) {
    %c0_i32 = arith.constant 0 : i32
    %c0_i32_0 = arith.constant 0 : i32
    %c0_i32_1 = arith.constant 0 : i32
    return %c0_i32, %c0_i32_0 : i32, i32
  }
  func.func @transform_2(%arg0: i32) -> (i32, i32) {
    %c0_i32 = arith.constant 0 : i32
    %c0_i32_0 = arith.constant 0 : i32
    %c0_i32_1 = arith.constant 0 : i32
    return %c0_i32, %c0_i32_0 : i32, i32
  }
  func.func @transform_3(%arg0: i32) -> (i32, i32) {
    %c0_i32 = arith.constant 0 : i32
    %c0_i32_0 = arith.constant 0 : i32
    %c0_i32_1 = arith.constant 0 : i32
    return %c0_i32, %c0_i32_0 : i32, i32
  }
  func.func @transform_4(%arg0: i32) -> (i32, i32) {
    %c0_i32 = arith.constant 0 : i32
    %c0_i32_0 = arith.constant 0 : i32
    %c0_i32_1 = arith.constant 0 : i32
    return %c0_i32, %c0_i32_0 : i32, i32
  }
  func.func @transform_5(%arg0: i32) -> (i32, i32) {
    %c0_i32 = arith.constant 0 : i32
    %c0_i32_0 = arith.constant 0 : i32
    %c0_i32_1 = arith.constant 0 : i32
    return %c0_i32, %c0_i32_0 : i32, i32
  }
  func.func @transform_6(%arg0: i32) -> (i32, i32) {
    %c0_i32 = arith.constant 0 : i32
    %c0_i32_0 = arith.constant 0 : i32
    %c0_i32_1 = arith.constant 0 : i32
    return %c0_i32, %c0_i32_0 : i32, i32
  }
  func.func @transform_7(%arg0: i32) -> (i32, i32, i32) {
    %c0_i32 = arith.constant 0 : i32
    %c0_i32_0 = arith.constant 0 : i32
    %c0_i32_1 = arith.constant 0 : i32
    return %arg0, %c0_i32, %c0_i32_0 : i32, i32, i32
  }
}

</mosaic_0001>

<llo_original>
// kernel: tpu_custom_call.1
$region0: #{tpu_custom_call.1}
  #allocation0 [shape = 'u32[]', space=smem, size = 0x4, offset = 0x4, fixed_abs, tag = 'smem constant byte address 0x4 - core index']
  #allocation1 [shape = 'u32[144,128]{1,0:T(1,128)}', space=vmem, size = 0x12000, scoped, tag = 'internal scratch']
  #allocation2 [shape = 'f32[18,18,4]{2,1,0:T(8,128)}', space=vmem, size = 0x36000, scoped, tag = 'scratch operand']
  #allocation3 [shape = 'bf16[256,36]{1,0:T(8,128)(2,1)}', space=vmem, size = 0x10000, scoped, tag = 'scratch operand']
  %s0 = inlined_call_operand.vmem [shape: f32[2,256,16], index: 0, kind: input, shape index: {}]
  %s1 = inlined_call_operand.vmem [shape: bf16[16,4], index: 1, kind: input, shape index: {}]
  %s2 = inlined_call_operand.vmem [shape: bf16[36,4], index: 2, kind: input, shape index: {}]
  %s3 = inlined_call_operand.vmem [shape: bf16[4,16], index: 3, kind: input, shape index: {}]
  %s4 = inlined_call_operand.vmem [shape: f32[1,4], index: 4, kind: input, shape index: {}]
  %s5 = inlined_call_operand.vmem [shape: f32[1,4], index: 5, kind: input, shape index: {}]
  %s6 = inlined_call_operand.vmem [shape: f32[1,16], index: 6, kind: input, shape index: {}]
  %s7 = inlined_call_operand.vmem [shape: f32[2,256,16], index: 7, kind: output, shape index: {}]
  %s8 = sld [smem:[#allocation0]]
  $region61: #{tpu_custom_call.1} parent=0
    _
  %s10 = ssub.s32 1, %s8
  %s11 = scalar_select 0, %s10, %s8
  loop: start=0, step=1, limit=4
  $region2: #{tpu_custom_call.1} parent=0 // loop_pre_header
    _
  $region3: #{tpu_custom_call.1} parent=0 // loop_header
    %s13 = sphi 0, %s17
    %p14 = scmp.ge.s32.totalorder %s13, 4
    %s23 = sphi 0, %s25
    %s26 = sphi 0, %s23
    %s27 = sphi 0, %s26
    %s43 = sphi 0, %s27
    %s47 = sphi 0, %s47
    %s49 = sphi 0, %s47
    %s50 = sphi 0, %s49
    %s64 = sphi 0, %s50
    %s68 = sphi 0, %s68
    %s70 = sphi 0, %s68
    %s71 = sphi 0, %s70
    %s85 = sphi 0, %s71
    %s89 = sphi 0, %s89
    %s91 = sphi 0, %s89
    %s92 = sphi 0, %s91
    %s106 = sphi 0, %s92
    %s110 = sphi 0, %s110
    %s112 = sphi 0, %s110
    %s113 = sphi 0, %s112
    %s127 = sphi 0, %s113
    %s131 = sphi 0, %s131
    %s133 = sphi 0, %s131
    %s134 = sphi 0, %s133
    %s148 = sphi 0, %s134
    %s152 = sphi 0, %s152
    %s154 = sphi 0, %s152
    %s155 = sphi 0, %s154
    %s169 = sphi 0, %s155
    %s175 = sphi 0, %s177
    %s178 = sphi 0, %s175
    %s179 = sphi 0, %s178
    %s195 = sphi 0, %s179
  $region4: #{tpu_custom_call.1} parent=0 // loop_header_branch
    %16 = sbr.rel (%p14) target = $region8
  $region5: #{tpu_custom_call.1} parent=0 // loop_body
    %s18 = ssub.s32 %s13, 1
    %s19 = ssub.s32 %s13, 2
    %s20 = sadd.s32 %s13, 1
    %s21 = ssub.s32 %s13, %s20
    %p22 = scmp.eq.s32.totalorder %s21, 0
    %s24 = sadd.s32 %s23, 1
    %s25 = scalar_select %p22, %s23, %s24
    %p28 = pneg %p22
    %p29 = scmp.eq.s32.totalorder %s13, 1
    %p30 = por %p28, %p29
    %p31 = scmp.ne.s32.totalorder %s23, %s26
    %p32 = scmp.eq.s32.totalorder %s13, 0
    %p33 = por %p31, %p32
    %p34 = scmp.ne.s32.totalorder %s23, %s26
    %p35 = scmp.eq.s32.totalorder %s18, 1
    %p36 = por %p34, %p35
    %p37 = scmp.ne.s32.totalorder %s26, %s27
    %p38 = scmp.eq.s32.totalorder %s18, 0
    %p39 = por %p37, %p38
    %p40 = scmp.ne.s32.totalorder %s26, %s27
    %p41 = scmp.eq.s32.totalorder %s19, 1
    %p42 = por %p40, %p41
    %p44 = scmp.ne.s32.totalorder %s27, %s43
    %p45 = scmp.eq.s32.totalorder %s19, 0
    %p46 = por %p44, %p45
    %s48 = sadd.s32 %s47, 1
    %p51 = scmp.eq.s32.totalorder %s13, 1
    %p52 = scmp.ne.s32.totalorder %s47, %s49
    %p53 = scmp.eq.s32.totalorder %s13, 0
    %p54 = por %p52, %p53
    %p55 = scmp.ne.s32.totalorder %s47, %s49
    %p56 = scmp.eq.s32.totalorder %s18, 1
    %p57 = por %p55, %p56
    %p58 = scmp.ne.s32.totalorder %s49, %s50
    %p59 = scmp.eq.s32.totalorder %s18, 0
    %p60 = por %p58, %p59
    %p61 = scmp.ne.s32.totalorder %s49, %s50
    %p62 = scmp.eq.s32.totalorder %s19, 1
    %p63 = por %p61, %p62
    %p65 = scmp.ne.s32.totalorder %s50, %s64
    %p66 = scmp.eq.s32.totalorder %s19, 0
    %p67 = por %p65, %p66
    %s69 = sadd.s32 %s68, 1
    %p72 = scmp.eq.s32.totalorder %s13, 1
    %p73 = scmp.ne.s32.totalorder %s68, %s70
    %p74 = scmp.eq.s32.totalorder %s13, 0
    %p75 = por %p73, %p74
    %p76 = scmp.ne.s32.totalorder %s68, %s70
    %p77 = scmp.eq.s32.totalorder %s18, 1
    %p78 = por %p76, %p77
    %p79 = scmp.ne.s32.totalorder %s70, %s71
    %p80 = scmp.eq.s32.totalorder %s18, 0
    %p81 = por %p79, %p80
    %p82 = scmp.ne.s32.totalorder %s70, %s71
    %p83 = scmp.eq.s32.totalorder %s19, 1
    %p84 = por %p82, %p83
    %p86 = scmp.ne.s32.totalorder %s71, %s85
    %p87 = scmp.eq.s32.totalorder %s19, 0
    %p88 = por %p86, %p87
    %s90 = sadd.s32 %s89, 1
    %p93 = scmp.eq.s32.totalorder %s13, 1
    %p94 = scmp.ne.s32.totalorder %s89, %s91
    %p95 = scmp.eq.s32.totalorder %s13, 0
    %p96 = por %p94, %p95
    %p97 = scmp.ne.s32.totalorder %s89, %s91
    %p98 = scmp.eq.s32.totalorder %s18, 1
    %p99 = por %p97, %p98
    %p100 = scmp.ne.s32.totalorder %s91, %s92
    %p101 = scmp.eq.s32.totalorder %s18, 0
    %p102 = por %p100, %p101
    %p103 = scmp.ne.s32.totalorder %s91, %s92
    %p104 = scmp.eq.s32.totalorder %s19, 1
    %p105 = por %p103, %p104
    %p107 = scmp.ne.s32.totalorder %s92, %s106
    %p108 = scmp.eq.s32.totalorder %s19, 0
    %p109 = por %p107, %p108
    %s111 = sadd.s32 %s110, 1
    %p114 = scmp.eq.s32.totalorder %s13, 1
    %p115 = scmp.ne.s32.totalorder %s110, %s112
    %p116 = scmp.eq.s32.totalorder %s13, 0
    %p117 = por %p115, %p116
    %p118 = scmp.ne.s32.totalorder %s110, %s112
    %p119 = scmp.eq.s32.totalorder %s18, 1
    %p120 = por %p118, %p119
    %p121 = scmp.ne.s32.totalorder %s112, %s113
    %p122 = scmp.eq.s32.totalorder %s18, 0
    %p123 = por %p121, %p122
    %p124 = scmp.ne.s32.totalorder %s112, %s113
    %p125 = scmp.eq.s32.totalorder %s19, 1
    %p126 = por %p124, %p125
    %p128 = scmp.ne.s32.totalorder %s113, %s127
    %p129 = scmp.eq.s32.totalorder %s19, 0
    %p130 = por %p128, %p129
    %s132 = sadd.s32 %s131, 1
    %p135 = scmp.eq.s32.totalorder %s13, 1
    %p136 = scmp.ne.s32.totalorder %s131, %s133
    %p137 = scmp.eq.s32.totalorder %s13, 0
    %p138 = por %p136, %p137
    %p139 = scmp.ne.s32.totalorder %s131, %s133
    %p140 = scmp.eq.s32.totalorder %s18, 1
    %p141 = por %p139, %p140
    %p142 = scmp.ne.s32.totalorder %s133, %s134
    %p143 = scmp.eq.s32.totalorder %s18, 0
    %p144 = por %p142, %p143
    %p145 = scmp.ne.s32.totalorder %s133, %s134
    %p146 = scmp.eq.s32.totalorder %s19, 1
    %p147 = por %p145, %p146
    %p149 = scmp.ne.s32.totalorder %s134, %s148
    %p150 = scmp.eq.s32.totalorder %s19, 0
    %p151 = por %p149, %p150
    %s153 = sadd.s32 %s152, 1
    %p156 = scmp.eq.s32.totalorder %s13, 1
    %p157 = scmp.ne.s32.totalorder %s152, %s154
    %p158 = scmp.eq.s32.totalorder %s13, 0
    %p159 = por %p157, %p158
    %p160 = scmp.ne.s32.totalorder %s152, %s154
    %p161 = scmp.eq.s32.totalorder %s18, 1
    %p162 = por %p160, %p161
    %p163 = scmp.ne.s32.totalorder %s154, %s155
    %p164 = scmp.eq.s32.totalorder %s18, 0
    %p165 = por %p163, %p164
    %p166 = scmp.ne.s32.totalorder %s154, %s155
    %p167 = scmp.eq.s32.totalorder %s19, 1
    %p168 = por %p166, %p167
    %p170 = scmp.ne.s32.totalorder %s155, %s169
    %p171 = scmp.eq.s32.totalorder %s19, 0
    %p172 = por %p170, %p171
    %s173 = ssub.s32 %s13, %s20
    %p174 = scmp.eq.s32.totalorder %s173, 0
    %s176 = sadd.s32 %s175, 1
    %s177 = scalar_select %p174, %s175, %s176
    %p180 = pneg %p174
    %p181 = scmp.eq.s32.totalorder %s13, 1
    %p182 = por %p180, %p181
    %p183 = scmp.ne.s32.totalorder %s175, %s178
    %p184 = scmp.eq.s32.totalorder %s13, 0
    %p185 = por %p183, %p184
    %p186 = scmp.ne.s32.totalorder %s175, %s178
    %p187 = scmp.eq.s32.totalorder %s18, 1
    %p188 = por %p186, %p187
    %p189 = scmp.ne.s32.totalorder %s178, %s179
    %p190 = scmp.eq.s32.totalorder %s18, 0
    %p191 = por %p189, %p190
    %p192 = scmp.ne.s32.totalorder %s178, %s179
    %p193 = scmp.eq.s32.totalorder %s19, 1
    %p194 = por %p192, %p193
    %p196 = scmp.ne.s32.totalorder %s179, %s195
    %p197 = scmp.eq.s32.totalorder %s19, 0
    %p198 = por %p196, %p197
    %p199 = scmp.le.s32.totalorder 1, %s13
    %p200 = scmp.lt.s32.totalorder %s13, 3
    %p201 = pnand %p199, %p200
    %p202 = pneg %p201
    // Predicated region
    $region9: #{tpu_custom_call.1} parent=5 // pred_check
      _
    $region10: #{tpu_custom_call.1} parent=5 // pred_check_branch
      %204 = sbr.rel (%p201) target = $region12
    $region11: #{tpu_custom_call.1} parent=5 // pred_region
      %s205 = ssub.s32 %s13, 1
      // Predicated region
      $region13: #{tpu_custom_call.1} parent=11 // pred_check
        %p206 = pneg %p60
      $region14: #{tpu_custom_call.1} parent=11 // pred_check_branch
        %208 = sbr.rel (%p206) target = $region16
      $region15: #{tpu_custom_call.1} parent=11 // pred_region
        _
      $region16: #{tpu_custom_call.1} parent=11 // pred_fallthru
        _
      // Predicated region
      $region17: #{tpu_custom_call.1} parent=11 // pred_check
        %p209 = pneg %p81
      $region18: #{tpu_custom_call.1} parent=11 // pred_check_branch
        %211 = sbr.rel (%p209) target = $region20
      $region19: #{tpu_custom_call.1} parent=11 // pred_region
        _
      $region20: #{tpu_custom_call.1} parent=11 // pred_fallthru
        _
      // Predicated region
      $region21: #{tpu_custom_call.1} parent=11 // pred_check
        %p212 = pneg %p102
      $region22: #{tpu_custom_call.1} parent=11 // pred_check_branch
        %214 = sbr.rel (%p212) target = $region24
      $region23: #{tpu_custom_call.1} parent=11 // pred_region
        _
      $region24: #{tpu_custom_call.1} parent=11 // pred_fallthru
        _
      // Predicated region
      $region25: #{tpu_custom_call.1} parent=11 // pred_check
        %p215 = pneg %p123
      $region26: #{tpu_custom_call.1} parent=11 // pred_check_branch
        %217 = sbr.rel (%p215) target = $region28
      $region27: #{tpu_custom_call.1} parent=11 // pred_region
        _
      $region28: #{tpu_custom_call.1} parent=11 // pred_fallthru
        _
      // Predicated region
      $region29: #{tpu_custom_call.1} parent=11 // pred_check
        %p218 = pneg %p144
      $region30: #{tpu_custom_call.1} parent=11 // pred_check_branch
        %220 = sbr.rel (%p218) target = $region32
      $region31: #{tpu_custom_call.1} parent=11 // pred_region
        _
      $region32: #{tpu_custom_call.1} parent=11 // pred_fallthru
        _
      // Predicated region
      $region33: #{tpu_custom_call.1} parent=11 // pred_check
        %p221 = pneg %p165
      $region34: #{tpu_custom_call.1} parent=11 // pred_check_branch
        %223 = sbr.rel (%p221) target = $region36
      $region35: #{tpu_custom_call.1} parent=11 // pred_region
        _
      $region36: #{tpu_custom_call.1} parent=11 // pred_fallthru
        _
    $region12: #{tpu_custom_call.1} parent=5 // pred_fallthru
      _
    %p224 = scmp.lt.s32.totalorder %s13, 2
    // Predicated region
    $region37: #{tpu_custom_call.1} parent=5 // pred_check
      %p225 = pneg %p224
    $region38: #{tpu_custom_call.1} parent=5 // pred_check_branch
      %227 = sbr.rel (%p225) target = $region40
    $region39: #{tpu_custom_call.1} parent=5 // pred_region
      // Predicated region
      $region41: #{tpu_custom_call.1} parent=39 // pred_check
        %p228 = pneg %p33
      $region42: #{tpu_custom_call.1} parent=39 // pred_check_branch
        %230 = sbr.rel (%p228) target = $region44
      $region43: #{tpu_custom_call.1} parent=39 // pred_region
        %p231 = scmp.lt.s32.totalorder %s13, 1
        %s232 = scalar_select %p231, %s13, 1
        %s233 = smul.addr %s232, 32
        %s234 = smul.addr %s233, 8
        %s235 = scalar_lea.vmem %s0, %s234
      $region44: #{tpu_custom_call.1} parent=39 // pred_fallthru
        _
    $region40: #{tpu_custom_call.1} parent=5 // pred_fallthru
      _
    %p236 = scmp.le.s32.totalorder 1, %s13
    %p237 = scmp.lt.s32.totalorder %s13, 3
    %p238 = pnand %p236, %p237
    %p239 = pneg %p238
    // Predicated region
    $region45: #{tpu_custom_call.1} parent=5 // pred_check
      _
    $region46: #{tpu_custom_call.1} parent=5 // pred_check_branch
      %241 = sbr.rel (%p238) target = $region48
    $region47: #{tpu_custom_call.1} parent=5 // pred_region
      %s242 = ssub.s32 %s13, 1
      %p243 = scmp.lt.s32.totalorder %s18, 1
      %s244 = scalar_select %p243, %s18, 1
      %s245 = smul.addr %s244, 32
      %s246 = smul.addr %s245, 8
      %s247 = scalar_lea.vmem %s0, %s246
      %p248 = pneg %p39
      %p249 = pneg %p36
      %p250 = pneg %p60
      %p251 = pneg %p57
      %p252 = pneg %p81
      %p253 = pneg %p78
      %p254 = pneg %p102
      %p255 = pneg %p99
      %p256 = pneg %p123
      %p257 = pneg %p120
      %p258 = pneg %p144
      %p259 = pneg %p141
      %p260 = pneg %p165
      %p261 = pneg %p162
      %p262 = pneg %p191
      %p263 = pneg %p188
      %p264 = scmp.lt.s32.totalorder %s18, 1
      %s265 = scalar_select %p264, %s18, 1
      %s266 = smul.addr %s265, 32
      %s267 = smul.addr %s266, 8
      %s268 = scalar_lea.vmem %s7, %s267
      %p269 = scmp.lt.s32.totalorder %s18, 1
      %s270 = scalar_select %p269, %s18, 1
      %s271 = smul.addr %s270, 32
      %s272 = smul.addr %s271, 8
      %s273 = scalar_lea.vmem %s0, %s272
      %p274 = scmp.lt.s32.totalorder %s18, 1
      %s275 = scalar_select %p274, %s18, 1
      %s276 = smul.addr %s275, 32
      %s277 = smul.addr %s276, 8
      %s278 = scalar_lea.vmem %s7, %s277
      %v280 = vld [vmem:[%s273] sm:$0xff]
      %v281 = vld [vmem:[%s273 + $0x8] sm:$0xff]
      %v282 = vld [vmem:[%s273 + $0x10] sm:$0xff]
      %v283 = vld [vmem:[%s273 + $0x18] sm:$0xff]
      %v284 = vld [vmem:[%s273 + $0x20] sm:$0xff]
      %v285 = vld [vmem:[%s273 + $0x28] sm:$0xff]
      %v286 = vld [vmem:[%s273 + $0x30] sm:$0xff]
      %v287 = vld [vmem:[%s273 + $0x38] sm:$0xff]
      %v288 = vld [vmem:[%s273 + $0x40] sm:$0xff]
      %v289 = vld [vmem:[%s273 + $0x48] sm:$0xff]
      %v290 = vld [vmem:[%s273 + $0x50] sm:$0xff]
      %v291 = vld [vmem:[%s273 + $0x58] sm:$0xff]
      %v292 = vld [vmem:[%s273 + $0x60] sm:$0xff]
      %v293 = vld [vmem:[%s273 + $0x68] sm:$0xff]
      %v294 = vld [vmem:[%s273 + $0x70] sm:$0xff]
      %v295 = vld [vmem:[%s273 + $0x78] sm:$0xff]
      %v296 = vld [vmem:[%s273 + $0x80] sm:$0xff]
      %v297 = vld [vmem:[%s273 + $0x88] sm:$0xff]
      %v298 = vld [vmem:[%s273 + $0x90] sm:$0xff]
      %v299 = vld [vmem:[%s273 + $0x98] sm:$0xff]
      %v300 = vld [vmem:[%s273 + $0xa0] sm:$0xff]
      %v301 = vld [vmem:[%s273 + $0xa8] sm:$0xff]
      %v302 = vld [vmem:[%s273 + $0xb0] sm:$0xff]
      %v303 = vld [vmem:[%s273 + $0xb8] sm:$0xff]
      %v304 = vld [vmem:[%s273 + $0xc0] sm:$0xff]
      %v305 = vld [vmem:[%s273 + $0xc8] sm:$0xff]
      %v306 = vld [vmem:[%s273 + $0xd0] sm:$0xff]
      %v307 = vld [vmem:[%s273 + $0xd8] sm:$0xff]
      %v308 = vld [vmem:[%s273 + $0xe0] sm:$0xff]
      %v309 = vld [vmem:[%s273 + $0xe8] sm:$0xff]
      %v310 = vld [vmem:[%s273 + $0xf0] sm:$0xff]
      %v311 = vld [vmem:[%s273 + $0xf8] sm:$0xff]
      %v312 = vpack.c.bf16 %v281, %v280
      %v313 = vpack.c.bf16 %v283, %v282
      %v314 = vpack.c.bf16 %v285, %v284
      %v315 = vpack.c.bf16 %v287, %v286
      %v316 = vpack.c.bf16 %v289, %v288
      %v317 = vpack.c.bf16 %v291, %v290
      %v318 = vpack.c.bf16 %v293, %v292
      %v319 = vpack.c.bf16 %v295, %v294
      %v320 = vpack.c.bf16 %v297, %v296
      %v321 = vpack.c.bf16 %v299, %v298
      %v322 = vpack.c.bf16 %v301, %v300
      %v323 = vpack.c.bf16 %v303, %v302
      %v324 = vpack.c.bf16 %v305, %v304
      %v325 = vpack.c.bf16 %v307, %v306
      %v326 = vpack.c.bf16 %v309, %v308
      %v327 = vpack.c.bf16 %v311, %v310
      %v328 = vld [vmem:[%s1] sm:$0xf]
      %v329 = vld [vmem:[%s1 + $0x4] sm:$0xf]
      %v330 = vld [vmem:[%s4] sm:$0x1]
      %v332 = vlaneseq
      %v333 = vshrl.u32 %v332, 7
      %v334 = vsub.s32 0, %v333
      %v335 = vrot.slane %v330, %v334
      %v339 = vunpack.c.l.b16 %v328
      %v340 = vunpack.c.l.b16 %v329
      %v341 = vpack.c.b16 %v340, %v339
      %vm343 = vcmask 130048
      %v345 = vsel %vm343, %v312, 0
      %v348 = vsel %vm343, %v313, 0
      %v351 = vsel %vm343, %v314, 0
      %v354 = vsel %vm343, %v315, 0
      %v357 = vsel %vm343, %v316, 0
      %v360 = vsel %vm343, %v317, 0
      %v363 = vsel %vm343, %v318, 0
      %v366 = vsel %vm343, %v319, 0
      %v369 = vsel %vm343, %v320, 0
      %v372 = vsel %vm343, %v321, 0
      %v375 = vsel %vm343, %v322, 0
      %v378 = vsel %vm343, %v323, 0
      %v381 = vsel %vm343, %v324, 0
      %v384 = vsel %vm343, %v325, 0
      %v387 = vsel %vm343, %v326, 0
      %v390 = vsel %vm343, %v327, 0
      %392 = vmatprep.subr.bf16.mxu0 0
      %393 = vmatpush1.bf16.msra.mxu0 0
      %394 = vmatprep.subr.bf16.mxu0 0
      %395 = vmatpush1.bf16.msra.mxu0 0
      %396 = vmatprep.subr.bf16.mxu0 0
      %397 = vmatpush1.bf16.msra.mxu0 0
      %398 = vmatprep.subr.bf16.mxu0 0
      %399 = vmatpush1.bf16.msra.mxu0 0
      %400 = vmatprep.subr.bf16.mxu0 0
      %401 = vmatpush1.bf16.msra.mxu0 0
      %402 = vmatprep.subr.bf16.mxu0 0
      %403 = vmatpush1.bf16.msra.mxu0 0
      %404 = vmatprep.subr.bf16.mxu0 0
      %405 = vmatpush1.bf16.msra.mxu0 0
      %406 = vmatprep.subr.bf16.mxu0 0
      %407 = vmatpush1.bf16.msra.mxu0 %v341
      %408 = vmatprep.subr.bf16.mxu0 0
      %409 = vmatpush2.bf16.msra.mxu0 0
      %410 = vmatprep.subr.bf16.mxu0 0
      %411 = vmatpush2.bf16.msra.mxu0 0
      %412 = vmatprep.subr.bf16.mxu0 0
      %413 = vmatpush2.bf16.msra.mxu0 0
      %414 = vmatprep.subr.bf16.mxu0 0
      %415 = vmatpush2.bf16.msra.mxu0 0
      %416 = vmatprep.subr.bf16.mxu0 0
      %417 = vmatpush2.bf16.msra.mxu0 0
      %418 = vmatprep.subr.bf16.mxu0 0
      %419 = vmatpush2.bf16.msra.mxu0 0
      %420 = vmatprep.subr.bf16.mxu0 0
      %421 = vmatpush2.bf16.msra.mxu0 0
      %422 = vmatprep.subr.bf16.mxu0 0
      %423 = vmatpush2.bf16.msra.mxu0 0
      %424 = vmatprep.mubr.bf16.mxu0 0
      %425 = vmatmul.mubr.bf16.gmra.mxu0 %v345
      %v426 = vpop.f32.mrf.mxu0
      %v427 = vadd.f32 %v335, %v426
      %v428 = vpop.f32.mrf.mxu0
      %v429 = vpop.f32.mrf.mxu0
      %v430 = vadd.f32 %v335, %v429
      %v431 = vpop.f32.mrf.mxu0
      %432 = vmatprep.mubr.bf16.mxu0 0
      %433 = vmatmul.mubr.bf16.gmra.mxu0 %v348
      %v434 = vpop.f32.mrf.mxu0
      %v435 = vadd.f32 %v335, %v434
      %v436 = vpop.f32.mrf.mxu0
      %v437 = vpop.f32.mrf.mxu0
      %v438 = vadd.f32 %v335, %v437
      %v439 = vpop.f32.mrf.mxu0
      %440 = vmatprep.mubr.bf16.mxu0 0
      %441 = vmatmul.mubr.bf16.gmra.mxu0 %v351
      %v442 = vpop.f32.mrf.mxu0
      %v443 = vadd.f32 %v335, %v442
      %v444 = vpop.f32.mrf.mxu0
      %v445 = vpop.f32.mrf.mxu0
      %v446 = vadd.f32 %v335, %v445
      %v447 = vpop.f32.mrf.mxu0
      %448 = vmatprep.mubr.bf16.mxu0 0
      %449 = vmatmul.mubr.bf16.gmra.mxu0 %v354
      %v450 = vpop.f32.mrf.mxu0
      %v451 = vadd.f32 %v335, %v450
      %v452 = vpop.f32.mrf.mxu0
      %v453 = vpop.f32.mrf.mxu0
      %v454 = vadd.f32 %v335, %v453
      %v455 = vpop.f32.mrf.mxu0
      %456 = vmatprep.mubr.bf16.mxu0 0
      %457 = vmatmul.mubr.bf16.gmra.mxu0 %v357
      %v458 = vpop.f32.mrf.mxu0
      %v459 = vadd.f32 %v335, %v458
      %v460 = vpop.f32.mrf.mxu0
      %v461 = vpop.f32.mrf.mxu0
      %v462 = vadd.f32 %v335, %v461
      %v463 = vpop.f32.mrf.mxu0
      %464 = vmatprep.mubr.bf16.mxu0 0
      %465 = vmatmul.mubr.bf16.gmra.mxu0 %v360
      %v466 = vpop.f32.mrf.mxu0
      %v467 = vadd.f32 %v335, %v466
      %v468 = vpop.f32.mrf.mxu0
      %v469 = vpop.f32.mrf.mxu0
      %v470 = vadd.f32 %v335, %v469
      %v471 = vpop.f32.mrf.mxu0
      %472 = vmatprep.mubr.bf16.mxu0 0
      %473 = vmatmul.mubr.bf16.gmra.mxu0 %v363
      %v474 = vpop.f32.mrf.mxu0
      %v475 = vadd.f32 %v335, %v474
      %v476 = vpop.f32.mrf.mxu0
      %v477 = vpop.f32.mrf.mxu0
      %v478 = vadd.f32 %v335, %v477
      %v479 = vpop.f32.mrf.mxu0
      %480 = vmatprep.mubr.bf16.mxu0 0
      %481 = vmatmul.mubr.bf16.gmra.mxu0 %v366
      %v482 = vpop.f32.mrf.mxu0
      %v483 = vadd.f32 %v335, %v482
      %v484 = vpop.f32.mrf.mxu0
      %v485 = vpop.f32.mrf.mxu0
      %v486 = vadd.f32 %v335, %v485
      %v487 = vpop.f32.mrf.mxu0
      %488 = vmatprep.mubr.bf16.mxu0 0
      %489 = vmatmul.mubr.bf16.gmra.mxu0 %v369
      %v490 = vpop.f32.mrf.mxu0
      %v491 = vadd.f32 %v335, %v490
      %v492 = vpop.f32.mrf.mxu0
      %v493 = vpop.f32.mrf.mxu0
      %v494 = vadd.f32 %v335, %v493
      %v495 = vpop.f32.mrf.mxu0
      %496 = vmatprep.mubr.bf16.mxu0 0
      %497 = vmatmul.mubr.bf16.gmra.mxu0 %v372
      %v498 = vpop.f32.mrf.mxu0
      %v499 = vadd.f32 %v335, %v498
      %v500 = vpop.f32.mrf.mxu0
      %v501 = vpop.f32.mrf.mxu0
      %v502 = vadd.f32 %v335, %v501
      %v503 = vpop.f32.mrf.mxu0
      %504 = vmatprep.mubr.bf16.mxu0 0
      %505 = vmatmul.mubr.bf16.gmra.mxu0 %v375
      %v506 = vpop.f32.mrf.mxu0
      %v507 = vadd.f32 %v335, %v506
      %v508 = vpop.f32.mrf.mxu0
      %v509 = vpop.f32.mrf.mxu0
      %v510 = vadd.f32 %v335, %v509
      %v511 = vpop.f32.mrf.mxu0
      %512 = vmatprep.mubr.bf16.mxu0 0
      %513 = vmatmul.mubr.bf16.gmra.mxu0 %v378
      %v514 = vpop.f32.mrf.mxu0
      %v515 = vadd.f32 %v335, %v514
      %v516 = vpop.f32.mrf.mxu0
      %v517 = vpop.f32.mrf.mxu0
      %v518 = vadd.f32 %v335, %v517
      %v519 = vpop.f32.mrf.mxu0
      %520 = vmatprep.mubr.bf16.mxu0 0
      %521 = vmatmul.mubr.bf16.gmra.mxu0 %v381
      %v522 = vpop.f32.mrf.mxu0
      %v523 = vadd.f32 %v335, %v522
      %v524 = vpop.f32.mrf.mxu0
      %v525 = vpop.f32.mrf.mxu0
      %v526 = vadd.f32 %v335, %v525
      %v527 = vpop.f32.mrf.mxu0
      %528 = vmatprep.mubr.bf16.mxu0 0
      %529 = vmatmul.mubr.bf16.gmra.mxu0 %v384
      %v530 = vpop.f32.mrf.mxu0
      %v531 = vadd.f32 %v335, %v530
      %v532 = vpop.f32.mrf.mxu0
      %v533 = vpop.f32.mrf.mxu0
      %v534 = vadd.f32 %v335, %v533
      %v535 = vpop.f32.mrf.mxu0
      %536 = vmatprep.mubr.bf16.mxu0 0
      %537 = vmatmul.mubr.bf16.gmra.mxu0 %v387
      %v538 = vpop.f32.mrf.mxu0
      %v539 = vadd.f32 %v335, %v538
      %v540 = vpop.f32.mrf.mxu0
      %v541 = vpop.f32.mrf.mxu0
      %v542 = vadd.f32 %v335, %v541
      %v543 = vpop.f32.mrf.mxu0
      %544 = vmatprep.mubr.bf16.mxu0 0
      %545 = vmatmul.mubr.bf16.gmra.mxu0 %v390
      %v546 = vpop.f32.mrf.mxu0
      %v547 = vadd.f32 %v335, %v546
      %v548 = vpop.f32.mrf.mxu0
      %v549 = vpop.f32.mrf.mxu0
      %v550 = vadd.f32 %v335, %v549
      %v551 = vpop.f32.mrf.mxu0
      %552 = vdwg.mxu0
      %v553 = vmax.f32 %v427, 0.0
      %v554 = vmax.f32 %v430, 0.0
      %v555 = vmax.f32 %v435, 0.0
      %v556 = vmax.f32 %v438, 0.0
      %v557 = vmax.f32 %v443, 0.0
      %v558 = vmax.f32 %v446, 0.0
      %v559 = vmax.f32 %v451, 0.0
      %v560 = vmax.f32 %v454, 0.0
      %v561 = vmax.f32 %v459, 0.0
      %v562 = vmax.f32 %v462, 0.0
      %v563 = vmax.f32 %v467, 0.0
      %v564 = vmax.f32 %v470, 0.0
      %v565 = vmax.f32 %v475, 0.0
      %v566 = vmax.f32 %v478, 0.0
      %v567 = vmax.f32 %v483, 0.0
      %v568 = vmax.f32 %v486, 0.0
      %v569 = vmax.f32 %v491, 0.0
      %v570 = vmax.f32 %v494, 0.0
      %v571 = vmax.f32 %v499, 0.0
      %v572 = vmax.f32 %v502, 0.0
      %v573 = vmax.f32 %v507, 0.0
      %v574 = vmax.f32 %v510, 0.0
      %v575 = vmax.f32 %v515, 0.0
      %v576 = vmax.f32 %v518, 0.0
      %v577 = vmax.f32 %v523, 0.0
      %v578 = vmax.f32 %v526, 0.0
      %v579 = vmax.f32 %v531, 0.0
      %v580 = vmax.f32 %v534, 0.0
      %v581 = vmax.f32 %v539, 0.0
      %v582 = vmax.f32 %v542, 0.0
      %v583 = vmax.f32 %v547, 0.0
      %v584 = vmax.f32 %v550, 0.0
      %vm585 = vcmask 31744
      %586 = vst.msk [vmem:[#allocation2] sm:$0xff] %vm585, 0.0
      %587 = vst.msk [vmem:[#allocation2 + $0x8] sm:$0xff] %vm585, 0.0
      %vm588 = vcmask 25600
      %589 = vst.msk [vmem:[#allocation2 + $0x10] sm:$0x3] %vm588, 0.0
      %590 = vst.msk [vmem:[#allocation2 + $0x18] sm:$0xff] %vm585, 0.0
      %591 = vst.msk [vmem:[#allocation2 + $0x20] sm:$0xff] %vm585, 0.0
      %592 = vst.msk [vmem:[#allocation2 + $0x28] sm:$0x3] %vm588, 0.0
      %593 = vst.msk [vmem:[#allocation2 + $0x30] sm:$0xff] %vm585, 0.0
      %594 = vst.msk [vmem:[#allocation2 + $0x38] sm:$0xff] %vm585, 0.0
      %595 = vst.msk [vmem:[#allocation2 + $0x40] sm:$0x3] %vm588, 0.0
      %596 = vst.msk [vmem:[#allocation2 + $0x48] sm:$0xff] %vm585, 0.0
      %597 = vst.msk [vmem:[#allocation2 + $0x50] sm:$0xff] %vm585, 0.0
      %598 = vst.msk [vmem:[#allocation2 + $0x58] sm:$0x3] %vm588, 0.0
      %599 = vst.msk [vmem:[#allocation2 + $0x60] sm:$0xff] %vm585, 0.0
      %600 = vst.msk [vmem:[#allocation2 + $0x68] sm:$0xff] %vm585, 0.0
      %601 = vst.msk [vmem:[#allocation2 + $0x70] sm:$0x3] %vm588, 0.0
      %602 = vst.msk [vmem:[#allocation2 + $0x78] sm:$0xff] %vm585, 0.0
      %603 = vst.msk [vmem:[#allocation2 + $0x80] sm:$0xff] %vm585, 0.0
      %604 = vst.msk [vmem:[#allocation2 + $0x88] sm:$0x3] %vm588, 0.0
      %605 = vst.msk [vmem:[#allocation2 + $0x90] sm:$0xff] %vm585, 0.0
      %606 = vst.msk [vmem:[#allocation2 + $0x98] sm:$0xff] %vm585, 0.0
      %607 = vst.msk [vmem:[#allocation2 + $0xa0] sm:$0x3] %vm588, 0.0
      %608 = vst.msk [vmem:[#allocation2 + $0xa8] sm:$0xff] %vm585, 0.0
      %609 = vst.msk [vmem:[#allocation2 + $0xb0] sm:$0xff] %vm585, 0.0
      %610 = vst.msk [vmem:[#allocation2 + $0xb8] sm:$0x3] %vm588, 0.0
      %611 = vst.msk [vmem:[#allocation2 + $0xc0] sm:$0xff] %vm585, 0.0
      %612 = vst.msk [vmem:[#allocation2 + $0xc8] sm:$0xff] %vm585, 0.0
      %613 = vst.msk [vmem:[#allocation2 + $0xd0] sm:$0x3] %vm588, 0.0
      %614 = vst.msk [vmem:[#allocation2 + $0xd8] sm:$0xff] %vm585, 0.0
      %615 = vst.msk [vmem:[#allocation2 + $0xe0] sm:$0xff] %vm585, 0.0
      %616 = vst.msk [vmem:[#allocation2 + $0xe8] sm:$0x3] %vm588, 0.0
      %617 = vst.msk [vmem:[#allocation2 + $0xf0] sm:$0xff] %vm585, 0.0
      %618 = vst.msk [vmem:[#allocation2 + $0xf8] sm:$0xff] %vm585, 0.0
      %619 = vst.msk [vmem:[#allocation2 + $0x100] sm:$0x3] %vm588, 0.0
      %620 = vst.msk [vmem:[#allocation2 + $0x108] sm:$0xff] %vm585, 0.0
      %621 = vst.msk [vmem:[#allocation2 + $0x110] sm:$0xff] %vm585, 0.0
      %622 = vst.msk [vmem:[#allocation2 + $0x118] sm:$0x3] %vm588, 0.0
      %623 = vst.msk [vmem:[#allocation2 + $0x120] sm:$0xff] %vm585, 0.0
      %624 = vst.msk [vmem:[#allocation2 + $0x128] sm:$0xff] %vm585, 0.0
      %625 = vst.msk [vmem:[#allocation2 + $0x130] sm:$0x3] %vm588, 0.0
      %626 = vst.msk [vmem:[#allocation2 + $0x138] sm:$0xff] %vm585, 0.0
      %627 = vst.msk [vmem:[#allocation2 + $0x140] sm:$0xff] %vm585, 0.0
      %628 = vst.msk [vmem:[#allocation2 + $0x148] sm:$0x3] %vm588, 0.0
      %629 = vst.msk [vmem:[#allocation2 + $0x150] sm:$0xff] %vm585, 0.0
      %630 = vst.msk [vmem:[#allocation2 + $0x158] sm:$0xff] %vm585, 0.0
      %631 = vst.msk [vmem:[#allocation2 + $0x160] sm:$0x3] %vm588, 0.0
      %632 = vst.msk [vmem:[#allocation2 + $0x168] sm:$0xff] %vm585, 0.0
      %633 = vst.msk [vmem:[#allocation2 + $0x170] sm:$0xff] %vm585, 0.0
      %634 = vst.msk [vmem:[#allocation2 + $0x178] sm:$0x3] %vm588, 0.0
      %635 = vst.msk [vmem:[#allocation2 + $0x180] sm:$0xff] %vm585, 0.0
      %636 = vst.msk [vmem:[#allocation2 + $0x188] sm:$0xff] %vm585, 0.0
      %637 = vst.msk [vmem:[#allocation2 + $0x190] sm:$0x3] %vm588, 0.0
      %638 = vst.msk [vmem:[#allocation2 + $0x198] sm:$0xff] %vm585, 0.0
      %639 = vst.msk [vmem:[#allocation2 + $0x1a0] sm:$0xff] %vm585, 0.0
      %640 = vst.msk [vmem:[#allocation2 + $0x1a8] sm:$0x3] %vm588, 0.0
      %s641 = scalar_lea.vmem [#allocation2], 24
      %642 = vst.msk [vmem:[%s641 + $0x1] sm:$0xff] %vm585, %v553
      %643 = vst.msk [vmem:[%s641 + $0x9] sm:$0xff] %vm585, %v554
      %644 = vst.msk [vmem:[%s641 + $0x19] sm:$0xff] %vm585, %v555
      %645 = vst.msk [vmem:[%s641 + $0x21] sm:$0xff] %vm585, %v556
      %646 = vst.msk [vmem:[%s641 + $0x31] sm:$0xff] %vm585, %v557
      %647 = vst.msk [vmem:[%s641 + $0x39] sm:$0xff] %vm585, %v558
      %648 = vst.msk [vmem:[%s641 + $0x49] sm:$0xff] %vm585, %v559
      %649 = vst.msk [vmem:[%s641 + $0x51] sm:$0xff] %vm585, %v560
      %650 = vst.msk [vmem:[%s641 + $0x61] sm:$0xff] %vm585, %v561
      %651 = vst.msk [vmem:[%s641 + $0x69] sm:$0xff] %vm585, %v562
      %652 = vst.msk [vmem:[%s641 + $0x79] sm:$0xff] %vm585, %v563
      %653 = vst.msk [vmem:[%s641 + $0x81] sm:$0xff] %vm585, %v564
      %654 = vst.msk [vmem:[%s641 + $0x91] sm:$0xff] %vm585, %v565
      %655 = vst.msk [vmem:[%s641 + $0x99] sm:$0xff] %vm585, %v566
      %656 = vst.msk [vmem:[%s641 + $0xa9] sm:$0xff] %vm585, %v567
      %657 = vst.msk [vmem:[%s641 + $0xb1] sm:$0xff] %vm585, %v568
      %658 = vst.msk [vmem:[%s641 + $0xc1] sm:$0xff] %vm585, %v569
      %659 = vst.msk [vmem:[%s641 + $0xc9] sm:$0xff] %vm585, %v570
      %660 = vst.msk [vmem:[%s641 + $0xd9] sm:$0xff] %vm585, %v571
      %661 = vst.msk [vmem:[%s641 + $0xe1] sm:$0xff] %vm585, %v572
      %662 = vst.msk [vmem:[%s641 + $0xf1] sm:$0xff] %vm585, %v573
      %663 = vst.msk [vmem:[%s641 + $0xf9] sm:$0xff] %vm585, %v574
      %664 = vst.msk [vmem:[%s641 + $0x109] sm:$0xff] %vm585, %v575
      %665 = vst.msk [vmem:[%s641 + $0x111] sm:$0xff] %vm585, %v576
      %666 = vst.msk [vmem:[%s641 + $0x121] sm:$0xff] %vm585, %v577
      %667 = vst.msk [vmem:[%s641 + $0x129] sm:$0xff] %vm585, %v578
      %668 = vst.msk [vmem:[%s641 + $0x139] sm:$0xff] %vm585, %v579
      %669 = vst.msk [vmem:[%s641 + $0x141] sm:$0xff] %vm585, %v580
      %670 = vst.msk [vmem:[%s641 + $0x151] sm:$0xff] %vm585, %v581
      %671 = vst.msk [vmem:[%s641 + $0x159] sm:$0xff] %vm585, %v582
      %672 = vst.msk [vmem:[%s641 + $0x169] sm:$0xff] %vm585, %v583
      %673 = vst.msk [vmem:[%s641 + $0x171] sm:$0xff] %vm585, %v584
      %v674 = vld [vmem:[#allocation2] sm:$0xff]
      %v675 = vld [vmem:[#allocation2 + $0x8] sm:$0xff]
      %v676 = vld [vmem:[#allocation2 + $0x18] sm:$0xff]
      %v677 = vld [vmem:[#allocation2 + $0x20] sm:$0xff]
      %v678 = vld [vmem:[#allocation2 + $0x30] sm:$0xff]
      %v679 = vld [vmem:[#allocation2 + $0x38] sm:$0xff]
      %v680 = vld [vmem:[#allocation2 + $0x48] sm:$0xff]
      %v681 = vld [vmem:[#allocation2 + $0x50] sm:$0xff]
      %v682 = vld [vmem:[#allocation2 + $0x60] sm:$0xff]
      %v683 = vld [vmem:[#allocation2 + $0x68] sm:$0xff]
      %v684 = vld [vmem:[#allocation2 + $0x78] sm:$0xff]
      %v685 = vld [vmem:[#allocation2 + $0x80] sm:$0xff]
      %v686 = vld [vmem:[#allocation2 + $0x90] sm:$0xff]
      %v687 = vld [vmem:[#allocation2 + $0x98] sm:$0xff]
      %v688 = vld [vmem:[#allocation2 + $0xa8] sm:$0xff]
      %v689 = vld [vmem:[#allocation2 + $0xb0] sm:$0xff]
      %v690 = vld [vmem:[#allocation2 + $0xc0] sm:$0xff]
      %v691 = vld [vmem:[#allocation2 + $0xc8] sm:$0xff]
      %v692 = vld [vmem:[#allocation2 + $0xd8] sm:$0xff]
      %v693 = vld [vmem:[#allocation2 + $0xe0] sm:$0xff]
      %v694 = vld [vmem:[#allocation2 + $0xf0] sm:$0xff]
      %v695 = vld [vmem:[#allocation2 + $0xf8] sm:$0xff]
      %v696 = vld [vmem:[#allocation2 + $0x108] sm:$0xff]
      %v697 = vld [vmem:[#allocation2 + $0x110] sm:$0xff]
      %v698 = vld [vmem:[#allocation2 + $0x120] sm:$0xff]
      %v699 = vld [vmem:[#allocation2 + $0x128] sm:$0xff]
      %v700 = vld [vmem:[#allocation2 + $0x138] sm:$0xff]
      %v701 = vld [vmem:[#allocation2 + $0x140] sm:$0xff]
      %v702 = vld [vmem:[#allocation2 + $0x150] sm:$0xff]
      %v703 = vld [vmem:[#allocation2 + $0x158] sm:$0xff]
      %v704 = vld [vmem:[#allocation2 + $0x168] sm:$0xff]
      %v705 = vld [vmem:[#allocation2 + $0x170] sm:$0xff]
      %v706 = vpack.c.bf16 %v675, %v674
      %v707 = vpack.c.bf16 %v677, %v676
      %v708 = vpack.c.bf16 %v679, %v678
      %v709 = vpack.c.bf16 %v681, %v680
      %v710 = vpack.c.bf16 %v683, %v682
      %v711 = vpack.c.bf16 %v685, %v684
      %v712 = vpack.c.bf16 %v687, %v686
      %v713 = vpack.c.bf16 %v689, %v688
      %v714 = vpack.c.bf16 %v691, %v690
      %v715 = vpack.c.bf16 %v693, %v692
      %v716 = vpack.c.bf16 %v695, %v694
      %v717 = vpack.c.bf16 %v697, %v696
      %v718 = vpack.c.bf16 %v699, %v698
      %v719 = vpack.c.bf16 %v701, %v700
      %v720 = vpack.c.bf16 %v703, %v702
      %v721 = vpack.c.bf16 %v705, %v704
      %v738 = vunpack.c.l.b16 %v706
      %v739 = vunpack.c.h.b16 %v706
      %v740 = vunpack.c.l.b16 %v707
      %v741 = vunpack.c.h.b16 %v707
      %v742 = vunpack.c.l.b16 %v708
      %v743 = vunpack.c.h.b16 %v708
      %v744 = vunpack.c.l.b16 %v709
      %v745 = vunpack.c.h.b16 %v709
      %v746 = vunpack.c.l.b16 %v710
      %v747 = vunpack.c.h.b16 %v710
      %v748 = vunpack.c.l.b16 %v711
      %v749 = vunpack.c.h.b16 %v711
      %v750 = vunpack.c.l.b16 %v712
      %v751 = vunpack.c.h.b16 %v712
      %v752 = vunpack.c.l.b16 %v713
      %v753 = vunpack.c.h.b16 %v713
      %v754 = vunpack.c.l.b16 %v714
      %v755 = vunpack.c.h.b16 %v714
      %v756 = vunpack.c.l.b16 %v715
      %v757 = vunpack.c.h.b16 %v715
      %v758 = vunpack.c.l.b16 %v716
      %v759 = vunpack.c.h.b16 %v716
      %v760 = vunpack.c.l.b16 %v717
      %v761 = vunpack.c.h.b16 %v717
      %v762 = vunpack.c.l.b16 %v718
      %v763 = vunpack.c.h.b16 %v718
      %v764 = vunpack.c.l.b16 %v719
      %v765 = vunpack.c.h.b16 %v719
      %v766 = vunpack.c.l.b16 %v720
      %v767 = vunpack.c.h.b16 %v720
      %v768 = vunpack.c.l.b16 %v721
      %v769 = vunpack.c.h.b16 %v721
      %v770 = vpack.c.b16 %v738, %v738
      %v771 = vpack.c.b16 %v739, %v739
      %v772 = vpack.c.b16 %v740, %v740
      %v773 = vpack.c.b16 %v741, %v741
      %v774 = vpack.c.b16 %v742, %v742
      %v775 = vpack.c.b16 %v743, %v743
      %v776 = vpack.c.b16 %v744, %v744
      %v777 = vpack.c.b16 %v745, %v745
      %v778 = vpack.c.b16 %v746, %v746
      %v779 = vpack.c.b16 %v747, %v747
      %v780 = vpack.c.b16 %v748, %v748
      %v781 = vpack.c.b16 %v749, %v749
      %v782 = vpack.c.b16 %v750, %v750
      %v783 = vpack.c.b16 %v751, %v751
      %v784 = vpack.c.b16 %v752, %v752
      %v785 = vpack.c.b16 %v753, %v753
      %v786 = vpack.c.b16 %v754, %v754
      %v787 = vpack.c.b16 %v755, %v755
      %v788 = vpack.c.b16 %v756, %v756
      %v789 = vpack.c.b16 %v757, %v757
      %v790 = vpack.c.b16 %v758, %v758
      %v791 = vpack.c.b16 %v759, %v759
      %v792 = vpack.c.b16 %v760, %v760
      %v793 = vpack.c.b16 %v761, %v761
      %v794 = vpack.c.b16 %v762, %v762
      %v795 = vpack.c.b16 %v763, %v763
      %v796 = vpack.c.b16 %v764, %v764
      %v797 = vpack.c.b16 %v765, %v765
      %v798 = vpack.c.b16 %v766, %v766
      %v799 = vpack.c.b16 %v767, %v767
      %v800 = vpack.c.b16 %v768, %v768
      %v801 = vpack.c.b16 %v769, %v769
      %vm834 = vcmask 27648
      %835 = vst.msk [vmem:[#allocation3] sm:$0xf] %vm834, %v770
      %836 = vst.msk [vmem:[#allocation3 + $0x4] sm:$0xf] %vm834, %v771
      %837 = vst.msk [vmem:[#allocation3 + $0x8] sm:$0xf] %vm834, %v772
      %838 = vst.msk [vmem:[#allocation3 + $0xc] sm:$0xf] %vm834, %v773
      %839 = vst.msk [vmem:[#allocation3 + $0x10] sm:$0xf] %vm834, %v774
      %840 = vst.msk [vmem:[#allocation3 + $0x14] sm:$0xf] %vm834, %v775
      %841 = vst.msk [vmem:[#allocation3 + $0x18] sm:$0xf] %vm834, %v776
      %842 = vst.msk [vmem:[#allocation3 + $0x1c] sm:$0xf] %vm834, %v777
      %843 = vst.msk [vmem:[#allocation3 + $0x20] sm:$0xf] %vm834, %v778
      %844 = vst.msk [vmem:[#allocation3 + $0x24] sm:$0xf] %vm834, %v779
      %845 = vst.msk [vmem:[#allocation3 + $0x28] sm:$0xf] %vm834, %v780
      %846 = vst.msk [vmem:[#allocation3 + $0x2c] sm:$0xf] %vm834, %v781
      %847 = vst.msk [vmem:[#allocation3 + $0x30] sm:$0xf] %vm834, %v782
      %848 = vst.msk [vmem:[#allocation3 + $0x34] sm:$0xf] %vm834, %v783
      %849 = vst.msk [vmem:[#allocation3 + $0x38] sm:$0xf] %vm834, %v784
      %850 = vst.msk [vmem:[#allocation3 + $0x3c] sm:$0xf] %vm834, %v785
      %851 = vst.msk [vmem:[#allocation3 + $0x40] sm:$0xf] %vm834, %v786
      %852 = vst.msk [vmem:[#allocation3 + $0x44] sm:$0xf] %vm834, %v787
      %853 = vst.msk [vmem:[#allocation3 + $0x48] sm:$0xf] %vm834, %v788
      %854 = vst.msk [vmem:[#allocation3 + $0x4c] sm:$0xf] %vm834, %v789
      %855 = vst.msk [vmem:[#allocation3 + $0x50] sm:$0xf] %vm834, %v790
      %856 = vst.msk [vmem:[#allocation3 + $0x54] sm:$0xf] %vm834, %v791
      %857 = vst.msk [vmem:[#allocation3 + $0x58] sm:$0xf] %vm834, %v792
      %858 = vst.msk [vmem:[#allocation3 + $0x5c] sm:$0xf] %vm834, %v793
      %859 = vst.msk [vmem:[#allocation3 + $0x60] sm:$0xf] %vm834, %v794
      %860 = vst.msk [vmem:[#allocation3 + $0x64] sm:$0xf] %vm834, %v795
      %861 = vst.msk [vmem:[#allocation3 + $0x68] sm:$0xf] %vm834, %v796
      %862 = vst.msk [vmem:[#allocation3 + $0x6c] sm:$0xf] %vm834, %v797
      %863 = vst.msk [vmem:[#allocation3 + $0x70] sm:$0xf] %vm834, %v798
      %864 = vst.msk [vmem:[#allocation3 + $0x74] sm:$0xf] %vm834, %v799
      %865 = vst.msk [vmem:[#allocation3 + $0x78] sm:$0xf] %vm834, %v800
      %866 = vst.msk [vmem:[#allocation3 + $0x7c] sm:$0xf] %vm834, %v801
      %v867 = vld [vmem:[#allocation2 + $0x1] sm:$0xff]
      %v868 = vld [vmem:[#allocation2 + $0x9] sm:$0xff]
      %v869 = vld [vmem:[#allocation2 + $0x19] sm:$0xff]
      %v870 = vld [vmem:[#allocation2 + $0x21] sm:$0xff]
      %v871 = vld [vmem:[#allocation2 + $0x31] sm:$0xff]
      %v872 = vld [vmem:[#allocation2 + $0x39] sm:$0xff]
      %v873 = vld [vmem:[#allocation2 + $0x49] sm:$0xff]
      %v874 = vld [vmem:[#allocation2 + $0x51] sm:$0xff]
      %v875 = vld [vmem:[#allocation2 + $0x61] sm:$0xff]
      %v876 = vld [vmem:[#allocation2 + $0x69] sm:$0xff]
      %v877 = vld [vmem:[#allocation2 + $0x79] sm:$0xff]
      %v878 = vld [vmem:[#allocation2 + $0x81] sm:$0xff]
      %v879 = vld [vmem:[#allocation2 + $0x91] sm:$0xff]
      %v880 = vld [vmem:[#allocation2 + $0x99] sm:$0xff]
      %v881 = vld [vmem:[#allocation2 + $0xa9] sm:$0xff]
      %v882 = vld [vmem:[#allocation2 + $0xb1] sm:$0xff]
      %v883 = vld [vmem:[#allocation2 + $0xc1] sm:$0xff]
      %v884 = vld [vmem:[#allocation2 + $0xc9] sm:$0xff]
      %v885 = vld [vmem:[#allocation2 + $0xd9] sm:$0xff]
      %v886 = vld [vmem:[#allocation2 + $0xe1] sm:$0xff]
      %v887 = vld [vmem:[#allocation2 + $0xf1] sm:$0xff]
      %v888 = vld [vmem:[#allocation2 + $0xf9] sm:$0xff]
      %v889 = vld [vmem:[#allocation2 + $0x109] sm:$0xff]
      %v890 = vld [vmem:[#allocation2 + $0x111] sm:$0xff]
      %v891 = vld [vmem:[#allocation2 + $0x121] sm:$0xff]
      %v892 = vld [vmem:[#allocation2 + $0x129] sm:$0xff]
      %v893 = vld [vmem:[#allocation2 + $0x139] sm:$0xff]
      %v894 = vld [vmem:[#allocation2 + $0x141] sm:$0xff]
      %v895 = vld [vmem:[#allocation2 + $0x151] sm:$0xff]
      %v896 = vld [vmem:[#allocation2 + $0x159] sm:$0xff]
      %v897 = vld [vmem:[#allocation2 + $0x169] sm:$0xff]
      %v898 = vld [vmem:[#allocation2 + $0x171] sm:$0xff]
      %v899 = vpack.c.bf16 %v868, %v867
      %v900 = vpack.c.bf16 %v870, %v869
      %v901 = vpack.c.bf16 %v872, %v871
      %v902 = vpack.c.bf16 %v874, %v873
      %v903 = vpack.c.bf16 %v876, %v875
      %v904 = vpack.c.bf16 %v878, %v877
      %v905 = vpack.c.bf16 %v880, %v879
      %v906 = vpack.c.bf16 %v882, %v881
      %v907 = vpack.c.bf16 %v884, %v883
      %v908 = vpack.c.bf16 %v886, %v885
      %v909 = vpack.c.bf16 %v888, %v887
      %v910 = vpack.c.bf16 %v890, %v889
      %v911 = vpack.c.bf16 %v892, %v891
      %v912 = vpack.c.bf16 %v894, %v893
      %v913 = vpack.c.bf16 %v896, %v895
      %v914 = vpack.c.bf16 %v898, %v897
      %v931 = vunpack.c.l.b16 %v899
      %v932 = vunpack.c.h.b16 %v899
      %v933 = vunpack.c.l.b16 %v900
      %v934 = vunpack.c.h.b16 %v900
      %v935 = vunpack.c.l.b16 %v901
      %v936 = vunpack.c.h.b16 %v901
      %v937 = vunpack.c.l.b16 %v902
      %v938 = vunpack.c.h.b16 %v902
      %v939 = vunpack.c.l.b16 %v903
      %v940 = vunpack.c.h.b16 %v903
      %v941 = vunpack.c.l.b16 %v904
      %v942 = vunpack.c.h.b16 %v904
      %v943 = vunpack.c.l.b16 %v905
      %v944 = vunpack.c.h.b16 %v905
      %v945 = vunpack.c.l.b16 %v906
      %v946 = vunpack.c.h.b16 %v906
      %v947 = vunpack.c.l.b16 %v907
      %v948 = vunpack.c.h.b16 %v907
      %v949 = vunpack.c.l.b16 %v908
      %v950 = vunpack.c.h.b16 %v908
      %v951 = vunpack.c.l.b16 %v909
      %v952 = vunpack.c.h.b16 %v909
      %v953 = vunpack.c.l.b16 %v910
      %v954 = vunpack.c.h.b16 %v910
      %v955 = vunpack.c.l.b16 %v911
      %v956 = vunpack.c.h.b16 %v911
      %v957 = vunpack.c.l.b16 %v912
      %v958 = vunpack.c.h.b16 %v912
      %v959 = vunpack.c.l.b16 %v913
      %v960 = vunpack.c.h.b16 %v913
      %v961 = vunpack.c.l.b16 %v914
      %v962 = vunpack.c.h.b16 %v914
      %v963 = vpack.c.b16 %v931, %v931
      %v964 = vpack.c.b16 %v932, %v932
      %v965 = vpack.c.b16 %v933, %v933
      %v966 = vpack.c.b16 %v934, %v934
      %v967 = vpack.c.b16 %v935, %v935
      %v968 = vpack.c.b16 %v936, %v936
      %v969 = vpack.c.b16 %v937, %v937
      %v970 = vpack.c.b16 %v938, %v938
      %v971 = vpack.c.b16 %v939, %v939
      %v972 = vpack.c.b16 %v940, %v940
      %v973 = vpack.c.b16 %v941, %v941
      %v974 = vpack.c.b16 %v942, %v942
      %v975 = vpack.c.b16 %v943, %v943
      %v976 = vpack.c.b16 %v944, %v944
      %v977 = vpack.c.b16 %v945, %v945
      %v978 = vpack.c.b16 %v946, %v946
      %v979 = vpack.c.b16 %v947, %v947
      %v980 = vpack.c.b16 %v948, %v948
      %v981 = vpack.c.b16 %v949, %v949
      %v982 = vpack.c.b16 %v950, %v950
      %v983 = vpack.c.b16 %v951, %v951
      %v984 = vpack.c.b16 %v952, %v952
      %v985 = vpack.c.b16 %v953, %v953
      %v986 = vpack.c.b16 %v954, %v954
      %v987 = vpack.c.b16 %v955, %v955
      %v988 = vpack.c.b16 %v956, %v956
      %v989 = vpack.c.b16 %v957, %v957
      %v990 = vpack.c.b16 %v958, %v958
      %v991 = vpack.c.b16 %v959, %v959
      %v992 = vpack.c.b16 %v960, %v960
      %v993 = vpack.c.b16 %v961, %v961
      %v994 = vpack.c.b16 %v962, %v962
      %995 = vrot.lane.b32.xlu0 %v963, 4
      %v996 = vpop.permute.xlu0 %995
      %997 = vrot.lane.b32.xlu0 %v964, 4
      %v998 = vpop.permute.xlu0 %997
      %999 = vrot.lane.b32.xlu0 %v965, 4
      %v1000 = vpop.permute.xlu0 %999
      %1001 = vrot.lane.b32.xlu0 %v966, 4
      %v1002 = vpop.permute.xlu0 %1001
      %1003 = vrot.lane.b32.xlu0 %v967, 4
      %v1004 = vpop.permute.xlu0 %1003
      %1005 = vrot.lane.b32.xlu0 %v968, 4
      %v1006 = vpop.permute.xlu0 %1005
      %1007 = vrot.lane.b32.xlu0 %v969, 4
      %v1008 = vpop.permute.xlu0 %1007
      %1009 = vrot.lane.b32.xlu0 %v970, 4
      %v1010 = vpop.permute.xlu0 %1009
      %1011 = vrot.lane.b32.xlu0 %v971, 4
      %v1012 = vpop.permute.xlu0 %1011
      %1013 = vrot.lane.b32.xlu0 %v972, 4
      %v1014 = vpop.permute.xlu0 %1013
      %1015 = vrot.lane.b32.xlu0 %v973, 4
      %v1016 = vpop.permute.xlu0 %1015
      %1017 = vrot.lane.b32.xlu0 %v974, 4
      %v1018 = vpop.permute.xlu0 %1017
      %1019 = vrot.lane.b32.xlu0 %v975, 4
      %v1020 = vpop.permute.xlu0 %1019
      %1021 = vrot.lane.b32.xlu0 %v976, 4
      %v1022 = vpop.permute.xlu0 %1021
      %1023 = vrot.lane.b32.xlu0 %v977, 4
      %v1024 = vpop.permute.xlu0 %1023
      %1025 = vrot.lane.b32.xlu0 %v978, 4
      %v1026 = vpop.permute.xlu0 %1025
      %1027 = vrot.lane.b32.xlu0 %v979, 4
      %v1028 = vpop.permute.xlu0 %1027
      %1029 = vrot.lane.b32.xlu0 %v980, 4
      %v1030 = vpop.permute.xlu0 %1029
      %1031 = vrot.lane.b32.xlu0 %v981, 4
      %v1032 = vpop.permute.xlu0 %1031
      %1033 = vrot.lane.b32.xlu0 %v982, 4
      %v1034 = vpop.permute.xlu0 %1033
      %1035 = vrot.lane.b32.xlu0 %v983, 4
      %v1036 = vpop.permute.xlu0 %1035
      %1037 = vrot.lane.b32.xlu0 %v984, 4
      %v1038 = vpop.permute.xlu0 %1037
      %1039 = vrot.lane.b32.xlu0 %v985, 4
      %v1040 = vpop.permute.xlu0 %1039
      %1041 = vrot.lane.b32.xlu0 %v986, 4
      %v1042 = vpop.permute.xlu0 %1041
      %1043 = vrot.lane.b32.xlu0 %v987, 4
      %v1044 = vpop.permute.xlu0 %1043
      %1045 = vrot.lane.b32.xlu0 %v988, 4
      %v1046 = vpop.permute.xlu0 %1045
      %1047 = vrot.lane.b32.xlu0 %v989, 4
      %v1048 = vpop.permute.xlu0 %1047
      %1049 = vrot.lane.b32.xlu0 %v990, 4
      %v1050 = vpop.permute.xlu0 %1049
      %1051 = vrot.lane.b32.xlu0 %v991, 4
      %v1052 = vpop.permute.xlu0 %1051
      %1053 = vrot.lane.b32.xlu0 %v992, 4
      %v1054 = vpop.permute.xlu0 %1053
      %1055 = vrot.lane.b32.xlu0 %v993, 4
      %v1056 = vpop.permute.xlu0 %1055
      %1057 = vrot.lane.b32.xlu0 %v994, 4
      %v1058 = vpop.permute.xlu0 %1057
      %vm1091 = vcmask 60448
      %1092 = vst.msk [vmem:[#allocation3] sm:$0xf] %vm1091, %v996
      %1093 = vst.msk [vmem:[#allocation3 + $0x4] sm:$0xf] %vm1091, %v998
      %1094 = vst.msk [vmem:[#allocation3 + $0x8] sm:$0xf] %vm1091, %v1000
      %1095 = vst.msk [vmem:[#allocation3 + $0xc] sm:$0xf] %vm1091, %v1002
      %1096 = vst.msk [vmem:[#allocation3 + $0x10] sm:$0xf] %vm1091, %v1004
      %1097 = vst.msk [vmem:[#allocation3 + $0x14] sm:$0xf] %vm1091, %v1006
      %1098 = vst.msk [vmem:[#allocation3 + $0x18] sm:$0xf] %vm1091, %v1008
      %1099 = vst.msk [vmem:[#allocation3 + $0x1c] sm:$0xf] %vm1091, %v1010
      %1100 = vst.msk [vmem:[#allocation3 + $0x20] sm:$0xf] %vm1091, %v1012
      %1101 = vst.msk [vmem:[#allocation3 + $0x24] sm:$0xf] %vm1091, %v1014
      %1102 = vst.msk [vmem:[#allocation3 + $0x28] sm:$0xf] %vm1091, %v1016
      %1103 = vst.msk [vmem:[#allocation3 + $0x2c] sm:$0xf] %vm1091, %v1018
      %1104 = vst.msk [vmem:[#allocation3 + $0x30] sm:$0xf] %vm1091, %v1020
      %1105 = vst.msk [vmem:[#allocation3 + $0x34] sm:$0xf] %vm1091, %v1022
      %1106 = vst.msk [vmem:[#allocation3 + $0x38] sm:$0xf] %vm1091, %v1024
      %1107 = vst.msk [vmem:[#allocation3 + $0x3c] sm:$0xf] %vm1091, %v1026
      %1108 = vst.msk [vmem:[#allocation3 + $0x40] sm:$0xf] %vm1091, %v1028
      %1109 = vst.msk [vmem:[#allocation3 + $0x44] sm:$0xf] %vm1091, %v1030
      %1110 = vst.msk [vmem:[#allocation3 + $0x48] sm:$0xf] %vm1091, %v1032
      %1111 = vst.msk [vmem:[#allocation3 + $0x4c] sm:$0xf] %vm1091, %v1034
      %1112 = vst.msk [vmem:[#allocation3 + $0x50] sm:$0xf] %vm1091, %v1036
      %1113 = vst.msk [vmem:[#allocation3 + $0x54] sm:$0xf] %vm1091, %v1038
      %1114 = vst.msk [vmem:[#allocation3 + $0x58] sm:$0xf] %vm1091, %v1040
      %1115 = vst.msk [vmem:[#allocation3 + $0x5c] sm:$0xf] %vm1091, %v1042
      %1116 = vst.msk [vmem:[#allocation3 + $0x60] sm:$0xf] %vm1091, %v1044
      %1117 = vst.msk [vmem:[#allocation3 + $0x64] sm:$0xf] %vm1091, %v1046
      %1118 = vst.msk [vmem:[#allocation3 + $0x68] sm:$0xf] %vm1091, %v1048
      %1119 = vst.msk [vmem:[#allocation3 + $0x6c] sm:$0xf] %vm1091, %v1050
      %1120 = vst.msk [vmem:[#allocation3 + $0x70] sm:$0xf] %vm1091, %v1052
      %1121 = vst.msk [vmem:[#allocation3 + $0x74] sm:$0xf] %vm1091, %v1054
      %1122 = vst.msk [vmem:[#allocation3 + $0x78] sm:$0xf] %vm1091, %v1056
      %1123 = vst.msk [vmem:[#allocation3 + $0x7c] sm:$0xf] %vm1091, %v1058
      %v1124 = vld [vmem:[#allocation2 + $0x2] sm:$0xff]
      %v1125 = vld [vmem:[#allocation2 + $0xa] sm:$0xff]
      %v1126 = vld [vmem:[#allocation2 + $0x1a] sm:$0xff]
      %v1127 = vld [vmem:[#allocation2 + $0x22] sm:$0xff]
      %v1128 = vld [vmem:[#allocation2 + $0x32] sm:$0xff]
      %v1129 = vld [vmem:[#allocation2 + $0x3a] sm:$0xff]
      %v1130 = vld [vmem:[#allocation2 + $0x4a] sm:$0xff]
      %v1131 = vld [vmem:[#allocation2 + $0x52] sm:$0xff]
      %v1132 = vld [vmem:[#allocation2 + $0x62] sm:$0xff]
      %v1133 = vld [vmem:[#allocation2 + $0x6a] sm:$0xff]
      %v1134 = vld [vmem:[#allocation2 + $0x7a] sm:$0xff]
      %v1135 = vld [vmem:[#allocation2 + $0x82] sm:$0xff]
      %v1136 = vld [vmem:[#allocation2 + $0x92] sm:$0xff]
      %v1137 = vld [vmem:[#allocation2 + $0x9a] sm:$0xff]
      %v1138 = vld [vmem:[#allocation2 + $0xaa] sm:$0xff]
      %v1139 = vld [vmem:[#allocation2 + $0xb2] sm:$0xff]
      %v1140 = vld [vmem:[#allocation2 + $0xc2] sm:$0xff]
      %v1141 = vld [vmem:[#allocation2 + $0xca] sm:$0xff]
      %v1142 = vld [vmem:[#allocation2 + $0xda] sm:$0xff]
      %v1143 = vld [vmem:[#allocation2 + $0xe2] sm:$0xff]
      %v1144 = vld [vmem:[#allocation2 + $0xf2] sm:$0xff]
      %v1145 = vld [vmem:[#allocation2 + $0xfa] sm:$0xff]
      %v1146 = vld [vmem:[#allocation2 + $0x10a] sm:$0xff]
      %v1147 = vld [vmem:[#allocation2 + $0x112] sm:$0xff]
      %v1148 = vld [vmem:[#allocation2 + $0x122] sm:$0xff]
      %v1149 = vld [vmem:[#allocation2 + $0x12a] sm:$0xff]
      %v1150 = vld [vmem:[#allocation2 + $0x13a] sm:$0xff]
      %v1151 = vld [vmem:[#allocation2 + $0x142] sm:$0xff]
      %v1152 = vld [vmem:[#allocation2 + $0x152] sm:$0xff]
      %v1153 = vld [vmem:[#allocation2 + $0x15a] sm:$0xff]
      %v1154 = vld [vmem:[#allocation2 + $0x16a] sm:$0xff]
      %v1155 = vld [vmem:[#allocation2 + $0x172] sm:$0xff]
      %v1156 = vpack.c.bf16 %v1125, %v1124
      %v1157 = vpack.c.bf16 %v1127, %v1126
      %v1158 = vpack.c.bf16 %v1129, %v1128
      %v1159 = vpack.c.bf16 %v1131, %v1130
      %v1160 = vpack.c.bf16 %v1133, %v1132
      %v1161 = vpack.c.bf16 %v1135, %v1134
      %v1162 = vpack.c.bf16 %v1137, %v1136
      %v1163 = vpack.c.bf16 %v1139, %v1138
      %v1164 = vpack.c.bf16 %v1141, %v1140
      %v1165 = vpack.c.bf16 %v1143, %v1142
      %v1166 = vpack.c.bf16 %v1145, %v1144
      %v1167 = vpack.c.bf16 %v1147, %v1146
      %v1168 = vpack.c.bf16 %v1149, %v1148
      %v1169 = vpack.c.bf16 %v1151, %v1150
      %v1170 = vpack.c.bf16 %v1153, %v1152
      %v1171 = vpack.c.bf16 %v1155, %v1154
      %v1188 = vunpack.c.l.b16 %v1156
      %v1189 = vunpack.c.h.b16 %v1156
      %v1190 = vunpack.c.l.b16 %v1157
      %v1191 = vunpack.c.h.b16 %v1157
      %v1192 = vunpack.c.l.b16 %v1158
      %v1193 = vunpack.c.h.b16 %v1158
      %v1194 = vunpack.c.l.b16 %v1159
      %v1195 = vunpack.c.h.b16 %v1159
      %v1196 = vunpack.c.l.b16 %v1160
      %v1197 = vunpack.c.h.b16 %v1160
      %v1198 = vunpack.c.l.b16 %v1161
      %v1199 = vunpack.c.h.b16 %v1161
      %v1200 = vunpack.c.l.b16 %v1162
      %v1201 = vunpack.c.h.b16 %v1162
      %v1202 = vunpack.c.l.b16 %v1163
      %v1203 = vunpack.c.h.b16 %v1163
      %v1204 = vunpack.c.l.b16 %v1164
      %v1205 = vunpack.c.h.b16 %v1164
      %v1206 = vunpack.c.l.b16 %v1165
      %v1207 = vunpack.c.h.b16 %v1165
      %v1208 = vunpack.c.l.b16 %v1166
      %v1209 = vunpack.c.h.b16 %v1166
      %v1210 = vunpack.c.l.b16 %v1167
      %v1211 = vunpack.c.h.b16 %v1167
      %v1212 = vunpack.c.l.b16 %v1168
      %v1213 = vunpack.c.h.b16 %v1168
      %v1214 = vunpack.c.l.b16 %v1169
      %v1215 = vunpack.c.h.b16 %v1169
      %v1216 = vunpack.c.l.b16 %v1170
      %v1217 = vunpack.c.h.b16 %v1170
      %v1218 = vunpack.c.l.b16 %v1171
      %v1219 = vunpack.c.h.b16 %v1171
      %v1220 = vpack.c.b16 %v1188, %v1188
      %v1221 = vpack.c.b16 %v1189, %v1189
      %v1222 = vpack.c.b16 %v1190, %v1190
      %v1223 = vpack.c.b16 %v1191, %v1191
      %v1224 = vpack.c.b16 %v1192, %v1192
      %v1225 = vpack.c.b16 %v1193, %v1193
      %v1226 = vpack.c.b16 %v1194, %v1194
      %v1227 = vpack.c.b16 %v1195, %v1195
      %v1228 = vpack.c.b16 %v1196, %v1196
      %v1229 = vpack.c.b16 %v1197, %v1197
      %v1230 = vpack.c.b16 %v1198, %v1198
      %v1231 = vpack.c.b16 %v1199, %v1199
      %v1232 = vpack.c.b16 %v1200, %v1200
      %v1233 = vpack.c.b16 %v1201, %v1201
      %v1234 = vpack.c.b16 %v1202, %v1202
      %v1235 = vpack.c.b16 %v1203, %v1203
      %v1236 = vpack.c.b16 %v1204, %v1204
      %v1237 = vpack.c.b16 %v1205, %v1205
      %v1238 = vpack.c.b16 %v1206, %v1206
      %v1239 = vpack.c.b16 %v1207, %v1207
      %v1240 = vpack.c.b16 %v1208, %v1208
      %v1241 = vpack.c.b16 %v1209, %v1209
      %v1242 = vpack.c.b16 %v1210, %v1210
      %v1243 = vpack.c.b16 %v1211, %v1211
      %v1244 = vpack.c.b16 %v1212, %v1212
      %v1245 = vpack.c.b16 %v1213, %v1213
      %v1246 = vpack.c.b16 %v1214, %v1214
      %v1247 = vpack.c.b16 %v1215, %v1215
      %v1248 = vpack.c.b16 %v1216, %v1216
      %v1249 = vpack.c.b16 %v1217, %v1217
      %v1250 = vpack.c.b16 %v1218, %v1218
      %v1251 = vpack.c.b16 %v1219, %v1219
      %1252 = vrot.lane.b32.xlu0 %v1220, 8
      %v1253 = vpop.permute.xlu0 %1252
      %1254 = vrot.lane.b32.xlu0 %v1221, 8
      %v1255 = vpop.permute.xlu0 %1254
      %1256 = vrot.lane.b32.xlu0 %v1222, 8
      %v1257 = vpop.permute.xlu0 %1256
      %1258 = vrot.lane.b32.xlu0 %v1223, 8
      %v1259 = vpop.permute.xlu0 %1258
      %1260 = vrot.lane.b32.xlu0 %v1224, 8
      %v1261 = vpop.permute.xlu0 %1260
      %1262 = vrot.lane.b32.xlu0 %v1225, 8
      %v1263 = vpop.permute.xlu0 %1262
      %1264 = vrot.lane.b32.xlu0 %v1226, 8
      %v1265 = vpop.permute.xlu0 %1264
      %1266 = vrot.lane.b32.xlu0 %v1227, 8
      %v1267 = vpop.permute.xlu0 %1266
      %1268 = vrot.lane.b32.xlu0 %v1228, 8
      %v1269 = vpop.permute.xlu0 %1268
      %1270 = vrot.lane.b32.xlu0 %v1229, 8
      %v1271 = vpop.permute.xlu0 %1270
      %1272 = vrot.lane.b32.xlu0 %v1230, 8
      %v1273 = vpop.permute.xlu0 %1272
      %1274 = vrot.lane.b32.xlu0 %v1231, 8
      %v1275 = vpop.permute.xlu0 %1274
      %1276 = vrot.lane.b32.xlu0 %v1232, 8
      %v1277 = vpop.permute.xlu0 %1276
      %1278 = vrot.lane.b32.xlu0 %v1233, 8
      %v1279 = vpop.permute.xlu0 %1278
      %1280 = vrot.lane.b32.xlu0 %v1234, 8
      %v1281 = vpop.permute.xlu0 %1280
      %1282 = vrot.lane.b32.xlu0 %v1235, 8
      %v1283 = vpop.permute.xlu0 %1282
      %1284 = vrot.lane.b32.xlu0 %v1236, 8
      %v1285 = vpop.permute.xlu0 %1284
      %1286 = vrot.lane.b32.xlu0 %v1237, 8
      %v1287 = vpop.permute.xlu0 %1286
      %1288 = vrot.lane.b32.xlu0 %v1238, 8
      %v1289 = vpop.permute.xlu0 %1288
      %1290 = vrot.lane.b32.xlu0 %v1239, 8
      %v1291 = vpop.permute.xlu0 %1290
      %1292 = vrot.lane.b32.xlu0 %v1240, 8
      %v1293 = vpop.permute.xlu0 %1292
      %1294 = vrot.lane.b32.xlu0 %v1241, 8
      %v1295 = vpop.permute.xlu0 %1294
      %1296 = vrot.lane.b32.xlu0 %v1242, 8
      %v1297 = vpop.permute.xlu0 %1296
      %1298 = vrot.lane.b32.xlu0 %v1243, 8
      %v1299 = vpop.permute.xlu0 %1298
      %1300 = vrot.lane.b32.xlu0 %v1244, 8
      %v1301 = vpop.permute.xlu0 %1300
      %1302 = vrot.lane.b32.xlu0 %v1245, 8
      %v1303 = vpop.permute.xlu0 %1302
      %1304 = vrot.lane.b32.xlu0 %v1246, 8
      %v1305 = vpop.permute.xlu0 %1304
      %1306 = vrot.lane.b32.xlu0 %v1247, 8
      %v1307 = vpop.permute.xlu0 %1306
      %1308 = vrot.lane.b32.xlu0 %v1248, 8
      %v1309 = vpop.permute.xlu0 %1308
      %1310 = vrot.lane.b32.xlu0 %v1249, 8
      %v1311 = vpop.permute.xlu0 %1310
      %1312 = vrot.lane.b32.xlu0 %v1250, 8
      %v1313 = vpop.permute.xlu0 %1312
      %1314 = vrot.lane.b32.xlu0 %v1251, 8
      %v1315 = vpop.permute.xlu0 %1314
      %vm1348 = vcmask 93248
      %1349 = vst.msk [vmem:[#allocation3] sm:$0xf] %vm1348, %v1253
      %1350 = vst.msk [vmem:[#allocation3 + $0x4] sm:$0xf] %vm1348, %v1255
      %1351 = vst.msk [vmem:[#allocation3 + $0x8] sm:$0xf] %vm1348, %v1257
      %1352 = vst.msk [vmem:[#allocation3 + $0xc] sm:$0xf] %vm1348, %v1259
      %1353 = vst.msk [vmem:[#allocation3 + $0x10] sm:$0xf] %vm1348, %v1261
      %1354 = vst.msk [vmem:[#allocation3 + $0x14] sm:$0xf] %vm1348, %v1263
      %1355 = vst.msk [vmem:[#allocation3 + $0x18] sm:$0xf] %vm1348, %v1265
      %1356 = vst.msk [vmem:[#allocation3 + $0x1c] sm:$0xf] %vm1348, %v1267
      %1357 = vst.msk [vmem:[#allocation3 + $0x20] sm:$0xf] %vm1348, %v1269
      %1358 = vst.msk [vmem:[#allocation3 + $0x24] sm:$0xf] %vm1348, %v1271
      %1359 = vst.msk [vmem:[#allocation3 + $0x28] sm:$0xf] %vm1348, %v1273
      %1360 = vst.msk [vmem:[#allocation3 + $0x2c] sm:$0xf] %vm1348, %v1275
      %1361 = vst.msk [vmem:[#allocation3 + $0x30] sm:$0xf] %vm1348, %v1277
      %1362 = vst.msk [vmem:[#allocation3 + $0x34] sm:$0xf] %vm1348, %v1279
      %1363 = vst.msk [vmem:[#allocation3 + $0x38] sm:$0xf] %vm1348, %v1281
      %1364 = vst.msk [vmem:[#allocation3 + $0x3c] sm:$0xf] %vm1348, %v1283
      %1365 = vst.msk [vmem:[#allocation3 + $0x40] sm:$0xf] %vm1348, %v1285
      %1366 = vst.msk [vmem:[#allocation3 + $0x44] sm:$0xf] %vm1348, %v1287
      %1367 = vst.msk [vmem:[#allocation3 + $0x48] sm:$0xf] %vm1348, %v1289
      %1368 = vst.msk [vmem:[#allocation3 + $0x4c] sm:$0xf] %vm1348, %v1291
      %1369 = vst.msk [vmem:[#allocation3 + $0x50] sm:$0xf] %vm1348, %v1293
      %1370 = vst.msk [vmem:[#allocation3 + $0x54] sm:$0xf] %vm1348, %v1295
      %1371 = vst.msk [vmem:[#allocation3 + $0x58] sm:$0xf] %vm1348, %v1297
      %1372 = vst.msk [vmem:[#allocation3 + $0x5c] sm:$0xf] %vm1348, %v1299
      %1373 = vst.msk [vmem:[#allocation3 + $0x60] sm:$0xf] %vm1348, %v1301
      %1374 = vst.msk [vmem:[#allocation3 + $0x64] sm:$0xf] %vm1348, %v1303
      %1375 = vst.msk [vmem:[#allocation3 + $0x68] sm:$0xf] %vm1348, %v1305
      %1376 = vst.msk [vmem:[#allocation3 + $0x6c] sm:$0xf] %vm1348, %v1307
      %1377 = vst.msk [vmem:[#allocation3 + $0x70] sm:$0xf] %vm1348, %v1309
      %1378 = vst.msk [vmem:[#allocation3 + $0x74] sm:$0xf] %vm1348, %v1311
      %1379 = vst.msk [vmem:[#allocation3 + $0x78] sm:$0xf] %vm1348, %v1313
      %1380 = vst.msk [vmem:[#allocation3 + $0x7c] sm:$0xf] %vm1348, %v1315
      %v1381 = vld [vmem:[%s641] sm:$0xff]
      %v1382 = vld [vmem:[%s641 + $0x8] sm:$0xff]
      %v1383 = vld [vmem:[%s641 + $0x18] sm:$0xff]
      %v1384 = vld [vmem:[%s641 + $0x20] sm:$0xff]
      %v1385 = vld [vmem:[%s641 + $0x30] sm:$0xff]
      %v1386 = vld [vmem:[%s641 + $0x38] sm:$0xff]
      %v1387 = vld [vmem:[%s641 + $0x48] sm:$0xff]
      %v1388 = vld [vmem:[%s641 + $0x50] sm:$0xff]
      %v1389 = vld [vmem:[%s641 + $0x60] sm:$0xff]
      %v1390 = vld [vmem:[%s641 + $0x68] sm:$0xff]
      %v1391 = vld [vmem:[%s641 + $0x78] sm:$0xff]
      %v1392 = vld [vmem:[%s641 + $0x80] sm:$0xff]
      %v1393 = vld [vmem:[%s641 + $0x90] sm:$0xff]
      %v1394 = vld [vmem:[%s641 + $0x98] sm:$0xff]
      %v1395 = vld [vmem:[%s641 + $0xa8] sm:$0xff]
      %v1396 = vld [vmem:[%s641 + $0xb0] sm:$0xff]
      %v1397 = vld [vmem:[%s641 + $0xc0] sm:$0xff]
      %v1398 = vld [vmem:[%s641 + $0xc8] sm:$0xff]
      %v1399 = vld [vmem:[%s641 + $0xd8] sm:$0xff]
      %v1400 = vld [vmem:[%s641 + $0xe0] sm:$0xff]
      %v1401 = vld [vmem:[%s641 + $0xf0] sm:$0xff]
      %v1402 = vld [vmem:[%s641 + $0xf8] sm:$0xff]
      %v1403 = vld [vmem:[%s641 + $0x108] sm:$0xff]
      %v1404 = vld [vmem:[%s641 + $0x110] sm:$0xff]
      %v1405 = vld [vmem:[%s641 + $0x120] sm:$0xff]
      %v1406 = vld [vmem:[%s641 + $0x128] sm:$0xff]
      %v1407 = vld [vmem:[%s641 + $0x138] sm:$0xff]
      %v1408 = vld [vmem:[%s641 + $0x140] sm:$0xff]
      %v1409 = vld [vmem:[%s641 + $0x150] sm:$0xff]
      %v1410 = vld [vmem:[%s641 + $0x158] sm:$0xff]
      %v1411 = vld [vmem:[%s641 + $0x168] sm:$0xff]
      %v1412 = vld [vmem:[%s641 + $0x170] sm:$0xff]
      %v1413 = vpack.c.bf16 %v1382, %v1381
      %v1414 = vpack.c.bf16 %v1384, %v1383
      %v1415 = vpack.c.bf16 %v1386, %v1385
      %v1416 = vpack.c.bf16 %v1388, %v1387
      %v1417 = vpack.c.bf16 %v1390, %v1389
      %v1418 = vpack.c.bf16 %v1392, %v1391
      %v1419 = vpack.c.bf16 %v1394, %v1393
      %v1420 = vpack.c.bf16 %v1396, %v1395
      %v1421 = vpack.c.bf16 %v1398, %v1397
      %v1422 = vpack.c.bf16 %v1400, %v1399
      %v1423 = vpack.c.bf16 %v1402, %v1401
      %v1424 = vpack.c.bf16 %v1404, %v1403
      %v1425 = vpack.c.bf16 %v1406, %v1405
      %v1426 = vpack.c.bf16 %v1408, %v1407
      %v1427 = vpack.c.bf16 %v1410, %v1409
      %v1428 = vpack.c.bf16 %v1412, %v1411
      %v1445 = vunpack.c.l.b16 %v1413
      %v1446 = vunpack.c.h.b16 %v1413
      %v1447 = vunpack.c.l.b16 %v1414
      %v1448 = vunpack.c.h.b16 %v1414
      %v1449 = vunpack.c.l.b16 %v1415
      %v1450 = vunpack.c.h.b16 %v1415
      %v1451 = vunpack.c.l.b16 %v1416
      %v1452 = vunpack.c.h.b16 %v1416
      %v1453 = vunpack.c.l.b16 %v1417
      %v1454 = vunpack.c.h.b16 %v1417
      %v1455 = vunpack.c.l.b16 %v1418
      %v1456 = vunpack.c.h.b16 %v1418
      %v1457 = vunpack.c.l.b16 %v1419
      %v1458 = vunpack.c.h.b16 %v1419
      %v1459 = vunpack.c.l.b16 %v1420
      %v1460 = vunpack.c.h.b16 %v1420
      %v1461 = vunpack.c.l.b16 %v1421
      %v1462 = vunpack.c.h.b16 %v1421
      %v1463 = vunpack.c.l.b16 %v1422
      %v1464 = vunpack.c.h.b16 %v1422
      %v1465 = vunpack.c.l.b16 %v1423
      %v1466 = vunpack.c.h.b16 %v1423
      %v1467 = vunpack.c.l.b16 %v1424
      %v1468 = vunpack.c.h.b16 %v1424
      %v1469 = vunpack.c.l.b16 %v1425
      %v1470 = vunpack.c.h.b16 %v1425
      %v1471 = vunpack.c.l.b16 %v1426
      %v1472 = vunpack.c.h.b16 %v1426
      %v1473 = vunpack.c.l.b16 %v1427
      %v1474 = vunpack.c.h.b16 %v1427
      %v1475 = vunpack.c.l.b16 %v1428
      %v1476 = vunpack.c.h.b16 %v1428
      %v1477 = vpack.c.b16 %v1445, %v1445
      %v1478 = vpack.c.b16 %v1446, %v1446
      %v1479 = vpack.c.b16 %v1447, %v1447
      %v1480 = vpack.c.b16 %v1448, %v1448
      %v1481 = vpack.c.b16 %v1449, %v1449
      %v1482 = vpack.c.b16 %v1450, %v1450
      %v1483 = vpack.c.b16 %v1451, %v1451
      %v1484 = vpack.c.b16 %v1452, %v1452
      %v1485 = vpack.c.b16 %v1453, %v1453
      %v1486 = vpack.c.b16 %v1454, %v1454
      %v1487 = vpack.c.b16 %v1455, %v1455
      %v1488 = vpack.c.b16 %v1456, %v1456
      %v1489 = vpack.c.b16 %v1457, %v1457
      %v1490 = vpack.c.b16 %v1458, %v1458
      %v1491 = vpack.c.b16 %v1459, %v1459
      %v1492 = vpack.c.b16 %v1460, %v1460
      %v1493 = vpack.c.b16 %v1461, %v1461
      %v1494 = vpack.c.b16 %v1462, %v1462
      %v1495 = vpack.c.b16 %v1463, %v1463
      %v1496 = vpack.c.b16 %v1464, %v1464
      %v1497 = vpack.c.b16 %v1465, %v1465
      %v1498 = vpack.c.b16 %v1466, %v1466
      %v1499 = vpack.c.b16 %v1467, %v1467
      %v1500 = vpack.c.b16 %v1468, %v1468
      %v1501 = vpack.c.b16 %v1469, %v1469
      %v1502 = vpack.c.b16 %v1470, %v1470
      %v1503 = vpack.c.b16 %v1471, %v1471
      %v1504 = vpack.c.b16 %v1472, %v1472
      %v1505 = vpack.c.b16 %v1473, %v1473
      %v1506 = vpack.c.b16 %v1474, %v1474
      %v1507 = vpack.c.b16 %v1475, %v1475
      %v1508 = vpack.c.b16 %v1476, %v1476
      %1509 = vrot.lane.b32.xlu0 %v1477, 12
      %v1510 = vpop.permute.xlu0 %1509
      %1511 = vrot.lane.b32.xlu0 %v1478, 12
      %v1512 = vpop.permute.xlu0 %1511
      %1513 = vrot.lane.b32.xlu0 %v1479, 12
      %v1514 = vpop.permute.xlu0 %1513
      %1515 = vrot.lane.b32.xlu0 %v1480, 12
      %v1516 = vpop.permute.xlu0 %1515
      %1517 = vrot.lane.b32.xlu0 %v1481, 12
      %v1518 = vpop.permute.xlu0 %1517
      %1519 = vrot.lane.b32.xlu0 %v1482, 12
      %v1520 = vpop.permute.xlu0 %1519
      %1521 = vrot.lane.b32.xlu0 %v1483, 12
      %v1522 = vpop.permute.xlu0 %1521
      %1523 = vrot.lane.b32.xlu0 %v1484, 12
      %v1524 = vpop.permute.xlu0 %1523
      %1525 = vrot.lane.b32.xlu0 %v1485, 12
      %v1526 = vpop.permute.xlu0 %1525
      %1527 = vrot.lane.b32.xlu0 %v1486, 12
      %v1528 = vpop.permute.xlu0 %1527
      %1529 = vrot.lane.b32.xlu0 %v1487, 12
      %v1530 = vpop.permute.xlu0 %1529
      %1531 = vrot.lane.b32.xlu0 %v1488, 12
      %v1532 = vpop.permute.xlu0 %1531
      %1533 = vrot.lane.b32.xlu0 %v1489, 12
      %v1534 = vpop.permute.xlu0 %1533
      %1535 = vrot.lane.b32.xlu0 %v1490, 12
      %v1536 = vpop.permute.xlu0 %1535
      %1537 = vrot.lane.b32.xlu0 %v1491, 12
      %v1538 = vpop.permute.xlu0 %1537
      %1539 = vrot.lane.b32.xlu0 %v1492, 12
      %v1540 = vpop.permute.xlu0 %1539
      %1541 = vrot.lane.b32.xlu0 %v1493, 12
      %v1542 = vpop.permute.xlu0 %1541
      %1543 = vrot.lane.b32.xlu0 %v1494, 12
      %v1544 = vpop.permute.xlu0 %1543
      %1545 = vrot.lane.b32.xlu0 %v1495, 12
      %v1546 = vpop.permute.xlu0 %1545
      %1547 = vrot.lane.b32.xlu0 %v1496, 12
      %v1548 = vpop.permute.xlu0 %1547
      %1549 = vrot.lane.b32.xlu0 %v1497, 12
      %v1550 = vpop.permute.xlu0 %1549
      %1551 = vrot.lane.b32.xlu0 %v1498, 12
      %v1552 = vpop.permute.xlu0 %1551
      %1553 = vrot.lane.b32.xlu0 %v1499, 12
      %v1554 = vpop.permute.xlu0 %1553
      %1555 = vrot.lane.b32.xlu0 %v1500, 12
      %v1556 = vpop.permute.xlu0 %1555
      %1557 = vrot.lane.b32.xlu0 %v1501, 12
      %v1558 = vpop.permute.xlu0 %1557
      %1559 = vrot.lane.b32.xlu0 %v1502, 12
      %v1560 = vpop.permute.xlu0 %1559
      %1561 = vrot.lane.b32.xlu0 %v1503, 12
      %v1562 = vpop.permute.xlu0 %1561
      %1563 = vrot.lane.b32.xlu0 %v1504, 12
      %v1564 = vpop.permute.xlu0 %1563
      %1565 = vrot.lane.b32.xlu0 %v1505, 12
      %v1566 = vpop.permute.xlu0 %1565
      %1567 = vrot.lane.b32.xlu0 %v1506, 12
      %v1568 = vpop.permute.xlu0 %1567
      %1569 = vrot.lane.b32.xlu0 %v1507, 12
      %v1570 = vpop.permute.xlu0 %1569
      %1571 = vrot.lane.b32.xlu0 %v1508, 12
      %v1572 = vpop.permute.xlu0 %1571
      %vm1605 = vcmask 126048
      %1606 = vst.msk [vmem:[#allocation3] sm:$0xf] %vm1605, %v1510
      %1607 = vst.msk [vmem:[#allocation3 + $0x4] sm:$0xf] %vm1605, %v1512
      %1608 = vst.msk [vmem:[#allocation3 + $0x8] sm:$0xf] %vm1605, %v1514
      %1609 = vst.msk [vmem:[#allocation3 + $0xc] sm:$0xf] %vm1605, %v1516
      %1610 = vst.msk [vmem:[#allocation3 + $0x10] sm:$0xf] %vm1605, %v1518
      %1611 = vst.msk [vmem:[#allocation3 + $0x14] sm:$0xf] %vm1605, %v1520
      %1612 = vst.msk [vmem:[#allocation3 + $0x18] sm:$0xf] %vm1605, %v1522
      %1613 = vst.msk [vmem:[#allocation3 + $0x1c] sm:$0xf] %vm1605, %v1524
      %1614 = vst.msk [vmem:[#allocation3 + $0x20] sm:$0xf] %vm1605, %v1526
      %1615 = vst.msk [vmem:[#allocation3 + $0x24] sm:$0xf] %vm1605, %v1528
      %1616 = vst.msk [vmem:[#allocation3 + $0x28] sm:$0xf] %vm1605, %v1530
      %1617 = vst.msk [vmem:[#allocation3 + $0x2c] sm:$0xf] %vm1605, %v1532
      %1618 = vst.msk [vmem:[#allocation3 + $0x30] sm:$0xf] %vm1605, %v1534
      %1619 = vst.msk [vmem:[#allocation3 + $0x34] sm:$0xf] %vm1605, %v1536
      %1620 = vst.msk [vmem:[#allocation3 + $0x38] sm:$0xf] %vm1605, %v1538
      %1621 = vst.msk [vmem:[#allocation3 + $0x3c] sm:$0xf] %vm1605, %v1540
      %1622 = vst.msk [vmem:[#allocation3 + $0x40] sm:$0xf] %vm1605, %v1542
      %1623 = vst.msk [vmem:[#allocation3 + $0x44] sm:$0xf] %vm1605, %v1544
      %1624 = vst.msk [vmem:[#allocation3 + $0x48] sm:$0xf] %vm1605, %v1546
      %1625 = vst.msk [vmem:[#allocation3 + $0x4c] sm:$0xf] %vm1605, %v1548
      %1626 = vst.msk [vmem:[#allocation3 + $0x50] sm:$0xf] %vm1605, %v1550
      %1627 = vst.msk [vmem:[#allocation3 + $0x54] sm:$0xf] %vm1605, %v1552
      %1628 = vst.msk [vmem:[#allocation3 + $0x58] sm:$0xf] %vm1605, %v1554
      %1629 = vst.msk [vmem:[#allocation3 + $0x5c] sm:$0xf] %vm1605, %v1556
      %1630 = vst.msk [vmem:[#allocation3 + $0x60] sm:$0xf] %vm1605, %v1558
      %1631 = vst.msk [vmem:[#allocation3 + $0x64] sm:$0xf] %vm1605, %v1560
      %1632 = vst.msk [vmem:[#allocation3 + $0x68] sm:$0xf] %vm1605, %v1562
      %1633 = vst.msk [vmem:[#allocation3 + $0x6c] sm:$0xf] %vm1605, %v1564
      %1634 = vst.msk [vmem:[#allocation3 + $0x70] sm:$0xf] %vm1605, %v1566
      %1635 = vst.msk [vmem:[#allocation3 + $0x74] sm:$0xf] %vm1605, %v1568
      %1636 = vst.msk [vmem:[#allocation3 + $0x78] sm:$0xf] %vm1605, %v1570
      %1637 = vst.msk [vmem:[#allocation3 + $0x7c] sm:$0xf] %vm1605, %v1572
      %v1638 = vld [vmem:[%s641 + $0x1] sm:$0xff]
      %v1639 = vld [vmem:[%s641 + $0x9] sm:$0xff]
      %v1640 = vld [vmem:[%s641 + $0x19] sm:$0xff]
      %v1641 = vld [vmem:[%s641 + $0x21] sm:$0xff]
      %v1642 = vld [vmem:[%s641 + $0x31] sm:$0xff]
      %v1643 = vld [vmem:[%s641 + $0x39] sm:$0xff]
      %v1644 = vld [vmem:[%s641 + $0x49] sm:$0xff]
      %v1645 = vld [vmem:[%s641 + $0x51] sm:$0xff]
      %v1646 = vld [vmem:[%s641 + $0x61] sm:$0xff]
      %v1647 = vld [vmem:[%s641 + $0x69] sm:$0xff]
      %v1648 = vld [vmem:[%s641 + $0x79] sm:$0xff]
      %v1649 = vld [vmem:[%s641 + $0x81] sm:$0xff]
      %v1650 = vld [vmem:[%s641 + $0x91] sm:$0xff]
      %v1651 = vld [vmem:[%s641 + $0x99] sm:$0xff]
      %v1652 = vld [vmem:[%s641 + $0xa9] sm:$0xff]
      %v1653 = vld [vmem:[%s641 + $0xb1] sm:$0xff]
      %v1654 = vld [vmem:[%s641 + $0xc1] sm:$0xff]
      %v1655 = vld [vmem:[%s641 + $0xc9] sm:$0xff]
      %v1656 = vld [vmem:[%s641 + $0xd9] sm:$0xff]
      %v1657 = vld [vmem:[%s641 + $0xe1] sm:$0xff]
      %v1658 = vld [vmem:[%s641 + $0xf1] sm:$0xff]
      %v1659 = vld [vmem:[%s641 + $0xf9] sm:$0xff]
      %v1660 = vld [vmem:[%s641 + $0x109] sm:$0xff]
      %v1661 = vld [vmem:[%s641 + $0x111] sm:$0xff]
      %v1662 = vld [vmem:[%s641 + $0x121] sm:$0xff]
      %v1663 = vld [vmem:[%s641 + $0x129] sm:$0xff]
      %v1664 = vld [vmem:[%s641 + $0x139] sm:$0xff]
      %v1665 = vld [vmem:[%s641 + $0x141] sm:$0xff]
      %v1666 = vld [vmem:[%s641 + $0x151] sm:$0xff]
      %v1667 = vld [vmem:[%s641 + $0x159] sm:$0xff]
      %v1668 = vld [vmem:[%s641 + $0x169] sm:$0xff]
      %v1669 = vld [vmem:[%s641 + $0x171] sm:$0xff]
      %v1670 = vpack.c.bf16 %v1639, %v1638
      %v1671 = vpack.c.bf16 %v1641, %v1640
      %v1672 = vpack.c.bf16 %v1643, %v1642
      %v1673 = vpack.c.bf16 %v1645, %v1644
      %v1674 = vpack.c.bf16 %v1647, %v1646
      %v1675 = vpack.c.bf16 %v1649, %v1648
      %v1676 = vpack.c.bf16 %v1651, %v1650
      %v1677 = vpack.c.bf16 %v1653, %v1652
      %v1678 = vpack.c.bf16 %v1655, %v1654
      %v1679 = vpack.c.bf16 %v1657, %v1656
      %v1680 = vpack.c.bf16 %v1659, %v1658
      %v1681 = vpack.c.bf16 %v1661, %v1660
      %v1682 = vpack.c.bf16 %v1663, %v1662
      %v1683 = vpack.c.bf16 %v1665, %v1664
      %v1684 = vpack.c.bf16 %v1667, %v1666
      %v1685 = vpack.c.bf16 %v1669, %v1668
      %v1702 = vunpack.c.l.b16 %v1670
      %v1703 = vunpack.c.h.b16 %v1670
      %v1704 = vunpack.c.l.b16 %v1671
      %v1705 = vunpack.c.h.b16 %v1671
      %v1706 = vunpack.c.l.b16 %v1672
      %v1707 = vunpack.c.h.b16 %v1672
      %v1708 = vunpack.c.l.b16 %v1673
      %v1709 = vunpack.c.h.b16 %v1673
      %v1710 = vunpack.c.l.b16 %v1674
      %v1711 = vunpack.c.h.b16 %v1674
      %v1712 = vunpack.c.l.b16 %v1675
      %v1713 = vunpack.c.h.b16 %v1675
      %v1714 = vunpack.c.l.b16 %v1676
      %v1715 = vunpack.c.h.b16 %v1676
      %v1716 = vunpack.c.l.b16 %v1677
      %v1717 = vunpack.c.h.b16 %v1677
      %v1718 = vunpack.c.l.b16 %v1678
      %v1719 = vunpack.c.h.b16 %v1678
      %v1720 = vunpack.c.l.b16 %v1679
      %v1721 = vunpack.c.h.b16 %v1679
      %v1722 = vunpack.c.l.b16 %v1680
      %v1723 = vunpack.c.h.b16 %v1680
      %v1724 = vunpack.c.l.b16 %v1681
      %v1725 = vunpack.c.h.b16 %v1681
      %v1726 = vunpack.c.l.b16 %v1682
      %v1727 = vunpack.c.h.b16 %v1682
      %v1728 = vunpack.c.l.b16 %v1683
      %v1729 = vunpack.c.h.b16 %v1683
      %v1730 = vunpack.c.l.b16 %v1684
      %v1731 = vunpack.c.h.b16 %v1684
      %v1732 = vunpack.c.l.b16 %v1685
      %v1733 = vunpack.c.h.b16 %v1685
      %v1734 = vpack.c.b16 %v1702, %v1702
      %v1735 = vpack.c.b16 %v1703, %v1703
      %v1736 = vpack.c.b16 %v1704, %v1704
      %v1737 = vpack.c.b16 %v1705, %v1705
      %v1738 = vpack.c.b16 %v1706, %v1706
      %v1739 = vpack.c.b16 %v1707, %v1707
      %v1740 = vpack.c.b16 %v1708, %v1708
      %v1741 = vpack.c.b16 %v1709, %v1709
      %v1742 = vpack.c.b16 %v1710, %v1710
      %v1743 = vpack.c.b16 %v1711, %v1711
      %v1744 = vpack.c.b16 %v1712, %v1712
      %v1745 = vpack.c.b16 %v1713, %v1713
      %v1746 = vpack.c.b16 %v1714, %v1714
      %v1747 = vpack.c.b16 %v1715, %v1715
      %v1748 = vpack.c.b16 %v1716, %v1716
      %v1749 = vpack.c.b16 %v1717, %v1717
      %v1750 = vpack.c.b16 %v1718, %v1718
      %v1751 = vpack.c.b16 %v1719, %v1719
      %v1752 = vpack.c.b16 %v1720, %v1720
      %v1753 = vpack.c.b16 %v1721, %v1721
      %v1754 = vpack.c.b16 %v1722, %v1722
      %v1755 = vpack.c.b16 %v1723, %v1723
      %v1756 = vpack.c.b16 %v1724, %v1724
      %v1757 = vpack.c.b16 %v1725, %v1725
      %v1758 = vpack.c.b16 %v1726, %v1726
      %v1759 = vpack.c.b16 %v1727, %v1727
      %v1760 = vpack.c.b16 %v1728, %v1728
      %v1761 = vpack.c.b16 %v1729, %v1729
      %v1762 = vpack.c.b16 %v1730, %v1730
      %v1763 = vpack.c.b16 %v1731, %v1731
      %v1764 = vpack.c.b16 %v1732, %v1732
      %v1765 = vpack.c.b16 %v1733, %v1733
      %1766 = vrot.lane.b32.xlu0 %v1734, 16
      %v1767 = vpop.permute.xlu0 %1766
      %1768 = vrot.lane.b32.xlu0 %v1735, 16
      %v1769 = vpop.permute.xlu0 %1768
      %1770 = vrot.lane.b32.xlu0 %v1736, 16
      %v1771 = vpop.permute.xlu0 %1770
      %1772 = vrot.lane.b32.xlu0 %v1737, 16
      %v1773 = vpop.permute.xlu0 %1772
      %1774 = vrot.lane.b32.xlu0 %v1738, 16
      %v1775 = vpop.permute.xlu0 %1774
      %1776 = vrot.lane.b32.xlu0 %v1739, 16
      %v1777 = vpop.permute.xlu0 %1776
      %1778 = vrot.lane.b32.xlu0 %v1740, 16
      %v1779 = vpop.permute.xlu0 %1778
      %1780 = vrot.lane.b32.xlu0 %v1741, 16
      %v1781 = vpop.permute.xlu0 %1780
      %1782 = vrot.lane.b32.xlu0 %v1742, 16
      %v1783 = vpop.permute.xlu0 %1782
      %1784 = vrot.lane.b32.xlu0 %v1743, 16
      %v1785 = vpop.permute.xlu0 %1784
      %1786 = vrot.lane.b32.xlu0 %v1744, 16
      %v1787 = vpop.permute.xlu0 %1786
      %1788 = vrot.lane.b32.xlu0 %v1745, 16
      %v1789 = vpop.permute.xlu0 %1788
      %1790 = vrot.lane.b32.xlu0 %v1746, 16
      %v1791 = vpop.permute.xlu0 %1790
      %1792 = vrot.lane.b32.xlu0 %v1747, 16
      %v1793 = vpop.permute.xlu0 %1792
      %1794 = vrot.lane.b32.xlu0 %v1748, 16
      %v1795 = vpop.permute.xlu0 %1794
      %1796 = vrot.lane.b32.xlu0 %v1749, 16
      %v1797 = vpop.permute.xlu0 %1796
      %1798 = vrot.lane.b32.xlu0 %v1750, 16
      %v1799 = vpop.permute.xlu0 %1798
      %1800 = vrot.lane.b32.xlu0 %v1751, 16
      %v1801 = vpop.permute.xlu0 %1800
      %1802 = vrot.lane.b32.xlu0 %v1752, 16
      %v1803 = vpop.permute.xlu0 %1802
      %1804 = vrot.lane.b32.xlu0 %v1753, 16
      %v1805 = vpop.permute.xlu0 %1804
      %1806 = vrot.lane.b32.xlu0 %v1754, 16
      %v1807 = vpop.permute.xlu0 %1806
      %1808 = vrot.lane.b32.xlu0 %v1755, 16
      %v1809 = vpop.permute.xlu0 %1808
      %1810 = vrot.lane.b32.xlu0 %v1756, 16
      %v1811 = vpop.permute.xlu0 %1810
      %1812 = vrot.lane.b32.xlu0 %v1757, 16
      %v1813 = vpop.permute.xlu0 %1812
      %1814 = vrot.lane.b32.xlu0 %v1758, 16
      %v1815 = vpop.permute.xlu0 %1814
      %1816 = vrot.lane.b32.xlu0 %v1759, 16
      %v1817 = vpop.permute.xlu0 %1816
      %1818 = vrot.lane.b32.xlu0 %v1760, 16
      %v1819 = vpop.permute.xlu0 %1818
      %1820 = vrot.lane.b32.xlu0 %v1761, 16
      %v1821 = vpop.permute.xlu0 %1820
      %1822 = vrot.lane.b32.xlu0 %v1762, 16
      %v1823 = vpop.permute.xlu0 %1822
      %1824 = vrot.lane.b32.xlu0 %v1763, 16
      %v1825 = vpop.permute.xlu0 %1824
      %1826 = vrot.lane.b32.xlu0 %v1764, 16
      %v1827 = vpop.permute.xlu0 %1826
      %1828 = vrot.lane.b32.xlu0 %v1765, 16
      %v1829 = vpop.permute.xlu0 %1828
      %vm1862 = vcmask 158848
      %1863 = vst.msk [vmem:[#allocation3] sm:$0xf] %vm1862, %v1767
      %1864 = vst.msk [vmem:[#allocation3 + $0x4] sm:$0xf] %vm1862, %v1769
      %1865 = vst.msk [vmem:[#allocation3 + $0x8] sm:$0xf] %vm1862, %v1771
      %1866 = vst.msk [vmem:[#allocation3 + $0xc] sm:$0xf] %vm1862, %v1773
      %1867 = vst.msk [vmem:[#allocation3 + $0x10] sm:$0xf] %vm1862, %v1775
      %1868 = vst.msk [vmem:[#allocation3 + $0x14] sm:$0xf] %vm1862, %v1777
      %1869 = vst.msk [vmem:[#allocation3 + $0x18] sm:$0xf] %vm1862, %v1779
      %1870 = vst.msk [vmem:[#allocation3 + $0x1c] sm:$0xf] %vm1862, %v1781
      %1871 = vst.msk [vmem:[#allocation3 + $0x20] sm:$0xf] %vm1862, %v1783
      %1872 = vst.msk [vmem:[#allocation3 + $0x24] sm:$0xf] %vm1862, %v1785
      %1873 = vst.msk [vmem:[#allocation3 + $0x28] sm:$0xf] %vm1862, %v1787
      %1874 = vst.msk [vmem:[#allocation3 + $0x2c] sm:$0xf] %vm1862, %v1789
      %1875 = vst.msk [vmem:[#allocation3 + $0x30] sm:$0xf] %vm1862, %v1791
      %1876 = vst.msk [vmem:[#allocation3 + $0x34] sm:$0xf] %vm1862, %v1793
      %1877 = vst.msk [vmem:[#allocation3 + $0x38] sm:$0xf] %vm1862, %v1795
      %1878 = vst.msk [vmem:[#allocation3 + $0x3c] sm:$0xf] %vm1862, %v1797
      %1879 = vst.msk [vmem:[#allocation3 + $0x40] sm:$0xf] %vm1862, %v1799
      %1880 = vst.msk [vmem:[#allocation3 + $0x44] sm:$0xf] %vm1862, %v1801
      %1881 = vst.msk [vmem:[#allocation3 + $0x48] sm:$0xf] %vm1862, %v1803
      %1882 = vst.msk [vmem:[#allocation3 + $0x4c] sm:$0xf] %vm1862, %v1805
      %1883 = vst.msk [vmem:[#allocation3 + $0x50] sm:$0xf] %vm1862, %v1807
      %1884 = vst.msk [vmem:[#allocation3 + $0x54] sm:$0xf] %vm1862, %v1809
      %1885 = vst.msk [vmem:[#allocation3 + $0x58] sm:$0xf] %vm1862, %v1811
      %1886 = vst.msk [vmem:[#allocation3 + $0x5c] sm:$0xf] %vm1862, %v1813
      %1887 = vst.msk [vmem:[#allocation3 + $0x60] sm:$0xf] %vm1862, %v1815
      %1888 = vst.msk [vmem:[#allocation3 + $0x64] sm:$0xf] %vm1862, %v1817
      %1889 = vst.msk [vmem:[#allocation3 + $0x68] sm:$0xf] %vm1862, %v1819
      %1890 = vst.msk [vmem:[#allocation3 + $0x6c] sm:$0xf] %vm1862, %v1821
      %1891 = vst.msk [vmem:[#allocation3 + $0x70] sm:$0xf] %vm1862, %v1823
      %1892 = vst.msk [vmem:[#allocation3 + $0x74] sm:$0xf] %vm1862, %v1825
      %1893 = vst.msk [vmem:[#allocation3 + $0x78] sm:$0xf] %vm1862, %v1827
      %1894 = vst.msk [vmem:[#allocation3 + $0x7c] sm:$0xf] %vm1862, %v1829
      %v1895 = vld [vmem:[%s641 + $0x2] sm:$0xff]
      %v1896 = vld [vmem:[%s641 + $0xa] sm:$0xff]
      %v1897 = vld [vmem:[%s641 + $0x1a] sm:$0xff]
      %v1898 = vld [vmem:[%s641 + $0x22] sm:$0xff]
      %v1899 = vld [vmem:[%s641 + $0x32] sm:$0xff]
      %v1900 = vld [vmem:[%s641 + $0x3a] sm:$0xff]
      %v1901 = vld [vmem:[%s641 + $0x4a] sm:$0xff]
      %v1902 = vld [vmem:[%s641 + $0x52] sm:$0xff]
      %v1903 = vld [vmem:[%s641 + $0x62] sm:$0xff]
      %v1904 = vld [vmem:[%s641 + $0x6a] sm:$0xff]
      %v1905 = vld [vmem:[%s641 + $0x7a] sm:$0xff]
      %v1906 = vld [vmem:[%s641 + $0x82] sm:$0xff]
      %v1907 = vld [vmem:[%s641 + $0x92] sm:$0xff]
      %v1908 = vld [vmem:[%s641 + $0x9a] sm:$0xff]
      %v1909 = vld [vmem:[%s641 + $0xaa] sm:$0xff]
      %v1910 = vld [vmem:[%s641 + $0xb2] sm:$0xff]
      %v1911 = vld [vmem:[%s641 + $0xc2] sm:$0xff]
      %v1912 = vld [vmem:[%s641 + $0xca] sm:$0xff]
      %v1913 = vld [vmem:[%s641 + $0xda] sm:$0xff]
      %v1914 = vld [vmem:[%s641 + $0xe2] sm:$0xff]
      %v1915 = vld [vmem:[%s641 + $0xf2] sm:$0xff]
      %v1916 = vld [vmem:[%s641 + $0xfa] sm:$0xff]
      %v1917 = vld [vmem:[%s641 + $0x10a] sm:$0xff]
      %v1918 = vld [vmem:[%s641 + $0x112] sm:$0xff]
      %v1919 = vld [vmem:[%s641 + $0x122] sm:$0xff]
      %v1920 = vld [vmem:[%s641 + $0x12a] sm:$0xff]
      %v1921 = vld [vmem:[%s641 + $0x13a] sm:$0xff]
      %v1922 = vld [vmem:[%s641 + $0x142] sm:$0xff]
      %v1923 = vld [vmem:[%s641 + $0x152] sm:$0xff]
      %v1924 = vld [vmem:[%s641 + $0x15a] sm:$0xff]
      %v1925 = vld [vmem:[%s641 + $0x16a] sm:$0xff]
      %v1926 = vld [vmem:[%s641 + $0x172] sm:$0xff]
      %v1927 = vpack.c.bf16 %v1896, %v1895
      %v1928 = vpack.c.bf16 %v1898, %v1897
      %v1929 = vpack.c.bf16 %v1900, %v1899
      %v1930 = vpack.c.bf16 %v1902, %v1901
      %v1931 = vpack.c.bf16 %v1904, %v1903
      %v1932 = vpack.c.bf16 %v1906, %v1905
      %v1933 = vpack.c.bf16 %v1908, %v1907
      %v1934 = vpack.c.bf16 %v1910, %v1909
      %v1935 = vpack.c.bf16 %v1912, %v1911
      %v1936 = vpack.c.bf16 %v1914, %v1913
      %v1937 = vpack.c.bf16 %v1916, %v1915
      %v1938 = vpack.c.bf16 %v1918, %v1917
      %v1939 = vpack.c.bf16 %v1920, %v1919
      %v1940 = vpack.c.bf16 %v1922, %v1921
      %v1941 = vpack.c.bf16 %v1924, %v1923
      %v1942 = vpack.c.bf16 %v1926, %v1925
      %v1959 = vunpack.c.l.b16 %v1927
      %v1960 = vunpack.c.h.b16 %v1927
      %v1961 = vunpack.c.l.b16 %v1928
      %v1962 = vunpack.c.h.b16 %v1928
      %v1963 = vunpack.c.l.b16 %v1929
      %v1964 = vunpack.c.h.b16 %v1929
      %v1965 = vunpack.c.l.b16 %v1930
      %v1966 = vunpack.c.h.b16 %v1930
      %v1967 = vunpack.c.l.b16 %v1931
      %v1968 = vunpack.c.h.b16 %v1931
      %v1969 = vunpack.c.l.b16 %v1932
      %v1970 = vunpack.c.h.b16 %v1932
      %v1971 = vunpack.c.l.b16 %v1933
      %v1972 = vunpack.c.h.b16 %v1933
      %v1973 = vunpack.c.l.b16 %v1934
      %v1974 = vunpack.c.h.b16 %v1934
      %v1975 = vunpack.c.l.b16 %v1935
      %v1976 = vunpack.c.h.b16 %v1935
      %v1977 = vunpack.c.l.b16 %v1936
      %v1978 = vunpack.c.h.b16 %v1936
      %v1979 = vunpack.c.l.b16 %v1937
      %v1980 = vunpack.c.h.b16 %v1937
      %v1981 = vunpack.c.l.b16 %v1938
      %v1982 = vunpack.c.h.b16 %v1938
      %v1983 = vunpack.c.l.b16 %v1939
      %v1984 = vunpack.c.h.b16 %v1939
      %v1985 = vunpack.c.l.b16 %v1940
      %v1986 = vunpack.c.h.b16 %v1940
      %v1987 = vunpack.c.l.b16 %v1941
      %v1988 = vunpack.c.h.b16 %v1941
      %v1989 = vunpack.c.l.b16 %v1942
      %v1990 = vunpack.c.h.b16 %v1942
      %v1991 = vpack.c.b16 %v1959, %v1959
      %v1992 = vpack.c.b16 %v1960, %v1960
      %v1993 = vpack.c.b16 %v1961, %v1961
      %v1994 = vpack.c.b16 %v1962, %v1962
      %v1995 = vpack.c.b16 %v1963, %v1963
      %v1996 = vpack.c.b16 %v1964, %v1964
      %v1997 = vpack.c.b16 %v1965, %v1965
      %v1998 = vpack.c.b16 %v1966, %v1966
      %v1999 = vpack.c.b16 %v1967, %v1967
      %v2000 = vpack.c.b16 %v1968, %v1968
      %v2001 = vpack.c.b16 %v1969, %v1969
      %v2002 = vpack.c.b16 %v1970, %v1970
      %v2003 = vpack.c.b16 %v1971, %v1971
      %v2004 = vpack.c.b16 %v1972, %v1972
      %v2005 = vpack.c.b16 %v1973, %v1973
      %v2006 = vpack.c.b16 %v1974, %v1974
      %v2007 = vpack.c.b16 %v1975, %v1975
      %v2008 = vpack.c.b16 %v1976, %v1976
      %v2009 = vpack.c.b16 %v1977, %v1977
      %v2010 = vpack.c.b16 %v1978, %v1978
      %v2011 = vpack.c.b16 %v1979, %v1979
      %v2012 = vpack.c.b16 %v1980, %v1980
      %v2013 = vpack.c.b16 %v1981, %v1981
      %v2014 = vpack.c.b16 %v1982, %v1982
      %v2015 = vpack.c.b16 %v1983, %v1983
      %v2016 = vpack.c.b16 %v1984, %v1984
      %v2017 = vpack.c.b16 %v1985, %v1985
      %v2018 = vpack.c.b16 %v1986, %v1986
      %v2019 = vpack.c.b16 %v1987, %v1987
      %v2020 = vpack.c.b16 %v1988, %v1988
      %v2021 = vpack.c.b16 %v1989, %v1989
      %v2022 = vpack.c.b16 %v1990, %v1990
      %2023 = vrot.lane.b32.xlu0 %v1991, 20
      %v2024 = vpop.permute.xlu0 %2023
      %2025 = vrot.lane.b32.xlu0 %v1992, 20
      %v2026 = vpop.permute.xlu0 %2025
      %2027 = vrot.lane.b32.xlu0 %v1993, 20
      %v2028 = vpop.permute.xlu0 %2027
      %2029 = vrot.lane.b32.xlu0 %v1994, 20
      %v2030 = vpop.permute.xlu0 %2029
      %2031 = vrot.lane.b32.xlu0 %v1995, 20
      %v2032 = vpop.permute.xlu0 %2031
      %2033 = vrot.lane.b32.xlu0 %v1996, 20
      %v2034 = vpop.permute.xlu0 %2033
      %2035 = vrot.lane.b32.xlu0 %v1997, 20
      %v2036 = vpop.permute.xlu0 %2035
      %2037 = vrot.lane.b32.xlu0 %v1998, 20
      %v2038 = vpop.permute.xlu0 %2037
      %2039 = vrot.lane.b32.xlu0 %v1999, 20
      %v2040 = vpop.permute.xlu0 %2039
      %2041 = vrot.lane.b32.xlu0 %v2000, 20
      %v2042 = vpop.permute.xlu0 %2041
      %2043 = vrot.lane.b32.xlu0 %v2001, 20
      %v2044 = vpop.permute.xlu0 %2043
      %2045 = vrot.lane.b32.xlu0 %v2002, 20
      %v2046 = vpop.permute.xlu0 %2045
      %2047 = vrot.lane.b32.xlu0 %v2003, 20
      %v2048 = vpop.permute.xlu0 %2047
      %2049 = vrot.lane.b32.xlu0 %v2004, 20
      %v2050 = vpop.permute.xlu0 %2049
      %2051 = vrot.lane.b32.xlu0 %v2005, 20
      %v2052 = vpop.permute.xlu0 %2051
      %2053 = vrot.lane.b32.xlu0 %v2006, 20
      %v2054 = vpop.permute.xlu0 %2053
      %2055 = vrot.lane.b32.xlu0 %v2007, 20
      %v2056 = vpop.permute.xlu0 %2055
      %2057 = vrot.lane.b32.xlu0 %v2008, 20
      %v2058 = vpop.permute.xlu0 %2057
      %2059 = vrot.lane.b32.xlu0 %v2009, 20
      %v2060 = vpop.permute.xlu0 %2059
      %2061 = vrot.lane.b32.xlu0 %v2010, 20
      %v2062 = vpop.permute.xlu0 %2061
      %2063 = vrot.lane.b32.xlu0 %v2011, 20
      %v2064 = vpop.permute.xlu0 %2063
      %2065 = vrot.lane.b32.xlu0 %v2012, 20
      %v2066 = vpop.permute.xlu0 %2065
      %2067 = vrot.lane.b32.xlu0 %v2013, 20
      %v2068 = vpop.permute.xlu0 %2067
      %2069 = vrot.lane.b32.xlu0 %v2014, 20
      %v2070 = vpop.permute.xlu0 %2069
      %2071 = vrot.lane.b32.xlu0 %v2015, 20
      %v2072 = vpop.permute.xlu0 %2071
      %2073 = vrot.lane.b32.xlu0 %v2016, 20
      %v2074 = vpop.permute.xlu0 %2073
      %2075 = vrot.lane.b32.xlu0 %v2017, 20
      %v2076 = vpop.permute.xlu0 %2075
      %2077 = vrot.lane.b32.xlu0 %v2018, 20
      %v2078 = vpop.permute.xlu0 %2077
      %2079 = vrot.lane.b32.xlu0 %v2019, 20
      %v2080 = vpop.permute.xlu0 %2079
      %2081 = vrot.lane.b32.xlu0 %v2020, 20
      %v2082 = vpop.permute.xlu0 %2081
      %2083 = vrot.lane.b32.xlu0 %v2021, 20
      %v2084 = vpop.permute.xlu0 %2083
      %2085 = vrot.lane.b32.xlu0 %v2022, 20
      %v2086 = vpop.permute.xlu0 %2085
      %vm2119 = vcmask 191648
      %2120 = vst.msk [vmem:[#allocation3] sm:$0xf] %vm2119, %v2024
      %2121 = vst.msk [vmem:[#allocation3 + $0x4] sm:$0xf] %vm2119, %v2026
      %2122 = vst.msk [vmem:[#allocation3 + $0x8] sm:$0xf] %vm2119, %v2028
      %2123 = vst.msk [vmem:[#allocation3 + $0xc] sm:$0xf] %vm2119, %v2030
      %2124 = vst.msk [vmem:[#allocation3 + $0x10] sm:$0xf] %vm2119, %v2032
      %2125 = vst.msk [vmem:[#allocation3 + $0x14] sm:$0xf] %vm2119, %v2034
      %2126 = vst.msk [vmem:[#allocation3 + $0x18] sm:$0xf] %vm2119, %v2036
      %2127 = vst.msk [vmem:[#allocation3 + $0x1c] sm:$0xf] %vm2119, %v2038
      %2128 = vst.msk [vmem:[#allocation3 + $0x20] sm:$0xf] %vm2119, %v2040
      %2129 = vst.msk [vmem:[#allocation3 + $0x24] sm:$0xf] %vm2119, %v2042
      %2130 = vst.msk [vmem:[#allocation3 + $0x28] sm:$0xf] %vm2119, %v2044
      %2131 = vst.msk [vmem:[#allocation3 + $0x2c] sm:$0xf] %vm2119, %v2046
      %2132 = vst.msk [vmem:[#allocation3 + $0x30] sm:$0xf] %vm2119, %v2048
      %2133 = vst.msk [vmem:[#allocation3 + $0x34] sm:$0xf] %vm2119, %v2050
      %2134 = vst.msk [vmem:[#allocation3 + $0x38] sm:$0xf] %vm2119, %v2052
      %2135 = vst.msk [vmem:[#allocation3 + $0x3c] sm:$0xf] %vm2119, %v2054
      %2136 = vst.msk [vmem:[#allocation3 + $0x40] sm:$0xf] %vm2119, %v2056
      %2137 = vst.msk [vmem:[#allocation3 + $0x44] sm:$0xf] %vm2119, %v2058
      %2138 = vst.msk [vmem:[#allocation3 + $0x48] sm:$0xf] %vm2119, %v2060
      %2139 = vst.msk [vmem:[#allocation3 + $0x4c] sm:$0xf] %vm2119, %v2062
      %2140 = vst.msk [vmem:[#allocation3 + $0x50] sm:$0xf] %vm2119, %v2064
      %2141 = vst.msk [vmem:[#allocation3 + $0x54] sm:$0xf] %vm2119, %v2066
      %2142 = vst.msk [vmem:[#allocation3 + $0x58] sm:$0xf] %vm2119, %v2068
      %2143 = vst.msk [vmem:[#allocation3 + $0x5c] sm:$0xf] %vm2119, %v2070
      %2144 = vst.msk [vmem:[#allocation3 + $0x60] sm:$0xf] %vm2119, %v2072
      %2145 = vst.msk [vmem:[#allocation3 + $0x64] sm:$0xf] %vm2119, %v2074
      %2146 = vst.msk [vmem:[#allocation3 + $0x68] sm:$0xf] %vm2119, %v2076
      %2147 = vst.msk [vmem:[#allocation3 + $0x6c] sm:$0xf] %vm2119, %v2078
      %2148 = vst.msk [vmem:[#allocation3 + $0x70] sm:$0xf] %vm2119, %v2080
      %2149 = vst.msk [vmem:[#allocation3 + $0x74] sm:$0xf] %vm2119, %v2082
      %2150 = vst.msk [vmem:[#allocation3 + $0x78] sm:$0xf] %vm2119, %v2084
      %2151 = vst.msk [vmem:[#allocation3 + $0x7c] sm:$0xf] %vm2119, %v2086
      %s2152 = scalar_lea.vmem [#allocation2], 48
      %v2153 = vld [vmem:[%s2152] sm:$0xff]
      %v2154 = vld [vmem:[%s2152 + $0x8] sm:$0xff]
      %v2155 = vld [vmem:[%s2152 + $0x18] sm:$0xff]
      %v2156 = vld [vmem:[%s2152 + $0x20] sm:$0xff]
      %v2157 = vld [vmem:[%s2152 + $0x30] sm:$0xff]
      %v2158 = vld [vmem:[%s2152 + $0x38] sm:$0xff]
      %v2159 = vld [vmem:[%s2152 + $0x48] sm:$0xff]
      %v2160 = vld [vmem:[%s2152 + $0x50] sm:$0xff]
      %v2161 = vld [vmem:[%s2152 + $0x60] sm:$0xff]
      %v2162 = vld [vmem:[%s2152 + $0x68] sm:$0xff]
      %v2163 = vld [vmem:[%s2152 + $0x78] sm:$0xff]
      %v2164 = vld [vmem:[%s2152 + $0x80] sm:$0xff]
      %v2165 = vld [vmem:[%s2152 + $0x90] sm:$0xff]
      %v2166 = vld [vmem:[%s2152 + $0x98] sm:$0xff]
      %v2167 = vld [vmem:[%s2152 + $0xa8] sm:$0xff]
      %v2168 = vld [vmem:[%s2152 + $0xb0] sm:$0xff]
      %v2169 = vld [vmem:[%s2152 + $0xc0] sm:$0xff]
      %v2170 = vld [vmem:[%s2152 + $0xc8] sm:$0xff]
      %v2171 = vld [vmem:[%s2152 + $0xd8] sm:$0xff]
      %v2172 = vld [vmem:[%s2152 + $0xe0] sm:$0xff]
      %v2173 = vld [vmem:[%s2152 + $0xf0] sm:$0xff]
      %v2174 = vld [vmem:[%s2152 + $0xf8] sm:$0xff]
      %v2175 = vld [vmem:[%s2152 + $0x108] sm:$0xff]
      %v2176 = vld [vmem:[%s2152 + $0x110] sm:$0xff]
      %v2177 = vld [vmem:[%s2152 + $0x120] sm:$0xff]
      %v2178 = vld [vmem:[%s2152 + $0x128] sm:$0xff]
      %v2179 = vld [vmem:[%s2152 + $0x138] sm:$0xff]
      %v2180 = vld [vmem:[%s2152 + $0x140] sm:$0xff]
      %v2181 = vld [vmem:[%s2152 + $0x150] sm:$0xff]
      %v2182 = vld [vmem:[%s2152 + $0x158] sm:$0xff]
      %v2183 = vld [vmem:[%s2152 + $0x168] sm:$0xff]
      %v2184 = vld [vmem:[%s2152 + $0x170] sm:$0xff]
      %v2185 = vpack.c.bf16 %v2154, %v2153
      %v2186 = vpack.c.bf16 %v2156, %v2155
      %v2187 = vpack.c.bf16 %v2158, %v2157
      %v2188 = vpack.c.bf16 %v2160, %v2159
      %v2189 = vpack.c.bf16 %v2162, %v2161
      %v2190 = vpack.c.bf16 %v2164, %v2163
      %v2191 = vpack.c.bf16 %v2166, %v2165
      %v2192 = vpack.c.bf16 %v2168, %v2167
      %v2193 = vpack.c.bf16 %v2170, %v2169
      %v2194 = vpack.c.bf16 %v2172, %v2171
      %v2195 = vpack.c.bf16 %v2174, %v2173
      %v2196 = vpack.c.bf16 %v2176, %v2175
      %v2197 = vpack.c.bf16 %v2178, %v2177
      %v2198 = vpack.c.bf16 %v2180, %v2179
      %v2199 = vpack.c.bf16 %v2182, %v2181
      %v2200 = vpack.c.bf16 %v2184, %v2183
      %v2217 = vunpack.c.l.b16 %v2185
      %v2218 = vunpack.c.h.b16 %v2185
      %v2219 = vunpack.c.l.b16 %v2186
      %v2220 = vunpack.c.h.b16 %v2186
      %v2221 = vunpack.c.l.b16 %v2187
      %v2222 = vunpack.c.h.b16 %v2187
      %v2223 = vunpack.c.l.b16 %v2188
      %v2224 = vunpack.c.h.b16 %v2188
      %v2225 = vunpack.c.l.b16 %v2189
      %v2226 = vunpack.c.h.b16 %v2189
      %v2227 = vunpack.c.l.b16 %v2190
      %v2228 = vunpack.c.h.b16 %v2190
      %v2229 = vunpack.c.l.b16 %v2191
      %v2230 = vunpack.c.h.b16 %v2191
      %v2231 = vunpack.c.l.b16 %v2192
      %v2232 = vunpack.c.h.b16 %v2192
      %v2233 = vunpack.c.l.b16 %v2193
      %v2234 = vunpack.c.h.b16 %v2193
      %v2235 = vunpack.c.l.b16 %v2194
      %v2236 = vunpack.c.h.b16 %v2194
      %v2237 = vunpack.c.l.b16 %v2195
      %v2238 = vunpack.c.h.b16 %v2195
      %v2239 = vunpack.c.l.b16 %v2196
      %v2240 = vunpack.c.h.b16 %v2196
      %v2241 = vunpack.c.l.b16 %v2197
      %v2242 = vunpack.c.h.b16 %v2197
      %v2243 = vunpack.c.l.b16 %v2198
      %v2244 = vunpack.c.h.b16 %v2198
      %v2245 = vunpack.c.l.b16 %v2199
      %v2246 = vunpack.c.h.b16 %v2199
      %v2247 = vunpack.c.l.b16 %v2200
      %v2248 = vunpack.c.h.b16 %v2200
      %v2249 = vpack.c.b16 %v2217, %v2217
      %v2250 = vpack.c.b16 %v2218, %v2218
      %v2251 = vpack.c.b16 %v2219, %v2219
      %v2252 = vpack.c.b16 %v2220, %v2220
      %v2253 = vpack.c.b16 %v2221, %v2221
      %v2254 = vpack.c.b16 %v2222, %v2222
      %v2255 = vpack.c.b16 %v2223, %v2223
      %v2256 = vpack.c.b16 %v2224, %v2224
      %v2257 = vpack.c.b16 %v2225, %v2225
      %v2258 = vpack.c.b16 %v2226, %v2226
      %v2259 = vpack.c.b16 %v2227, %v2227
      %v2260 = vpack.c.b16 %v2228, %v2228
      %v2261 = vpack.c.b16 %v2229, %v2229
      %v2262 = vpack.c.b16 %v2230, %v2230
      %v2263 = vpack.c.b16 %v2231, %v2231
      %v2264 = vpack.c.b16 %v2232, %v2232
      %v2265 = vpack.c.b16 %v2233, %v2233
      %v2266 = vpack.c.b16 %v2234, %v2234
      %v2267 = vpack.c.b16 %v2235, %v2235
      %v2268 = vpack.c.b16 %v2236, %v2236
      %v2269 = vpack.c.b16 %v2237, %v2237
      %v2270 = vpack.c.b16 %v2238, %v2238
      %v2271 = vpack.c.b16 %v2239, %v2239
      %v2272 = vpack.c.b16 %v2240, %v2240
      %v2273 = vpack.c.b16 %v2241, %v2241
      %v2274 = vpack.c.b16 %v2242, %v2242
      %v2275 = vpack.c.b16 %v2243, %v2243
      %v2276 = vpack.c.b16 %v2244, %v2244
      %v2277 = vpack.c.b16 %v2245, %v2245
      %v2278 = vpack.c.b16 %v2246, %v2246
      %v2279 = vpack.c.b16 %v2247, %v2247
      %v2280 = vpack.c.b16 %v2248, %v2248
      %2281 = vrot.lane.b32.xlu0 %v2249, 24
      %v2282 = vpop.permute.xlu0 %2281
      %2283 = vrot.lane.b32.xlu0 %v2250, 24
      %v2284 = vpop.permute.xlu0 %2283
      %2285 = vrot.lane.b32.xlu0 %v2251, 24
      %v2286 = vpop.permute.xlu0 %2285
      %2287 = vrot.lane.b32.xlu0 %v2252, 24
      %v2288 = vpop.permute.xlu0 %2287
      %2289 = vrot.lane.b32.xlu0 %v2253, 24
      %v2290 = vpop.permute.xlu0 %2289
      %2291 = vrot.lane.b32.xlu0 %v2254, 24
      %v2292 = vpop.permute.xlu0 %2291
      %2293 = vrot.lane.b32.xlu0 %v2255, 24
      %v2294 = vpop.permute.xlu0 %2293
      %2295 = vrot.lane.b32.xlu0 %v2256, 24
      %v2296 = vpop.permute.xlu0 %2295
      %2297 = vrot.lane.b32.xlu0 %v2257, 24
      %v2298 = vpop.permute.xlu0 %2297
      %2299 = vrot.lane.b32.xlu0 %v2258, 24
      %v2300 = vpop.permute.xlu0 %2299
      %2301 = vrot.lane.b32.xlu0 %v2259, 24
      %v2302 = vpop.permute.xlu0 %2301
      %2303 = vrot.lane.b32.xlu0 %v2260, 24
      %v2304 = vpop.permute.xlu0 %2303
      %2305 = vrot.lane.b32.xlu0 %v2261, 24
      %v2306 = vpop.permute.xlu0 %2305
      %2307 = vrot.lane.b32.xlu0 %v2262, 24
      %v2308 = vpop.permute.xlu0 %2307
      %2309 = vrot.lane.b32.xlu0 %v2263, 24
      %v2310 = vpop.permute.xlu0 %2309
      %2311 = vrot.lane.b32.xlu0 %v2264, 24
      %v2312 = vpop.permute.xlu0 %2311
      %2313 = vrot.lane.b32.xlu0 %v2265, 24
      %v2314 = vpop.permute.xlu0 %2313
      %2315 = vrot.lane.b32.xlu0 %v2266, 24
      %v2316 = vpop.permute.xlu0 %2315
      %2317 = vrot.lane.b32.xlu0 %v2267, 24
      %v2318 = vpop.permute.xlu0 %2317
      %2319 = vrot.lane.b32.xlu0 %v2268, 24
      %v2320 = vpop.permute.xlu0 %2319
      %2321 = vrot.lane.b32.xlu0 %v2269, 24
      %v2322 = vpop.permute.xlu0 %2321
      %2323 = vrot.lane.b32.xlu0 %v2270, 24
      %v2324 = vpop.permute.xlu0 %2323
      %2325 = vrot.lane.b32.xlu0 %v2271, 24
      %v2326 = vpop.permute.xlu0 %2325
      %2327 = vrot.lane.b32.xlu0 %v2272, 24
      %v2328 = vpop.permute.xlu0 %2327
      %2329 = vrot.lane.b32.xlu0 %v2273, 24
      %v2330 = vpop.permute.xlu0 %2329
      %2331 = vrot.lane.b32.xlu0 %v2274, 24
      %v2332 = vpop.permute.xlu0 %2331
      %2333 = vrot.lane.b32.xlu0 %v2275, 24
      %v2334 = vpop.permute.xlu0 %2333
      %2335 = vrot.lane.b32.xlu0 %v2276, 24
      %v2336 = vpop.permute.xlu0 %2335
      %2337 = vrot.lane.b32.xlu0 %v2277, 24
      %v2338 = vpop.permute.xlu0 %2337
      %2339 = vrot.lane.b32.xlu0 %v2278, 24
      %v2340 = vpop.permute.xlu0 %2339
      %2341 = vrot.lane.b32.xlu0 %v2279, 24
      %v2342 = vpop.permute.xlu0 %2341
      %2343 = vrot.lane.b32.xlu0 %v2280, 24
      %v2344 = vpop.permute.xlu0 %2343
      %vm2377 = vcmask 224448
      %2378 = vst.msk [vmem:[#allocation3] sm:$0xf] %vm2377, %v2282
      %2379 = vst.msk [vmem:[#allocation3 + $0x4] sm:$0xf] %vm2377, %v2284
      %2380 = vst.msk [vmem:[#allocation3 + $0x8] sm:$0xf] %vm2377, %v2286
      %2381 = vst.msk [vmem:[#allocation3 + $0xc] sm:$0xf] %vm2377, %v2288
      %2382 = vst.msk [vmem:[#allocation3 + $0x10] sm:$0xf] %vm2377, %v2290
      %2383 = vst.msk [vmem:[#allocation3 + $0x14] sm:$0xf] %vm2377, %v2292
      %2384 = vst.msk [vmem:[#allocation3 + $0x18] sm:$0xf] %vm2377, %v2294
      %2385 = vst.msk [vmem:[#allocation3 + $0x1c] sm:$0xf] %vm2377, %v2296
      %2386 = vst.msk [vmem:[#allocation3 + $0x20] sm:$0xf] %vm2377, %v2298
      %2387 = vst.msk [vmem:[#allocation3 + $0x24] sm:$0xf] %vm2377, %v2300
      %2388 = vst.msk [vmem:[#allocation3 + $0x28] sm:$0xf] %vm2377, %v2302
      %2389 = vst.msk [vmem:[#allocation3 + $0x2c] sm:$0xf] %vm2377, %v2304
      %2390 = vst.msk [vmem:[#allocation3 + $0x30] sm:$0xf] %vm2377, %v2306
      %2391 = vst.msk [vmem:[#allocation3 + $0x34] sm:$0xf] %vm2377, %v2308
      %2392 = vst.msk [vmem:[#allocation3 + $0x38] sm:$0xf] %vm2377, %v2310
      %2393 = vst.msk [vmem:[#allocation3 + $0x3c] sm:$0xf] %vm2377, %v2312
      %2394 = vst.msk [vmem:[#allocation3 + $0x40] sm:$0xf] %vm2377, %v2314
      %2395 = vst.msk [vmem:[#allocation3 + $0x44] sm:$0xf] %vm2377, %v2316
      %2396 = vst.msk [vmem:[#allocation3 + $0x48] sm:$0xf] %vm2377, %v2318
      %2397 = vst.msk [vmem:[#allocation3 + $0x4c] sm:$0xf] %vm2377, %v2320
      %2398 = vst.msk [vmem:[#allocation3 + $0x50] sm:$0xf] %vm2377, %v2322
      %2399 = vst.msk [vmem:[#allocation3 + $0x54] sm:$0xf] %vm2377, %v2324
      %2400 = vst.msk [vmem:[#allocation3 + $0x58] sm:$0xf] %vm2377, %v2326
      %2401 = vst.msk [vmem:[#allocation3 + $0x5c] sm:$0xf] %vm2377, %v2328
      %2402 = vst.msk [vmem:[#allocation3 + $0x60] sm:$0xf] %vm2377, %v2330
      %2403 = vst.msk [vmem:[#allocation3 + $0x64] sm:$0xf] %vm2377, %v2332
      %2404 = vst.msk [vmem:[#allocation3 + $0x68] sm:$0xf] %vm2377, %v2334
      %2405 = vst.msk [vmem:[#allocation3 + $0x6c] sm:$0xf] %vm2377, %v2336
      %2406 = vst.msk [vmem:[#allocation3 + $0x70] sm:$0xf] %vm2377, %v2338
      %2407 = vst.msk [vmem:[#allocation3 + $0x74] sm:$0xf] %vm2377, %v2340
      %2408 = vst.msk [vmem:[#allocation3 + $0x78] sm:$0xf] %vm2377, %v2342
      %2409 = vst.msk [vmem:[#allocation3 + $0x7c] sm:$0xf] %vm2377, %v2344
      %v2410 = vld [vmem:[%s2152 + $0x1] sm:$0xff]
      %v2411 = vld [vmem:[%s2152 + $0x9] sm:$0xff]
      %v2412 = vld [vmem:[%s2152 + $0x19] sm:$0xff]
      %v2413 = vld [vmem:[%s2152 + $0x21] sm:$0xff]
      %v2414 = vld [vmem:[%s2152 + $0x31] sm:$0xff]
      %v2415 = vld [vmem:[%s2152 + $0x39] sm:$0xff]
      %v2416 = vld [vmem:[%s2152 + $0x49] sm:$0xff]
      %v2417 = vld [vmem:[%s2152 + $0x51] sm:$0xff]
      %v2418 = vld [vmem:[%s2152 + $0x61] sm:$0xff]
      %v2419 = vld [vmem:[%s2152 + $0x69] sm:$0xff]
      %v2420 = vld [vmem:[%s2152 + $0x79] sm:$0xff]
      %v2421 = vld [vmem:[%s2152 + $0x81] sm:$0xff]
      %v2422 = vld [vmem:[%s2152 + $0x91] sm:$0xff]
      %v2423 = vld [vmem:[%s2152 + $0x99] sm:$0xff]
      %v2424 = vld [vmem:[%s2152 + $0xa9] sm:$0xff]
      %v2425 = vld [vmem:[%s2152 + $0xb1] sm:$0xff]
      %v2426 = vld [vmem:[%s2152 + $0xc1] sm:$0xff]
      %v2427 = vld [vmem:[%s2152 + $0xc9] sm:$0xff]
      %v2428 = vld [vmem:[%s2152 + $0xd9] sm:$0xff]
      %v2429 = vld [vmem:[%s2152 + $0xe1] sm:$0xff]
      %v2430 = vld [vmem:[%s2152 + $0xf1] sm:$0xff]
      %v2431 = vld [vmem:[%s2152 + $0xf9] sm:$0xff]
      %v2432 = vld [vmem:[%s2152 + $0x109] sm:$0xff]
      %v2433 = vld [vmem:[%s2152 + $0x111] sm:$0xff]
      %v2434 = vld [vmem:[%s2152 + $0x121] sm:$0xff]
      %v2435 = vld [vmem:[%s2152 + $0x129] sm:$0xff]
      %v2436 = vld [vmem:[%s2152 + $0x139] sm:$0xff]
      %v2437 = vld [vmem:[%s2152 + $0x141] sm:$0xff]
      %v2438 = vld [vmem:[%s2152 + $0x151] sm:$0xff]
      %v2439 = vld [vmem:[%s2152 + $0x159] sm:$0xff]
      %v2440 = vld [vmem:[%s2152 + $0x169] sm:$0xff]
      %v2441 = vld [vmem:[%s2152 + $0x171] sm:$0xff]
      %v2442 = vpack.c.bf16 %v2411, %v2410
      %v2443 = vpack.c.bf16 %v2413, %v2412
      %v2444 = vpack.c.bf16 %v2415, %v2414
      %v2445 = vpack.c.bf16 %v2417, %v2416
      %v2446 = vpack.c.bf16 %v2419, %v2418
      %v2447 = vpack.c.bf16 %v2421, %v2420
      %v2448 = vpack.c.bf16 %v2423, %v2422
      %v2449 = vpack.c.bf16 %v2425, %v2424
      %v2450 = vpack.c.bf16 %v2427, %v2426
      %v2451 = vpack.c.bf16 %v2429, %v2428
      %v2452 = vpack.c.bf16 %v2431, %v2430
      %v2453 = vpack.c.bf16 %v2433, %v2432
      %v2454 = vpack.c.bf16 %v2435, %v2434
      %v2455 = vpack.c.bf16 %v2437, %v2436
      %v2456 = vpack.c.bf16 %v2439, %v2438
      %v2457 = vpack.c.bf16 %v2441, %v2440
      %v2474 = vunpack.c.l.b16 %v2442
      %v2475 = vunpack.c.h.b16 %v2442
      %v2476 = vunpack.c.l.b16 %v2443
      %v2477 = vunpack.c.h.b16 %v2443
      %v2478 = vunpack.c.l.b16 %v2444
      %v2479 = vunpack.c.h.b16 %v2444
      %v2480 = vunpack.c.l.b16 %v2445
      %v2481 = vunpack.c.h.b16 %v2445
      %v2482 = vunpack.c.l.b16 %v2446
      %v2483 = vunpack.c.h.b16 %v2446
      %v2484 = vunpack.c.l.b16 %v2447
      %v2485 = vunpack.c.h.b16 %v2447
      %v2486 = vunpack.c.l.b16 %v2448
      %v2487 = vunpack.c.h.b16 %v2448
      %v2488 = vunpack.c.l.b16 %v2449
      %v2489 = vunpack.c.h.b16 %v2449
      %v2490 = vunpack.c.l.b16 %v2450
      %v2491 = vunpack.c.h.b16 %v2450
      %v2492 = vunpack.c.l.b16 %v2451
      %v2493 = vunpack.c.h.b16 %v2451
      %v2494 = vunpack.c.l.b16 %v2452
      %v2495 = vunpack.c.h.b16 %v2452
      %v2496 = vunpack.c.l.b16 %v2453
      %v2497 = vunpack.c.h.b16 %v2453
      %v2498 = vunpack.c.l.b16 %v2454
      %v2499 = vunpack.c.h.b16 %v2454
      %v2500 = vunpack.c.l.b16 %v2455
      %v2501 = vunpack.c.h.b16 %v2455
      %v2502 = vunpack.c.l.b16 %v2456
      %v2503 = vunpack.c.h.b16 %v2456
      %v2504 = vunpack.c.l.b16 %v2457
      %v2505 = vunpack.c.h.b16 %v2457
      %v2506 = vpack.c.b16 %v2474, %v2474
      %v2507 = vpack.c.b16 %v2475, %v2475
      %v2508 = vpack.c.b16 %v2476, %v2476
      %v2509 = vpack.c.b16 %v2477, %v2477
      %v2510 = vpack.c.b16 %v2478, %v2478
      %v2511 = vpack.c.b16 %v2479, %v2479
      %v2512 = vpack.c.b16 %v2480, %v2480
      %v2513 = vpack.c.b16 %v2481, %v2481
      %v2514 = vpack.c.b16 %v2482, %v2482
      %v2515 = vpack.c.b16 %v2483, %v2483
      %v2516 = vpack.c.b16 %v2484, %v2484
      %v2517 = vpack.c.b16 %v2485, %v2485
      %v2518 = vpack.c.b16 %v2486, %v2486
      %v2519 = vpack.c.b16 %v2487, %v2487
      %v2520 = vpack.c.b16 %v2488, %v2488
      %v2521 = vpack.c.b16 %v2489, %v2489
      %v2522 = vpack.c.b16 %v2490, %v2490
      %v2523 = vpack.c.b16 %v2491, %v2491
      %v2524 = vpack.c.b16 %v2492, %v2492
      %v2525 = vpack.c.b16 %v2493, %v2493
      %v2526 = vpack.c.b16 %v2494, %v2494
      %v2527 = vpack.c.b16 %v2495, %v2495
      %v2528 = vpack.c.b16 %v2496, %v2496
      %v2529 = vpack.c.b16 %v2497, %v2497
      %v2530 = vpack.c.b16 %v2498, %v2498
      %v2531 = vpack.c.b16 %v2499, %v2499
      %v2532 = vpack.c.b16 %v2500, %v2500
      %v2533 = vpack.c.b16 %v2501, %v2501
      %v2534 = vpack.c.b16 %v2502, %v2502
      %v2535 = vpack.c.b16 %v2503, %v2503
      %v2536 = vpack.c.b16 %v2504, %v2504
      %v2537 = vpack.c.b16 %v2505, %v2505
      %2538 = vrot.lane.b32.xlu0 %v2506, 28
      %v2539 = vpop.permute.xlu0 %2538
      %2540 = vrot.lane.b32.xlu0 %v2507, 28
      %v2541 = vpop.permute.xlu0 %2540
      %2542 = vrot.lane.b32.xlu0 %v2508, 28
      %v2543 = vpop.permute.xlu0 %2542
      %2544 = vrot.lane.b32.xlu0 %v2509, 28
      %v2545 = vpop.permute.xlu0 %2544
      %2546 = vrot.lane.b32.xlu0 %v2510, 28
      %v2547 = vpop.permute.xlu0 %2546
      %2548 = vrot.lane.b32.xlu0 %v2511, 28
      %v2549 = vpop.permute.xlu0 %2548
      %2550 = vrot.lane.b32.xlu0 %v2512, 28
      %v2551 = vpop.permute.xlu0 %2550
      %2552 = vrot.lane.b32.xlu0 %v2513, 28
      %v2553 = vpop.permute.xlu0 %2552
      %2554 = vrot.lane.b32.xlu0 %v2514, 28
      %v2555 = vpop.permute.xlu0 %2554
      %2556 = vrot.lane.b32.xlu0 %v2515, 28
      %v2557 = vpop.permute.xlu0 %2556
      %2558 = vrot.lane.b32.xlu0 %v2516, 28
      %v2559 = vpop.permute.xlu0 %2558
      %2560 = vrot.lane.b32.xlu0 %v2517, 28
      %v2561 = vpop.permute.xlu0 %2560
      %2562 = vrot.lane.b32.xlu0 %v2518, 28
      %v2563 = vpop.permute.xlu0 %2562
      %2564 = vrot.lane.b32.xlu0 %v2519, 28
      %v2565 = vpop.permute.xlu0 %2564
      %2566 = vrot.lane.b32.xlu0 %v2520, 28
      %v2567 = vpop.permute.xlu0 %2566
      %2568 = vrot.lane.b32.xlu0 %v2521, 28
      %v2569 = vpop.permute.xlu0 %2568
      %2570 = vrot.lane.b32.xlu0 %v2522, 28
      %v2571 = vpop.permute.xlu0 %2570
      %2572 = vrot.lane.b32.xlu0 %v2523, 28
      %v2573 = vpop.permute.xlu0 %2572
      %2574 = vrot.lane.b32.xlu0 %v2524, 28
      %v2575 = vpop.permute.xlu0 %2574
      %2576 = vrot.lane.b32.xlu0 %v2525, 28
      %v2577 = vpop.permute.xlu0 %2576
      %2578 = vrot.lane.b32.xlu0 %v2526, 28
      %v2579 = vpop.permute.xlu0 %2578
      %2580 = vrot.lane.b32.xlu0 %v2527, 28
      %v2581 = vpop.permute.xlu0 %2580
      %2582 = vrot.lane.b32.xlu0 %v2528, 28
      %v2583 = vpop.permute.xlu0 %2582
      %2584 = vrot.lane.b32.xlu0 %v2529, 28
      %v2585 = vpop.permute.xlu0 %2584
      %2586 = vrot.lane.b32.xlu0 %v2530, 28
      %v2587 = vpop.permute.xlu0 %2586
      %2588 = vrot.lane.b32.xlu0 %v2531, 28
      %v2589 = vpop.permute.xlu0 %2588
      %2590 = vrot.lane.b32.xlu0 %v2532, 28
      %v2591 = vpop.permute.xlu0 %2590
      %2592 = vrot.lane.b32.xlu0 %v2533, 28
      %v2593 = vpop.permute.xlu0 %2592
      %2594 = vrot.lane.b32.xlu0 %v2534, 28
      %v2595 = vpop.permute.xlu0 %2594
      %2596 = vrot.lane.b32.xlu0 %v2535, 28
      %v2597 = vpop.permute.xlu0 %2596
      %2598 = vrot.lane.b32.xlu0 %v2536, 28
      %v2599 = vpop.permute.xlu0 %2598
      %2600 = vrot.lane.b32.xlu0 %v2537, 28
      %v2601 = vpop.permute.xlu0 %2600
      %vm2634 = vcmask 257248
      %2635 = vst.msk [vmem:[#allocation3] sm:$0xf] %vm2634, %v2539
      %2636 = vst.msk [vmem:[#allocation3 + $0x4] sm:$0xf] %vm2634, %v2541
      %2637 = vst.msk [vmem:[#allocation3 + $0x8] sm:$0xf] %vm2634, %v2543
      %2638 = vst.msk [vmem:[#allocation3 + $0xc] sm:$0xf] %vm2634, %v2545
      %2639 = vst.msk [vmem:[#allocation3 + $0x10] sm:$0xf] %vm2634, %v2547
      %2640 = vst.msk [vmem:[#allocation3 + $0x14] sm:$0xf] %vm2634, %v2549
      %2641 = vst.msk [vmem:[#allocation3 + $0x18] sm:$0xf] %vm2634, %v2551
      %2642 = vst.msk [vmem:[#allocation3 + $0x1c] sm:$0xf] %vm2634, %v2553
      %2643 = vst.msk [vmem:[#allocation3 + $0x20] sm:$0xf] %vm2634, %v2555
      %2644 = vst.msk [vmem:[#allocation3 + $0x24] sm:$0xf] %vm2634, %v2557
      %2645 = vst.msk [vmem:[#allocation3 + $0x28] sm:$0xf] %vm2634, %v2559
      %2646 = vst.msk [vmem:[#allocation3 + $0x2c] sm:$0xf] %vm2634, %v2561
      %2647 = vst.msk [vmem:[#allocation3 + $0x30] sm:$0xf] %vm2634, %v2563
      %2648 = vst.msk [vmem:[#allocation3 + $0x34] sm:$0xf] %vm2634, %v2565
      %2649 = vst.msk [vmem:[#allocation3 + $0x38] sm:$0xf] %vm2634, %v2567
      %2650 = vst.msk [vmem:[#allocation3 + $0x3c] sm:$0xf] %vm2634, %v2569
      %2651 = vst.msk [vmem:[#allocation3 + $0x40] sm:$0xf] %vm2634, %v2571
      %2652 = vst.msk [vmem:[#allocation3 + $0x44] sm:$0xf] %vm2634, %v2573
      %2653 = vst.msk [vmem:[#allocation3 + $0x48] sm:$0xf] %vm2634, %v2575
      %2654 = vst.msk [vmem:[#allocation3 + $0x4c] sm:$0xf] %vm2634, %v2577
      %2655 = vst.msk [vmem:[#allocation3 + $0x50] sm:$0xf] %vm2634, %v2579
      %2656 = vst.msk [vmem:[#allocation3 + $0x54] sm:$0xf] %vm2634, %v2581
      %2657 = vst.msk [vmem:[#allocation3 + $0x58] sm:$0xf] %vm2634, %v2583
      %2658 = vst.msk [vmem:[#allocation3 + $0x5c] sm:$0xf] %vm2634, %v2585
      %2659 = vst.msk [vmem:[#allocation3 + $0x60] sm:$0xf] %vm2634, %v2587
      %2660 = vst.msk [vmem:[#allocation3 + $0x64] sm:$0xf] %vm2634, %v2589
      %2661 = vst.msk [vmem:[#allocation3 + $0x68] sm:$0xf] %vm2634, %v2591
      %2662 = vst.msk [vmem:[#allocation3 + $0x6c] sm:$0xf] %vm2634, %v2593
      %2663 = vst.msk [vmem:[#allocation3 + $0x70] sm:$0xf] %vm2634, %v2595
      %2664 = vst.msk [vmem:[#allocation3 + $0x74] sm:$0xf] %vm2634, %v2597
      %2665 = vst.msk [vmem:[#allocation3 + $0x78] sm:$0xf] %vm2634, %v2599
      %2666 = vst.msk [vmem:[#allocation3 + $0x7c] sm:$0xf] %vm2634, %v2601
      %v2667 = vld [vmem:[%s2152 + $0x2] sm:$0xff]
      %v2668 = vld [vmem:[%s2152 + $0xa] sm:$0xff]
      %v2669 = vld [vmem:[%s2152 + $0x1a] sm:$0xff]
      %v2670 = vld [vmem:[%s2152 + $0x22] sm:$0xff]
      %v2671 = vld [vmem:[%s2152 + $0x32] sm:$0xff]
      %v2672 = vld [vmem:[%s2152 + $0x3a] sm:$0xff]
      %v2673 = vld [vmem:[%s2152 + $0x4a] sm:$0xff]
      %v2674 = vld [vmem:[%s2152 + $0x52] sm:$0xff]
      %v2675 = vld [vmem:[%s2152 + $0x62] sm:$0xff]
      %v2676 = vld [vmem:[%s2152 + $0x6a] sm:$0xff]
      %v2677 = vld [vmem:[%s2152 + $0x7a] sm:$0xff]
      %v2678 = vld [vmem:[%s2152 + $0x82] sm:$0xff]
      %v2679 = vld [vmem:[%s2152 + $0x92] sm:$0xff]
      %v2680 = vld [vmem:[%s2152 + $0x9a] sm:$0xff]
      %v2681 = vld [vmem:[%s2152 + $0xaa] sm:$0xff]
      %v2682 = vld [vmem:[%s2152 + $0xb2] sm:$0xff]
      %v2683 = vld [vmem:[%s2152 + $0xc2] sm:$0xff]
      %v2684 = vld [vmem:[%s2152 + $0xca] sm:$0xff]
      %v2685 = vld [vmem:[%s2152 + $0xda] sm:$0xff]
      %v2686 = vld [vmem:[%s2152 + $0xe2] sm:$0xff]
      %v2687 = vld [vmem:[%s2152 + $0xf2] sm:$0xff]
      %v2688 = vld [vmem:[%s2152 + $0xfa] sm:$0xff]
      %v2689 = vld [vmem:[%s2152 + $0x10a] sm:$0xff]
      %v2690 = vld [vmem:[%s2152 + $0x112] sm:$0xff]
      %v2691 = vld [vmem:[%s2152 + $0x122] sm:$0xff]
      %v2692 = vld [vmem:[%s2152 + $0x12a] sm:$0xff]
      %v2693 = vld [vmem:[%s2152 + $0x13a] sm:$0xff]
      %v2694 = vld [vmem:[%s2152 + $0x142] sm:$0xff]
      %v2695 = vld [vmem:[%s2152 + $0x152] sm:$0xff]
      %v2696 = vld [vmem:[%s2152 + $0x15a] sm:$0xff]
      %v2697 = vld [vmem:[%s2152 + $0x16a] sm:$0xff]
      %v2698 = vld [vmem:[%s2152 + $0x172] sm:$0xff]
      %v2699 = vpack.c.bf16 %v2668, %v2667
      %v2700 = vpack.c.bf16 %v2670, %v2669
      %v2701 = vpack.c.bf16 %v2672, %v2671
      %v2702 = vpack.c.bf16 %v2674, %v2673
      %v2703 = vpack.c.bf16 %v2676, %v2675
      %v2704 = vpack.c.bf16 %v2678, %v2677
      %v2705 = vpack.c.bf16 %v2680, %v2679
      %v2706 = vpack.c.bf16 %v2682, %v2681
      %v2707 = vpack.c.bf16 %v2684, %v2683
      %v2708 = vpack.c.bf16 %v2686, %v2685
      %v2709 = vpack.c.bf16 %v2688, %v2687
      %v2710 = vpack.c.bf16 %v2690, %v2689
      %v2711 = vpack.c.bf16 %v2692, %v2691
      %v2712 = vpack.c.bf16 %v2694, %v2693
      %v2713 = vpack.c.bf16 %v2696, %v2695
      %v2714 = vpack.c.bf16 %v2698, %v2697
      %v2731 = vunpack.c.l.b16 %v2699
      %v2732 = vunpack.c.h.b16 %v2699
      %v2733 = vunpack.c.l.b16 %v2700
      %v2734 = vunpack.c.h.b16 %v2700
      %v2735 = vunpack.c.l.b16 %v2701
      %v2736 = vunpack.c.h.b16 %v2701
      %v2737 = vunpack.c.l.b16 %v2702
      %v2738 = vunpack.c.h.b16 %v2702
      %v2739 = vunpack.c.l.b16 %v2703
      %v2740 = vunpack.c.h.b16 %v2703
      %v2741 = vunpack.c.l.b16 %v2704
      %v2742 = vunpack.c.h.b16 %v2704
      %v2743 = vunpack.c.l.b16 %v2705
      %v2744 = vunpack.c.h.b16 %v2705
      %v2745 = vunpack.c.l.b16 %v2706
      %v2746 = vunpack.c.h.b16 %v2706
      %v2747 = vunpack.c.l.b16 %v2707
      %v2748 = vunpack.c.h.b16 %v2707
      %v2749 = vunpack.c.l.b16 %v2708
      %v2750 = vunpack.c.h.b16 %v2708
      %v2751 = vunpack.c.l.b16 %v2709
      %v2752 = vunpack.c.h.b16 %v2709
      %v2753 = vunpack.c.l.b16 %v2710
      %v2754 = vunpack.c.h.b16 %v2710
      %v2755 = vunpack.c.l.b16 %v2711
      %v2756 = vunpack.c.h.b16 %v2711
      %v2757 = vunpack.c.l.b16 %v2712
      %v2758 = vunpack.c.h.b16 %v2712
      %v2759 = vunpack.c.l.b16 %v2713
      %v2760 = vunpack.c.h.b16 %v2713
      %v2761 = vunpack.c.l.b16 %v2714
      %v2762 = vunpack.c.h.b16 %v2714
      %v2763 = vpack.c.b16 %v2731, %v2731
      %v2764 = vpack.c.b16 %v2732, %v2732
      %v2765 = vpack.c.b16 %v2733, %v2733
      %v2766 = vpack.c.b16 %v2734, %v2734
      %v2767 = vpack.c.b16 %v2735, %v2735
      %v2768 = vpack.c.b16 %v2736, %v2736
      %v2769 = vpack.c.b16 %v2737, %v2737
      %v2770 = vpack.c.b16 %v2738, %v2738
      %v2771 = vpack.c.b16 %v2739, %v2739
      %v2772 = vpack.c.b16 %v2740, %v2740
      %v2773 = vpack.c.b16 %v2741, %v2741
      %v2774 = vpack.c.b16 %v2742, %v2742
      %v2775 = vpack.c.b16 %v2743, %v2743
      %v2776 = vpack.c.b16 %v2744, %v2744
      %v2777 = vpack.c.b16 %v2745, %v2745
      %v2778 = vpack.c.b16 %v2746, %v2746
      %v2779 = vpack.c.b16 %v2747, %v2747
      %v2780 = vpack.c.b16 %v2748, %v2748
      %v2781 = vpack.c.b16 %v2749, %v2749
      %v2782 = vpack.c.b16 %v2750, %v2750
      %v2783 = vpack.c.b16 %v2751, %v2751
      %v2784 = vpack.c.b16 %v2752, %v2752
      %v2785 = vpack.c.b16 %v2753, %v2753
      %v2786 = vpack.c.b16 %v2754, %v2754
      %v2787 = vpack.c.b16 %v2755, %v2755
      %v2788 = vpack.c.b16 %v2756, %v2756
      %v2789 = vpack.c.b16 %v2757, %v2757
      %v2790 = vpack.c.b16 %v2758, %v2758
      %v2791 = vpack.c.b16 %v2759, %v2759
      %v2792 = vpack.c.b16 %v2760, %v2760
      %v2793 = vpack.c.b16 %v2761, %v2761
      %v2794 = vpack.c.b16 %v2762, %v2762
      %2795 = vrot.lane.b32.xlu0 %v2763, 32
      %v2796 = vpop.permute.xlu0 %2795
      %2797 = vrot.lane.b32.xlu0 %v2764, 32
      %v2798 = vpop.permute.xlu0 %2797
      %2799 = vrot.lane.b32.xlu0 %v2765, 32
      %v2800 = vpop.permute.xlu0 %2799
      %2801 = vrot.lane.b32.xlu0 %v2766, 32
      %v2802 = vpop.permute.xlu0 %2801
      %2803 = vrot.lane.b32.xlu0 %v2767, 32
      %v2804 = vpop.permute.xlu0 %2803
      %2805 = vrot.lane.b32.xlu0 %v2768, 32
      %v2806 = vpop.permute.xlu0 %2805
      %2807 = vrot.lane.b32.xlu0 %v2769, 32
      %v2808 = vpop.permute.xlu0 %2807
      %2809 = vrot.lane.b32.xlu0 %v2770, 32
      %v2810 = vpop.permute.xlu0 %2809
      %2811 = vrot.lane.b32.xlu0 %v2771, 32
      %v2812 = vpop.permute.xlu0 %2811
      %2813 = vrot.lane.b32.xlu0 %v2772, 32
      %v2814 = vpop.permute.xlu0 %2813
      %2815 = vrot.lane.b32.xlu0 %v2773, 32
      %v2816 = vpop.permute.xlu0 %2815
      %2817 = vrot.lane.b32.xlu0 %v2774, 32
      %v2818 = vpop.permute.xlu0 %2817
      %2819 = vrot.lane.b32.xlu0 %v2775, 32
      %v2820 = vpop.permute.xlu0 %2819
      %2821 = vrot.lane.b32.xlu0 %v2776, 32
      %v2822 = vpop.permute.xlu0 %2821
      %2823 = vrot.lane.b32.xlu0 %v2777, 32
      %v2824 = vpop.permute.xlu0 %2823
      %2825 = vrot.lane.b32.xlu0 %v2778, 32
      %v2826 = vpop.permute.xlu0 %2825
      %2827 = vrot.lane.b32.xlu0 %v2779, 32
      %v2828 = vpop.permute.xlu0 %2827
      %2829 = vrot.lane.b32.xlu0 %v2780, 32
      %v2830 = vpop.permute.xlu0 %2829
      %2831 = vrot.lane.b32.xlu0 %v2781, 32
      %v2832 = vpop.permute.xlu0 %2831
      %2833 = vrot.lane.b32.xlu0 %v2782, 32
      %v2834 = vpop.permute.xlu0 %2833
      %2835 = vrot.lane.b32.xlu0 %v2783, 32
      %v2836 = vpop.permute.xlu0 %2835
      %2837 = vrot.lane.b32.xlu0 %v2784, 32
      %v2838 = vpop.permute.xlu0 %2837
      %2839 = vrot.lane.b32.xlu0 %v2785, 32
      %v2840 = vpop.permute.xlu0 %2839
      %2841 = vrot.lane.b32.xlu0 %v2786, 32
      %v2842 = vpop.permute.xlu0 %2841
      %2843 = vrot.lane.b32.xlu0 %v2787, 32
      %v2844 = vpop.permute.xlu0 %2843
      %2845 = vrot.lane.b32.xlu0 %v2788, 32
      %v2846 = vpop.permute.xlu0 %2845
      %2847 = vrot.lane.b32.xlu0 %v2789, 32
      %v2848 = vpop.permute.xlu0 %2847
      %2849 = vrot.lane.b32.xlu0 %v2790, 32
      %v2850 = vpop.permute.xlu0 %2849
      %2851 = vrot.lane.b32.xlu0 %v2791, 32
      %v2852 = vpop.permute.xlu0 %2851
      %2853 = vrot.lane.b32.xlu0 %v2792, 32
      %v2854 = vpop.permute.xlu0 %2853
      %2855 = vrot.lane.b32.xlu0 %v2793, 32
      %v2856 = vpop.permute.xlu0 %2855
      %2857 = vrot.lane.b32.xlu0 %v2794, 32
      %v2858 = vpop.permute.xlu0 %2857
      %vm2891 = vcmask 290048
      %2892 = vst.msk [vmem:[#allocation3] sm:$0xf] %vm2891, %v2796
      %2893 = vst.msk [vmem:[#allocation3 + $0x4] sm:$0xf] %vm2891, %v2798
      %2894 = vst.msk [vmem:[#allocation3 + $0x8] sm:$0xf] %vm2891, %v2800
      %2895 = vst.msk [vmem:[#allocation3 + $0xc] sm:$0xf] %vm2891, %v2802
      %2896 = vst.msk [vmem:[#allocation3 + $0x10] sm:$0xf] %vm2891, %v2804
      %2897 = vst.msk [vmem:[#allocation3 + $0x14] sm:$0xf] %vm2891, %v2806
      %2898 = vst.msk [vmem:[#allocation3 + $0x18] sm:$0xf] %vm2891, %v2808
      %2899 = vst.msk [vmem:[#allocation3 + $0x1c] sm:$0xf] %vm2891, %v2810
      %2900 = vst.msk [vmem:[#allocation3 + $0x20] sm:$0xf] %vm2891, %v2812
      %2901 = vst.msk [vmem:[#allocation3 + $0x24] sm:$0xf] %vm2891, %v2814
      %2902 = vst.msk [vmem:[#allocation3 + $0x28] sm:$0xf] %vm2891, %v2816
      %2903 = vst.msk [vmem:[#allocation3 + $0x2c] sm:$0xf] %vm2891, %v2818
      %2904 = vst.msk [vmem:[#allocation3 + $0x30] sm:$0xf] %vm2891, %v2820
      %2905 = vst.msk [vmem:[#allocation3 + $0x34] sm:$0xf] %vm2891, %v2822
      %2906 = vst.msk [vmem:[#allocation3 + $0x38] sm:$0xf] %vm2891, %v2824
      %2907 = vst.msk [vmem:[#allocation3 + $0x3c] sm:$0xf] %vm2891, %v2826
      %2908 = vst.msk [vmem:[#allocation3 + $0x40] sm:$0xf] %vm2891, %v2828
      %2909 = vst.msk [vmem:[#allocation3 + $0x44] sm:$0xf] %vm2891, %v2830
      %2910 = vst.msk [vmem:[#allocation3 + $0x48] sm:$0xf] %vm2891, %v2832
      %2911 = vst.msk [vmem:[#allocation3 + $0x4c] sm:$0xf] %vm2891, %v2834
      %2912 = vst.msk [vmem:[#allocation3 + $0x50] sm:$0xf] %vm2891, %v2836
      %2913 = vst.msk [vmem:[#allocation3 + $0x54] sm:$0xf] %vm2891, %v2838
      %2914 = vst.msk [vmem:[#allocation3 + $0x58] sm:$0xf] %vm2891, %v2840
      %2915 = vst.msk [vmem:[#allocation3 + $0x5c] sm:$0xf] %vm2891, %v2842
      %2916 = vst.msk [vmem:[#allocation3 + $0x60] sm:$0xf] %vm2891, %v2844
      %2917 = vst.msk [vmem:[#allocation3 + $0x64] sm:$0xf] %vm2891, %v2846
      %2918 = vst.msk [vmem:[#allocation3 + $0x68] sm:$0xf] %vm2891, %v2848
      %2919 = vst.msk [vmem:[#allocation3 + $0x6c] sm:$0xf] %vm2891, %v2850
      %2920 = vst.msk [vmem:[#allocation3 + $0x70] sm:$0xf] %vm2891, %v2852
      %2921 = vst.msk [vmem:[#allocation3 + $0x74] sm:$0xf] %vm2891, %v2854
      %2922 = vst.msk [vmem:[#allocation3 + $0x78] sm:$0xf] %vm2891, %v2856
      %2923 = vst.msk [vmem:[#allocation3 + $0x7c] sm:$0xf] %vm2891, %v2858
      %v2924 = vld [vmem:[#allocation3] sm:$0xf]
      %v2925 = vld [vmem:[#allocation3 + $0x4] sm:$0xf]
      %v2926 = vld [vmem:[#allocation3 + $0x8] sm:$0xf]
      %v2927 = vld [vmem:[#allocation3 + $0xc] sm:$0xf]
      %v2928 = vld [vmem:[#allocation3 + $0x10] sm:$0xf]
      %v2929 = vld [vmem:[#allocation3 + $0x14] sm:$0xf]
      %v2930 = vld [vmem:[#allocation3 + $0x18] sm:$0xf]
      %v2931 = vld [vmem:[#allocation3 + $0x1c] sm:$0xf]
      %v2932 = vld [vmem:[#allocation3 + $0x20] sm:$0xf]
      %v2933 = vld [vmem:[#allocation3 + $0x24] sm:$0xf]
      %v2934 = vld [vmem:[#allocation3 + $0x28] sm:$0xf]
      %v2935 = vld [vmem:[#allocation3 + $0x2c] sm:$0xf]
      %v2936 = vld [vmem:[#allocation3 + $0x30] sm:$0xf]
      %v2937 = vld [vmem:[#allocation3 + $0x34] sm:$0xf]
      %v2938 = vld [vmem:[#allocation3 + $0x38] sm:$0xf]
      %v2939 = vld [vmem:[#allocation3 + $0x3c] sm:$0xf]
      %v2940 = vld [vmem:[#allocation3 + $0x40] sm:$0xf]
      %v2941 = vld [vmem:[#allocation3 + $0x44] sm:$0xf]
      %v2942 = vld [vmem:[#allocation3 + $0x48] sm:$0xf]
      %v2943 = vld [vmem:[#allocation3 + $0x4c] sm:$0xf]
      %v2944 = vld [vmem:[#allocation3 + $0x50] sm:$0xf]
      %v2945 = vld [vmem:[#allocation3 + $0x54] sm:$0xf]
      %v2946 = vld [vmem:[#allocation3 + $0x58] sm:$0xf]
      %v2947 = vld [vmem:[#allocation3 + $0x5c] sm:$0xf]
      %v2948 = vld [vmem:[#allocation3 + $0x60] sm:$0xf]
      %v2949 = vld [vmem:[#allocation3 + $0x64] sm:$0xf]
      %v2950 = vld [vmem:[#allocation3 + $0x68] sm:$0xf]
      %v2951 = vld [vmem:[#allocation3 + $0x6c] sm:$0xf]
      %v2952 = vld [vmem:[#allocation3 + $0x70] sm:$0xf]
      %v2953 = vld [vmem:[#allocation3 + $0x74] sm:$0xf]
      %v2954 = vld [vmem:[#allocation3 + $0x78] sm:$0xf]
      %v2955 = vld [vmem:[#allocation3 + $0x7c] sm:$0xf]
      %v2956 = vld [vmem:[%s2] sm:$0xf]
      %v2957 = vld [vmem:[%s2 + $0x4] sm:$0xf]
      %v2958 = vld [vmem:[%s2 + $0x8] sm:$0xf]
      %v2959 = vld [vmem:[%s2 + $0xc] sm:$0xf]
      %v2960 = vld [vmem:[%s2 + $0x10] sm:$0x3]
      %v2961 = vld [vmem:[%s5] sm:$0x1]
      %v2963 = vlaneseq
      %v2964 = vshrl.u32 %v2963, 7
      %v2965 = vsub.s32 0, %v2964
      %v2966 = vrot.slane %v2961, %v2965
      %v3000 = vunpack.c.l.b16 %v2924
      %v3001 = vunpack.c.l.b16 %v2925
      %v3002 = vunpack.c.l.b16 %v2926
      %v3003 = vunpack.c.l.b16 %v2927
      %v3004 = vunpack.c.l.b16 %v2928
      %v3005 = vunpack.c.l.b16 %v2929
      %v3006 = vunpack.c.l.b16 %v2930
      %v3007 = vunpack.c.l.b16 %v2931
      %v3008 = vunpack.c.l.b16 %v2932
      %v3009 = vunpack.c.l.b16 %v2933
      %v3010 = vunpack.c.l.b16 %v2934
      %v3011 = vunpack.c.l.b16 %v2935
      %v3012 = vunpack.c.l.b16 %v2936
      %v3013 = vunpack.c.l.b16 %v2937
      %v3014 = vunpack.c.l.b16 %v2938
      %v3015 = vunpack.c.l.b16 %v2939
      %v3016 = vunpack.c.l.b16 %v2940
      %v3017 = vunpack.c.l.b16 %v2941
      %v3018 = vunpack.c.l.b16 %v2942
      %v3019 = vunpack.c.l.b16 %v2943
      %v3020 = vunpack.c.l.b16 %v2944
      %v3021 = vunpack.c.l.b16 %v2945
      %v3022 = vunpack.c.l.b16 %v2946
      %v3023 = vunpack.c.l.b16 %v2947
      %v3024 = vunpack.c.l.b16 %v2948
      %v3025 = vunpack.c.l.b16 %v2949
      %v3026 = vunpack.c.l.b16 %v2950
      %v3027 = vunpack.c.l.b16 %v2951
      %v3028 = vunpack.c.l.b16 %v2952
      %v3029 = vunpack.c.l.b16 %v2953
      %v3030 = vunpack.c.l.b16 %v2954
      %v3031 = vunpack.c.l.b16 %v2955
      %v3032 = vpack.c.b16 %v3001, %v3000
      %v3033 = vpack.c.b16 %v3003, %v3002
      %v3034 = vpack.c.b16 %v3005, %v3004
      %v3035 = vpack.c.b16 %v3007, %v3006
      %v3036 = vpack.c.b16 %v3009, %v3008
      %v3037 = vpack.c.b16 %v3011, %v3010
      %v3038 = vpack.c.b16 %v3013, %v3012
      %v3039 = vpack.c.b16 %v3015, %v3014
      %v3040 = vpack.c.b16 %v3017, %v3016
      %v3041 = vpack.c.b16 %v3019, %v3018
      %v3042 = vpack.c.b16 %v3021, %v3020
      %v3043 = vpack.c.b16 %v3023, %v3022
      %v3044 = vpack.c.b16 %v3025, %v3024
      %v3045 = vpack.c.b16 %v3027, %v3026
      %v3046 = vpack.c.b16 %v3029, %v3028
      %v3047 = vpack.c.b16 %v3031, %v3030
      %v3053 = vunpack.c.l.b16 %v2956
      %v3054 = vunpack.c.l.b16 %v2957
      %v3055 = vunpack.c.l.b16 %v2958
      %v3056 = vunpack.c.l.b16 %v2959
      %v3057 = vunpack.c.l.b16 %v2960
      %v3058 = vpack.c.b16 %v3054, %v3053
      %v3059 = vpack.c.b16 %v3056, %v3055
      %v3060 = vpack.c.b16 %v3057, %v3057
      %vm3063 = vcmask 293888
      %v3065 = vsel %vm3063, %v3032, 0
      %v3068 = vsel %vm3063, %v3033, 0
      %v3071 = vsel %vm3063, %v3034, 0
      %v3074 = vsel %vm3063, %v3035, 0
      %v3077 = vsel %vm3063, %v3036, 0
      %v3080 = vsel %vm3063, %v3037, 0
      %v3083 = vsel %vm3063, %v3038, 0
      %v3086 = vsel %vm3063, %v3039, 0
      %v3089 = vsel %vm3063, %v3040, 0
      %v3092 = vsel %vm3063, %v3041, 0
      %v3095 = vsel %vm3063, %v3042, 0
      %v3098 = vsel %vm3063, %v3043, 0
      %v3101 = vsel %vm3063, %v3044, 0
      %v3104 = vsel %vm3063, %v3045, 0
      %v3107 = vsel %vm3063, %v3046, 0
      %v3110 = vsel %vm3063, %v3047, 0
      %vm3112 = vcmask 1041408
      %v3114 = vsel %vm3112, %v3060, 0
      %3116 = vmatprep.subr.bf16.mxu0 0
      %3117 = vmatpush1.bf16.msra.mxu0 0
      %3118 = vmatprep.subr.bf16.mxu0 0
      %3119 = vmatpush1.bf16.msra.mxu0 0
      %3120 = vmatprep.subr.bf16.mxu0 0
      %3121 = vmatpush1.bf16.msra.mxu0 0
      %3122 = vmatprep.subr.bf16.mxu0 0
      %3123 = vmatpush1.bf16.msra.mxu0 0
      %3124 = vmatprep.subr.bf16.mxu0 0
      %3125 = vmatpush1.bf16.msra.mxu0 0
      %3126 = vmatprep.subr.bf16.mxu0 0
      %3127 = vmatpush1.bf16.msra.mxu0 %v3114
      %3128 = vmatprep.subr.bf16.mxu0 0
      %3129 = vmatpush1.bf16.msra.mxu0 %v3059
      %3130 = vmatprep.subr.bf16.mxu0 0
      %3131 = vmatpush1.bf16.msra.mxu0 %v3058
      %3132 = vmatprep.subr.bf16.mxu0 0
      %3133 = vmatpush2.bf16.msra.mxu0 0
      %3134 = vmatprep.subr.bf16.mxu0 0
      %3135 = vmatpush2.bf16.msra.mxu0 0
      %3136 = vmatprep.subr.bf16.mxu0 0
      %3137 = vmatpush2.bf16.msra.mxu0 0
      %3138 = vmatprep.subr.bf16.mxu0 0
      %3139 = vmatpush2.bf16.msra.mxu0 0
      %3140 = vmatprep.subr.bf16.mxu0 0
      %3141 = vmatpush2.bf16.msra.mxu0 0
      %3142 = vmatprep.subr.bf16.mxu0 0
      %3143 = vmatpush2.bf16.msra.mxu0 0
      %3144 = vmatprep.subr.bf16.mxu0 0
      %3145 = vmatpush2.bf16.msra.mxu0 0
      %3146 = vmatprep.subr.bf16.mxu0 0
      %3147 = vmatpush2.bf16.msra.mxu0 0
      %3148 = vmatprep.mubr.bf16.mxu0 0
      %3149 = vmatmul.mubr.bf16.gmra.mxu0 %v3065
      %v3150 = vpop.f32.mrf.mxu0
      %v3151 = vadd.f32 %v2966, %v3150
      %v3152 = vpop.f32.mrf.mxu0
      %v3153 = vpop.f32.mrf.mxu0
      %v3154 = vadd.f32 %v2966, %v3153
      %v3155 = vpop.f32.mrf.mxu0
      %3156 = vmatprep.mubr.bf16.mxu0 0
      %3157 = vmatmul.mubr.bf16.gmra.mxu0 %v3068
      %v3158 = vpop.f32.mrf.mxu0
      %v3159 = vadd.f32 %v2966, %v3158
      %v3160 = vpop.f32.mrf.mxu0
      %v3161 = vpop.f32.mrf.mxu0
      %v3162 = vadd.f32 %v2966, %v3161
      %v3163 = vpop.f32.mrf.mxu0
      %3164 = vmatprep.mubr.bf16.mxu0 0
      %3165 = vmatmul.mubr.bf16.gmra.mxu0 %v3071
      %v3166 = vpop.f32.mrf.mxu0
      %v3167 = vadd.f32 %v2966, %v3166
      %v3168 = vpop.f32.mrf.mxu0
      %v3169 = vpop.f32.mrf.mxu0
      %v3170 = vadd.f32 %v2966, %v3169
      %v3171 = vpop.f32.mrf.mxu0
      %3172 = vmatprep.mubr.bf16.mxu0 0
      %3173 = vmatmul.mubr.bf16.gmra.mxu0 %v3074
      %v3174 = vpop.f32.mrf.mxu0
      %v3175 = vadd.f32 %v2966, %v3174
      %v3176 = vpop.f32.mrf.mxu0
      %v3177 = vpop.f32.mrf.mxu0
      %v3178 = vadd.f32 %v2966, %v3177
      %v3179 = vpop.f32.mrf.mxu0
      %3180 = vmatprep.mubr.bf16.mxu0 0
      %3181 = vmatmul.mubr.bf16.gmra.mxu0 %v3077
      %v3182 = vpop.f32.mrf.mxu0
      %v3183 = vadd.f32 %v2966, %v3182
      %v3184 = vpop.f32.mrf.mxu0
      %v3185 = vpop.f32.mrf.mxu0
      %v3186 = vadd.f32 %v2966, %v3185
      %v3187 = vpop.f32.mrf.mxu0
      %3188 = vmatprep.mubr.bf16.mxu0 0
      %3189 = vmatmul.mubr.bf16.gmra.mxu0 %v3080
      %v3190 = vpop.f32.mrf.mxu0
      %v3191 = vadd.f32 %v2966, %v3190
      %v3192 = vpop.f32.mrf.mxu0
      %v3193 = vpop.f32.mrf.mxu0
      %v3194 = vadd.f32 %v2966, %v3193
      %v3195 = vpop.f32.mrf.mxu0
      %3196 = vmatprep.mubr.bf16.mxu0 0
      %3197 = vmatmul.mubr.bf16.gmra.mxu0 %v3083
      %v3198 = vpop.f32.mrf.mxu0
      %v3199 = vadd.f32 %v2966, %v3198
      %v3200 = vpop.f32.mrf.mxu0
      %v3201 = vpop.f32.mrf.mxu0
      %v3202 = vadd.f32 %v2966, %v3201
      %v3203 = vpop.f32.mrf.mxu0
      %3204 = vmatprep.mubr.bf16.mxu0 0
      %3205 = vmatmul.mubr.bf16.gmra.mxu0 %v3086
      %v3206 = vpop.f32.mrf.mxu0
      %v3207 = vadd.f32 %v2966, %v3206
      %v3208 = vpop.f32.mrf.mxu0
      %v3209 = vpop.f32.mrf.mxu0
      %v3210 = vadd.f32 %v2966, %v3209
      %v3211 = vpop.f32.mrf.mxu0
      %3212 = vmatprep.mubr.bf16.mxu0 0
      %3213 = vmatmul.mubr.bf16.gmra.mxu0 %v3089
      %v3214 = vpop.f32.mrf.mxu0
      %v3215 = vadd.f32 %v2966, %v3214
      %v3216 = vpop.f32.mrf.mxu0
      %v3217 = vpop.f32.mrf.mxu0
      %v3218 = vadd.f32 %v2966, %v3217
      %v3219 = vpop.f32.mrf.mxu0
      %3220 = vmatprep.mubr.bf16.mxu0 0
      %3221 = vmatmul.mubr.bf16.gmra.mxu0 %v3092
      %v3222 = vpop.f32.mrf.mxu0
      %v3223 = vadd.f32 %v2966, %v3222
      %v3224 = vpop.f32.mrf.mxu0
      %v3225 = vpop.f32.mrf.mxu0
      %v3226 = vadd.f32 %v2966, %v3225
      %v3227 = vpop.f32.mrf.mxu0
      %3228 = vmatprep.mubr.bf16.mxu0 0
      %3229 = vmatmul.mubr.bf16.gmra.mxu0 %v3095
      %v3230 = vpop.f32.mrf.mxu0
      %v3231 = vadd.f32 %v2966, %v3230
      %v3232 = vpop.f32.mrf.mxu0
      %v3233 = vpop.f32.mrf.mxu0
      %v3234 = vadd.f32 %v2966, %v3233
      %v3235 = vpop.f32.mrf.mxu0
      %3236 = vmatprep.mubr.bf16.mxu0 0
      %3237 = vmatmul.mubr.bf16.gmra.mxu0 %v3098
      %v3238 = vpop.f32.mrf.mxu0
      %v3239 = vadd.f32 %v2966, %v3238
      %v3240 = vpop.f32.mrf.mxu0
      %v3241 = vpop.f32.mrf.mxu0
      %v3242 = vadd.f32 %v2966, %v3241
      %v3243 = vpop.f32.mrf.mxu0
      %3244 = vmatprep.mubr.bf16.mxu0 0
      %3245 = vmatmul.mubr.bf16.gmra.mxu0 %v3101
      %v3246 = vpop.f32.mrf.mxu0
      %v3247 = vadd.f32 %v2966, %v3246
      %v3248 = vpop.f32.mrf.mxu0
      %v3249 = vpop.f32.mrf.mxu0
      %v3250 = vadd.f32 %v2966, %v3249
      %v3251 = vpop.f32.mrf.mxu0
      %3252 = vmatprep.mubr.bf16.mxu0 0
      %3253 = vmatmul.mubr.bf16.gmra.mxu0 %v3104
      %v3254 = vpop.f32.mrf.mxu0
      %v3255 = vadd.f32 %v2966, %v3254
      %v3256 = vpop.f32.mrf.mxu0
      %v3257 = vpop.f32.mrf.mxu0
      %v3258 = vadd.f32 %v2966, %v3257
      %v3259 = vpop.f32.mrf.mxu0
      %3260 = vmatprep.mubr.bf16.mxu0 0
      %3261 = vmatmul.mubr.bf16.gmra.mxu0 %v3107
      %v3262 = vpop.f32.mrf.mxu0
      %v3263 = vadd.f32 %v2966, %v3262
      %v3264 = vpop.f32.mrf.mxu0
      %v3265 = vpop.f32.mrf.mxu0
      %v3266 = vadd.f32 %v2966, %v3265
      %v3267 = vpop.f32.mrf.mxu0
      %3268 = vmatprep.mubr.bf16.mxu0 0
      %3269 = vmatmul.mubr.bf16.gmra.mxu0 %v3110
      %v3270 = vpop.f32.mrf.mxu0
      %v3271 = vadd.f32 %v2966, %v3270
      %v3272 = vpop.f32.mrf.mxu0
      %v3273 = vpop.f32.mrf.mxu0
      %v3274 = vadd.f32 %v2966, %v3273
      %v3275 = vpop.f32.mrf.mxu0
      %3276 = vdwg.mxu0
      %v3277 = vmax.f32 %v3151, 0.0
      %v3278 = vmax.f32 %v3154, 0.0
      %v3279 = vmax.f32 %v3159, 0.0
      %v3280 = vmax.f32 %v3162, 0.0
      %v3281 = vmax.f32 %v3167, 0.0
      %v3282 = vmax.f32 %v3170, 0.0
      %v3283 = vmax.f32 %v3175, 0.0
      %v3284 = vmax.f32 %v3178, 0.0
      %v3285 = vmax.f32 %v3183, 0.0
      %v3286 = vmax.f32 %v3186, 0.0
      %v3287 = vmax.f32 %v3191, 0.0
      %v3288 = vmax.f32 %v3194, 0.0
      %v3289 = vmax.f32 %v3199, 0.0
      %v3290 = vmax.f32 %v3202, 0.0
      %v3291 = vmax.f32 %v3207, 0.0
      %v3292 = vmax.f32 %v3210, 0.0
      %v3293 = vmax.f32 %v3215, 0.0
      %v3294 = vmax.f32 %v3218, 0.0
      %v3295 = vmax.f32 %v3223, 0.0
      %v3296 = vmax.f32 %v3226, 0.0
      %v3297 = vmax.f32 %v3231, 0.0
      %v3298 = vmax.f32 %v3234, 0.0
      %v3299 = vmax.f32 %v3239, 0.0
      %v3300 = vmax.f32 %v3242, 0.0
      %v3301 = vmax.f32 %v3247, 0.0
      %v3302 = vmax.f32 %v3250, 0.0
      %v3303 = vmax.f32 %v3255, 0.0
      %v3304 = vmax.f32 %v3258, 0.0
      %v3305 = vmax.f32 %v3263, 0.0
      %v3306 = vmax.f32 %v3266, 0.0
      %v3307 = vmax.f32 %v3271, 0.0
      %v3308 = vmax.f32 %v3274, 0.0
      %v3309 = vpack.c.bf16 %v3278, %v3277
      %v3310 = vpack.c.bf16 %v3280, %v3279
      %v3311 = vpack.c.bf16 %v3282, %v3281
      %v3312 = vpack.c.bf16 %v3284, %v3283
      %v3313 = vpack.c.bf16 %v3286, %v3285
      %v3314 = vpack.c.bf16 %v3288, %v3287
      %v3315 = vpack.c.bf16 %v3290, %v3289
      %v3316 = vpack.c.bf16 %v3292, %v3291
      %v3317 = vpack.c.bf16 %v3294, %v3293
      %v3318 = vpack.c.bf16 %v3296, %v3295
      %v3319 = vpack.c.bf16 %v3298, %v3297
      %v3320 = vpack.c.bf16 %v3300, %v3299
      %v3321 = vpack.c.bf16 %v3302, %v3301
      %v3322 = vpack.c.bf16 %v3304, %v3303
      %v3323 = vpack.c.bf16 %v3306, %v3305
      %v3324 = vpack.c.bf16 %v3308, %v3307
      %v3325 = vld [vmem:[%s3] sm:$0x3]
      %v3326 = vld [vmem:[%s6] sm:$0x1]
      %v3328 = vlaneseq
      %v3329 = vshrl.u32 %v3328, 7
      %v3330 = vsub.s32 0, %v3329
      %v3331 = vrot.slane %v3326, %v3330
      %v3334 = vsel %vm585, %v3309, 0
      %v3337 = vsel %vm585, %v3310, 0
      %v3340 = vsel %vm585, %v3311, 0
      %v3343 = vsel %vm585, %v3312, 0
      %v3346 = vsel %vm585, %v3313, 0
      %v3349 = vsel %vm585, %v3314, 0
      %v3352 = vsel %vm585, %v3315, 0
      %v3355 = vsel %vm585, %v3316, 0
      %v3358 = vsel %vm585, %v3317, 0
      %v3361 = vsel %vm585, %v3318, 0
      %v3364 = vsel %vm585, %v3319, 0
      %v3367 = vsel %vm585, %v3320, 0
      %v3370 = vsel %vm585, %v3321, 0
      %v3373 = vsel %vm585, %v3322, 0
      %v3376 = vsel %vm585, %v3323, 0
      %v3379 = vsel %vm585, %v3324, 0
      %v3382 = vsel %vm3112, %v3325, 0
      %3384 = vmatprep.subr.bf16.mxu0 0
      %3385 = vmatpush1.bf16.msra.mxu0 0
      %3386 = vmatprep.subr.bf16.mxu0 0
      %3387 = vmatpush1.bf16.msra.mxu0 0
      %3388 = vmatprep.subr.bf16.mxu0 0
      %3389 = vmatpush1.bf16.msra.mxu0 0
      %3390 = vmatprep.subr.bf16.mxu0 0
      %3391 = vmatpush1.bf16.msra.mxu0 0
      %3392 = vmatprep.subr.bf16.mxu0 0
      %3393 = vmatpush1.bf16.msra.mxu0 0
      %3394 = vmatprep.subr.bf16.mxu0 0
      %3395 = vmatpush1.bf16.msra.mxu0 0
      %3396 = vmatprep.subr.bf16.mxu0 0
      %3397 = vmatpush1.bf16.msra.mxu0 0
      %3398 = vmatprep.subr.bf16.mxu0 0
      %3399 = vmatpush1.bf16.msra.mxu0 %v3382
      %3400 = vmatprep.subr.bf16.mxu0 0
      %3401 = vmatpush2.bf16.msra.mxu0 0
      %3402 = vmatprep.subr.bf16.mxu0 0
      %3403 = vmatpush2.bf16.msra.mxu0 0
      %3404 = vmatprep.subr.bf16.mxu0 0
      %3405 = vmatpush2.bf16.msra.mxu0 0
      %3406 = vmatprep.subr.bf16.mxu0 0
      %3407 = vmatpush2.bf16.msra.mxu0 0
      %3408 = vmatprep.subr.bf16.mxu0 0
      %3409 = vmatpush2.bf16.msra.mxu0 0
      %3410 = vmatprep.subr.bf16.mxu0 0
      %3411 = vmatpush2.bf16.msra.mxu0 0
      %3412 = vmatprep.subr.bf16.mxu0 0
      %3413 = vmatpush2.bf16.msra.mxu0 0
      %3414 = vmatprep.subr.bf16.mxu0 0
      %3415 = vmatpush2.bf16.msra.mxu0 0
      %3416 = vmatprep.mubr.bf16.mxu0 0
      %3417 = vmatmul.mubr.bf16.gmra.mxu0 %v3334
      %v3418 = vpop.f32.mrf.mxu0
      %v3419 = vadd.f32 %v3331, %v3418
      %v3420 = vpop.f32.mrf.mxu0
      %v3421 = vpop.f32.mrf.mxu0
      %v3422 = vadd.f32 %v3331, %v3421
      %v3423 = vpop.f32.mrf.mxu0
      %3424 = vmatprep.mubr.bf16.mxu0 0
      %3425 = vmatmul.mubr.bf16.gmra.mxu0 %v3337
      %v3426 = vpop.f32.mrf.mxu0
      %v3427 = vadd.f32 %v3331, %v3426
      %v3428 = vpop.f32.mrf.mxu0
      %v3429 = vpop.f32.mrf.mxu0
      %v3430 = vadd.f32 %v3331, %v3429
      %v3431 = vpop.f32.mrf.mxu0
      %3432 = vmatprep.mubr.bf16.mxu0 0
      %3433 = vmatmul.mubr.bf16.gmra.mxu0 %v3340
      %v3434 = vpop.f32.mrf.mxu0
      %v3435 = vadd.f32 %v3331, %v3434
      %v3436 = vpop.f32.mrf.mxu0
      %v3437 = vpop.f32.mrf.mxu0
      %v3438 = vadd.f32 %v3331, %v3437
      %v3439 = vpop.f32.mrf.mxu0
      %3440 = vmatprep.mubr.bf16.mxu0 0
      %3441 = vmatmul.mubr.bf16.gmra.mxu0 %v3343
      %v3442 = vpop.f32.mrf.mxu0
      %v3443 = vadd.f32 %v3331, %v3442
      %v3444 = vpop.f32.mrf.mxu0
      %v3445 = vpop.f32.mrf.mxu0
      %v3446 = vadd.f32 %v3331, %v3445
      %v3447 = vpop.f32.mrf.mxu0
      %3448 = vmatprep.mubr.bf16.mxu0 0
      %3449 = vmatmul.mubr.bf16.gmra.mxu0 %v3346
      %v3450 = vpop.f32.mrf.mxu0
      %v3451 = vadd.f32 %v3331, %v3450
      %v3452 = vpop.f32.mrf.mxu0
      %v3453 = vpop.f32.mrf.mxu0
      %v3454 = vadd.f32 %v3331, %v3453
      %v3455 = vpop.f32.mrf.mxu0
      %3456 = vmatprep.mubr.bf16.mxu0 0
      %3457 = vmatmul.mubr.bf16.gmra.mxu0 %v3349
      %v3458 = vpop.f32.mrf.mxu0
      %v3459 = vadd.f32 %v3331, %v3458
      %v3460 = vpop.f32.mrf.mxu0
      %v3461 = vpop.f32.mrf.mxu0
      %v3462 = vadd.f32 %v3331, %v3461
      %v3463 = vpop.f32.mrf.mxu0
      %3464 = vmatprep.mubr.bf16.mxu0 0
      %3465 = vmatmul.mubr.bf16.gmra.mxu0 %v3352
      %v3466 = vpop.f32.mrf.mxu0
      %v3467 = vadd.f32 %v3331, %v3466
      %v3468 = vpop.f32.mrf.mxu0
      %v3469 = vpop.f32.mrf.mxu0
      %v3470 = vadd.f32 %v3331, %v3469
      %v3471 = vpop.f32.mrf.mxu0
      %3472 = vmatprep.mubr.bf16.mxu0 0
      %3473 = vmatmul.mubr.bf16.gmra.mxu0 %v3355
      %v3474 = vpop.f32.mrf.mxu0
      %v3475 = vadd.f32 %v3331, %v3474
      %v3476 = vpop.f32.mrf.mxu0
      %v3477 = vpop.f32.mrf.mxu0
      %v3478 = vadd.f32 %v3331, %v3477
      %v3479 = vpop.f32.mrf.mxu0
      %3480 = vmatprep.mubr.bf16.mxu0 0
      %3481 = vmatmul.mubr.bf16.gmra.mxu0 %v3358
      %v3482 = vpop.f32.mrf.mxu0
      %v3483 = vadd.f32 %v3331, %v3482
      %v3484 = vpop.f32.mrf.mxu0
      %v3485 = vpop.f32.mrf.mxu0
      %v3486 = vadd.f32 %v3331, %v3485
      %v3487 = vpop.f32.mrf.mxu0
      %3488 = vmatprep.mubr.bf16.mxu0 0
      %3489 = vmatmul.mubr.bf16.gmra.mxu0 %v3361
      %v3490 = vpop.f32.mrf.mxu0
      %v3491 = vadd.f32 %v3331, %v3490
      %v3492 = vpop.f32.mrf.mxu0
      %v3493 = vpop.f32.mrf.mxu0
      %v3494 = vadd.f32 %v3331, %v3493
      %v3495 = vpop.f32.mrf.mxu0
      %3496 = vmatprep.mubr.bf16.mxu0 0
      %3497 = vmatmul.mubr.bf16.gmra.mxu0 %v3364
      %v3498 = vpop.f32.mrf.mxu0
      %v3499 = vadd.f32 %v3331, %v3498
      %v3500 = vpop.f32.mrf.mxu0
      %v3501 = vpop.f32.mrf.mxu0
      %v3502 = vadd.f32 %v3331, %v3501
      %v3503 = vpop.f32.mrf.mxu0
      %3504 = vmatprep.mubr.bf16.mxu0 0
      %3505 = vmatmul.mubr.bf16.gmra.mxu0 %v3367
      %v3506 = vpop.f32.mrf.mxu0
      %v3507 = vadd.f32 %v3331, %v3506
      %v3508 = vpop.f32.mrf.mxu0
      %v3509 = vpop.f32.mrf.mxu0
      %v3510 = vadd.f32 %v3331, %v3509
      %v3511 = vpop.f32.mrf.mxu0
      %3512 = vmatprep.mubr.bf16.mxu0 0
      %3513 = vmatmul.mubr.bf16.gmra.mxu0 %v3370
      %v3514 = vpop.f32.mrf.mxu0
      %v3515 = vadd.f32 %v3331, %v3514
      %v3516 = vpop.f32.mrf.mxu0
      %v3517 = vpop.f32.mrf.mxu0
      %v3518 = vadd.f32 %v3331, %v3517
      %v3519 = vpop.f32.mrf.mxu0
      %3520 = vmatprep.mubr.bf16.mxu0 0
      %3521 = vmatmul.mubr.bf16.gmra.mxu0 %v3373
      %v3522 = vpop.f32.mrf.mxu0
      %v3523 = vadd.f32 %v3331, %v3522
      %v3524 = vpop.f32.mrf.mxu0
      %v3525 = vpop.f32.mrf.mxu0
      %v3526 = vadd.f32 %v3331, %v3525
      %v3527 = vpop.f32.mrf.mxu0
      %3528 = vmatprep.mubr.bf16.mxu0 0
      %3529 = vmatmul.mubr.bf16.gmra.mxu0 %v3376
      %v3530 = vpop.f32.mrf.mxu0
      %v3531 = vadd.f32 %v3331, %v3530
      %v3532 = vpop.f32.mrf.mxu0
      %v3533 = vpop.f32.mrf.mxu0
      %v3534 = vadd.f32 %v3331, %v3533
      %v3535 = vpop.f32.mrf.mxu0
      %3536 = vmatprep.mubr.bf16.mxu0 0
      %3537 = vmatmul.mubr.bf16.gmra.mxu0 %v3379
      %v3538 = vpop.f32.mrf.mxu0
      %v3539 = vadd.f32 %v3331, %v3538
      %v3540 = vpop.f32.mrf.mxu0
      %v3541 = vpop.f32.mrf.mxu0
      %v3542 = vadd.f32 %v3331, %v3541
      %v3543 = vpop.f32.mrf.mxu0
      %3544 = vdwg.mxu0
      %v3545 = vadd.f32 %v3419, %v280
      %v3546 = vadd.f32 %v3422, %v281
      %v3547 = vadd.f32 %v3427, %v282
      %v3548 = vadd.f32 %v3430, %v283
      %v3549 = vadd.f32 %v3435, %v284
      %v3550 = vadd.f32 %v3438, %v285
      %v3551 = vadd.f32 %v3443, %v286
      %v3552 = vadd.f32 %v3446, %v287
      %v3553 = vadd.f32 %v3451, %v288
      %v3554 = vadd.f32 %v3454, %v289
      %v3555 = vadd.f32 %v3459, %v290
      %v3556 = vadd.f32 %v3462, %v291
      %v3557 = vadd.f32 %v3467, %v292
      %v3558 = vadd.f32 %v3470, %v293
      %v3559 = vadd.f32 %v3475, %v294
      %v3560 = vadd.f32 %v3478, %v295
      %v3561 = vadd.f32 %v3483, %v296
      %v3562 = vadd.f32 %v3486, %v297
      %v3563 = vadd.f32 %v3491, %v298
      %v3564 = vadd.f32 %v3494, %v299
      %v3565 = vadd.f32 %v3499, %v300
      %v3566 = vadd.f32 %v3502, %v301
      %v3567 = vadd.f32 %v3507, %v302
      %v3568 = vadd.f32 %v3510, %v303
      %v3569 = vadd.f32 %v3515, %v304
      %v3570 = vadd.f32 %v3518, %v305
      %v3571 = vadd.f32 %v3523, %v306
      %v3572 = vadd.f32 %v3526, %v307
      %v3573 = vadd.f32 %v3531, %v308
      %v3574 = vadd.f32 %v3534, %v309
      %v3575 = vadd.f32 %v3539, %v310
      %v3576 = vadd.f32 %v3542, %v311
      %v3577 = vmax.f32 %v3545, 0.0
      %v3578 = vmax.f32 %v3546, 0.0
      %v3579 = vmax.f32 %v3547, 0.0
      %v3580 = vmax.f32 %v3548, 0.0
      %v3581 = vmax.f32 %v3549, 0.0
      %v3582 = vmax.f32 %v3550, 0.0
      %v3583 = vmax.f32 %v3551, 0.0
      %v3584 = vmax.f32 %v3552, 0.0
      %v3585 = vmax.f32 %v3553, 0.0
      %v3586 = vmax.f32 %v3554, 0.0
      %v3587 = vmax.f32 %v3555, 0.0
      %v3588 = vmax.f32 %v3556, 0.0
      %v3589 = vmax.f32 %v3557, 0.0
      %v3590 = vmax.f32 %v3558, 0.0
      %v3591 = vmax.f32 %v3559, 0.0
      %v3592 = vmax.f32 %v3560, 0.0
      %v3593 = vmax.f32 %v3561, 0.0
      %v3594 = vmax.f32 %v3562, 0.0
      %v3595 = vmax.f32 %v3563, 0.0
      %v3596 = vmax.f32 %v3564, 0.0
      %v3597 = vmax.f32 %v3565, 0.0
      %v3598 = vmax.f32 %v3566, 0.0
      %v3599 = vmax.f32 %v3567, 0.0
      %v3600 = vmax.f32 %v3568, 0.0
      %v3601 = vmax.f32 %v3569, 0.0
      %v3602 = vmax.f32 %v3570, 0.0
      %v3603 = vmax.f32 %v3571, 0.0
      %v3604 = vmax.f32 %v3572, 0.0
      %v3605 = vmax.f32 %v3573, 0.0
      %v3606 = vmax.f32 %v3574, 0.0
      %v3607 = vmax.f32 %v3575, 0.0
      %v3608 = vmax.f32 %v3576, 0.0
      %3609 = vst.msk [vmem:[%s278] sm:$0xff] %vm343, %v3577
      %3610 = vst.msk [vmem:[%s278 + $0x8] sm:$0xff] %vm343, %v3578
      %3611 = vst.msk [vmem:[%s278 + $0x10] sm:$0xff] %vm343, %v3579
      %3612 = vst.msk [vmem:[%s278 + $0x18] sm:$0xff] %vm343, %v3580
      %3613 = vst.msk [vmem:[%s278 + $0x20] sm:$0xff] %vm343, %v3581
      %3614 = vst.msk [vmem:[%s278 + $0x28] sm:$0xff] %vm343, %v3582
      %3615 = vst.msk [vmem:[%s278 + $0x30] sm:$0xff] %vm343, %v3583
      %3616 = vst.msk [vmem:[%s278 + $0x38] sm:$0xff] %vm343, %v3584
      %3617 = vst.msk [vmem:[%s278 + $0x40] sm:$0xff] %vm343, %v3585
      %3618 = vst.msk [vmem:[%s278 + $0x48] sm:$0xff] %vm343, %v3586
      %3619 = vst.msk [vmem:[%s278 + $0x50] sm:$0xff] %vm343, %v3587
      %3620 = vst.msk [vmem:[%s278 + $0x58] sm:$0xff] %vm343, %v3588
      %3621 = vst.msk [vmem:[%s278 + $0x60] sm:$0xff] %vm343, %v3589
      %3622 = vst.msk [vmem:[%s278 + $0x68] sm:$0xff] %vm343, %v3590
      %3623 = vst.msk [vmem:[%s278 + $0x70] sm:$0xff] %vm343, %v3591
      %3624 = vst.msk [vmem:[%s278 + $0x78] sm:$0xff] %vm343, %v3592
      %3625 = vst.msk [vmem:[%s278 + $0x80] sm:$0xff] %vm343, %v3593
      %3626 = vst.msk [vmem:[%s278 + $0x88] sm:$0xff] %vm343, %v3594
      %3627 = vst.msk [vmem:[%s278 + $0x90] sm:$0xff] %vm343, %v3595
      %3628 = vst.msk [vmem:[%s278 + $0x98] sm:$0xff] %vm343, %v3596
      %3629 = vst.msk [vmem:[%s278 + $0xa0] sm:$0xff] %vm343, %v3597
      %3630 = vst.msk [vmem:[%s278 + $0xa8] sm:$0xff] %vm343, %v3598
      %3631 = vst.msk [vmem:[%s278 + $0xb0] sm:$0xff] %vm343, %v3599
      %3632 = vst.msk [vmem:[%s278 + $0xb8] sm:$0xff] %vm343, %v3600
      %3633 = vst.msk [vmem:[%s278 + $0xc0] sm:$0xff] %vm343, %v3601
      %3634 = vst.msk [vmem:[%s278 + $0xc8] sm:$0xff] %vm343, %v3602
      %3635 = vst.msk [vmem:[%s278 + $0xd0] sm:$0xff] %vm343, %v3603
      %3636 = vst.msk [vmem:[%s278 + $0xd8] sm:$0xff] %vm343, %v3604
      %3637 = vst.msk [vmem:[%s278 + $0xe0] sm:$0xff] %vm343, %v3605
      %3638 = vst.msk [vmem:[%s278 + $0xe8] sm:$0xff] %vm343, %v3606
      %3639 = vst.msk [vmem:[%s278 + $0xf0] sm:$0xff] %vm343, %v3607
      %3640 = vst.msk [vmem:[%s278 + $0xf8] sm:$0xff] %vm343, %v3608
      %p3641 = scmp.lt.s32.totalorder %s18, 1
      %s3642 = scalar_select %p3641, %s18, 1
      %s3643 = smul.addr %s3642, 32
      %s3644 = smul.addr %s3643, 8
      %s3645 = scalar_lea.vmem %s7, %s3644
      // Predicated region
      $region49: #{tpu_custom_call.1} parent=47 // pred_check
        %p3646 = pneg %p188
      $region50: #{tpu_custom_call.1} parent=47 // pred_check_branch
        %3648 = sbr.rel (%p3646) target = $region52
      $region51: #{tpu_custom_call.1} parent=47 // pred_region
        _
      $region52: #{tpu_custom_call.1} parent=47 // pred_fallthru
        _
    $region48: #{tpu_custom_call.1} parent=5 // pred_fallthru
      _
    %p3649 = scmp.le.s32.totalorder 2, %s13
    // Predicated region
    $region53: #{tpu_custom_call.1} parent=5 // pred_check
      %p3650 = pneg %p3649
    $region54: #{tpu_custom_call.1} parent=5 // pred_check_branch
      %3652 = sbr.rel (%p3650) target = $region56
    $region55: #{tpu_custom_call.1} parent=5 // pred_region
      %s3653 = ssub.s32 %s13, 2
      // Predicated region
      $region57: #{tpu_custom_call.1} parent=55 // pred_check
        %p3654 = pneg %p194
      $region58: #{tpu_custom_call.1} parent=55 // pred_check_branch
        %3656 = sbr.rel (%p3654) target = $region60
      $region59: #{tpu_custom_call.1} parent=55 // pred_region
        %p3657 = scmp.lt.s32.totalorder %s19, 1
        %s3658 = scalar_select %p3657, %s19, 1
        %s3659 = smul.addr %s3658, 32
        %s3660 = smul.addr %s3659, 8
        %s3661 = scalar_lea.vmem %s7, %s3660
      $region60: #{tpu_custom_call.1} parent=55 // pred_fallthru
        _
    $region56: #{tpu_custom_call.1} parent=5 // pred_fallthru
      _
  $region6: #{tpu_custom_call.1} parent=0 // loop_footer
    %s17 = sadd.s32 1, %s13
  $region7: #{tpu_custom_call.1} parent=0 // loop_footer_branch
    %12 = sbr.rel target = $region3
  $region8: #{tpu_custom_call.1} parent=0 // loop_exit
    _

</llo_original>
